<compile_context>
chip_gen: v6e
topology: v6e:2x2x1
jax: 0.10.0
libtpu: 0.0.40
codegen_flags: <defaults>
</compile_context>

<pallas_src>
import math
import functools

import jax
import jax.numpy as jnp
from jax import lax
from jax.experimental import pallas as pl
from jax.experimental.pallas import tpu as pltpu


# ----------------------------------------------------------------------------
# Small helpers
# ----------------------------------------------------------------------------
def _dot(a, b, compute_dtype):
    """Rank-2 matmul with operands cast to compute_dtype, f32 accumulation."""
    return jnp.dot(a.astype(compute_dtype), b.astype(compute_dtype),
                   preferred_element_type=jnp.float32)


def _attention_heads(q_res, q_scaled, k, v, num_heads, cdt, approx_recip):
    """Multi-head attention with the MAB residual.

    q_res:    (Nq, dim_V) or (Bb, Nq, dim_V)  -- residual (unscaled) queries
    q_scaled: (Bb, Nq, dim_V)                 -- 1/sqrt(dim_V)-scaled queries
    k, v:     (Bb, Nk, dim_V)
    Returns   (Bb, Nq, dim_V) = concat_h [ q_h + softmax(qs_h k_h^T) v_h ].
    """
    dim_V = q_scaled.shape[-1]
    ds = dim_V // num_heads
    outs = []
    for h in range(num_heads):          # static unroll (num_heads is small)
        sl = slice(h * ds, (h + 1) * ds)
        qs_h = q_scaled[..., sl].astype(cdt)
        k_h = k[..., sl].astype(cdt)
        v_h = v[..., sl].astype(cdt)
        # Batched MXU contractions in the Mosaic-native forms (no explicit .T).
        lg = jnp.einsum('bqd,bkd->bqk', qs_h, k_h,
                        preferred_element_type=jnp.float32)      # (Bb, Nq, Nk)
        lg = lg - jnp.max(lg, axis=-1, keepdims=True)
        e = jnp.exp(lg)
        attn = e * pl.reciprocal(jnp.sum(e, axis=-1, keepdims=True),
                                 approx=approx_recip)
        av = jnp.einsum('bqk,bkd->bqd', attn.astype(cdt), v_h,
                        preferred_element_type=jnp.float32)      # (Bb, Nq, ds)
        # Residual uses the unscaled queries; broadcasts if q_res is 2-D.
        outs.append(q_res[..., sl] + av)
    return jnp.concatenate(outs, axis=-1)                        # (Bb, Nq, dim_V)


# ----------------------------------------------------------------------------
# Fused ISAB kernel: one batch block per grid step; H0 never leaves VMEM.
# ----------------------------------------------------------------------------
def isab_kernel(x_ref, i_ref,
                wq0_ref, bq0_ref, wx_ref, bx_ref, wo0_ref, bo0_ref,
                wh_ref, bh_ref, wo1_ref, bo1_ref,
                o_ref, *, num_heads, block_b, seq_len, num_inds, dim_V,
                compute_dtype, approx_recip):
    cdt = compute_dtype
    scale = 1.0 / math.sqrt(dim_V)   # torch MAB scales by sqrt(dim_V), not sqrt(ds)
    rows_x = block_b * seq_len

    x2 = x_ref[...]                   # (rows_x, dim_in)
    ind = i_ref[...]                  # (num_inds, dim_V)

    # Fused projection of X -> [K0 | V0 | Q1] : single wide MXU pass.
    xproj = _dot(x2, wx_ref[...], cdt) + bx_ref[...]             # (rows_x, 3*dim_V)
    k0 = xproj[:, 0 * dim_V:1 * dim_V].reshape(block_b, seq_len, dim_V)
    v0 = xproj[:, 1 * dim_V:2 * dim_V].reshape(block_b, seq_len, dim_V)
    q1f = xproj[:, 2 * dim_V:3 * dim_V]                          # (rows_x, dim_V)

    # ---------------- MAB0: Q = I (shared across batch), K = V = X ----------
    q0 = _dot(ind, wq0_ref[...], cdt) + bq0_ref[...]             # (num_inds, dim_V)
    # Single hoisted broadcast of the scaled Q only (residual broadcasts in the
    # add, no second materialized copy).
    q0s_b = jnp.broadcast_to((q0 * scale)[None], (block_b, num_inds, dim_V))
    o0 = _attention_heads(q0, q0s_b, k0, v0, num_heads, cdt, approx_recip)
    o0_2 = o0.reshape(block_b * num_inds, dim_V)
    h0_2 = o0_2 + jnp.maximum(
        _dot(o0_2, wo0_ref[...], cdt) + bo0_ref[...], 0.0)       # H0, stays in VMEM

    # ---------------- MAB1: Q = X, K = V = H0 (on-chip) ---------------------
    hproj = _dot(h0_2, wh_ref[...], cdt) + bh_ref[...]           # (Bb*num_inds, 2*dim_V)
    k1 = hproj[:, 0 * dim_V:1 * dim_V].reshape(block_b, num_inds, dim_V)
    v1 = hproj[:, 1 * dim_V:2 * dim_V].reshape(block_b, num_inds, dim_V)
    q1 = q1f.reshape(block_b, seq_len, dim_V)

    o1 = _attention_heads(q1, q1 * scale, k1, v1, num_heads, cdt, approx_recip)
    o1_2 = o1.reshape(rows_x, dim_V)
    h1_2 = o1_2 + jnp.maximum(
        _dot(o1_2, wo1_ref[...], cdt) + bo1_ref[...], 0.0)

    o_ref[...] = h1_2.astype(o_ref.dtype)


# ----------------------------------------------------------------------------
# Wrapper: block selection, weight fusion, pallas_call.
# ----------------------------------------------------------------------------
def _num_tensorcores_per_chip():
    try:
        kind = jax.devices()[0].device_kind.lower()
    except Exception:
        return 1
    # v4 / v5p (megacore) and v7x have 2 TensorCores per chip; v5e/v6e have 1.
    return 2 if any(t in kind for t in ("v7", "v5p", "v4")) else 1


def _pick_block_b(B, N, target_rows=1024, two_cores=False):
    """Largest divisor of B whose row count (block_b*N) is sublane-aligned and
    <= target_rows.  Keep >=2 grid steps only when the chip has 2 TensorCores."""
    divisors = [d for d in range(1, B + 1) if B % d == 0]
    # (8,128) rule: block rows must be a multiple of 8 OR the block spans the
    # full flattened batch dimension.
    valid = [d for d in divisors if (d * N) % 8 == 0 or d == B]
    under = [d for d in valid if d * N <= target_rows]
    bb = max(under) if under else min(valid)
    if two_cores and B // bb < 2:
        smaller = [d for d in valid if B // d >= 2]
        if smaller:
            bb = max(smaller)
    return bb


def isab_pallas(X, I, mab0_params, mab1_params, num_heads, *,
                block_b=None, compute_dtype=jnp.float32, approx_recip=False):
    """X: (B, N, dim_in), I: (1, num_inds, dim_out) -> H1: (B, N, dim_out)."""
    B, N, dim_in = X.shape
    num_inds, dim_V = I.shape[-2], I.shape[-1]
    assert dim_V % num_heads == 0

    two_cores = _num_tensorcores_per_chip() >= 2
    if block_b is None:
        block_b = _pick_block_b(B, N, target_rows=1024, two_cores=two_cores)
    assert B % block_b == 0
    rows_x = block_b * N
    assert rows_x % 8 == 0 or block_b == B, "block rows must be sublane aligned"
    grid = (B // block_b,)

    wq0, bq0, wk0, bk0, wv0, bv0, wo0, bo0 = mab0_params
    wq1, bq1, wk1, bk1, wv1, bv1, wo1, bo1 = mab1_params

    # Fuse projections that share an input:
    #   X  -> [K0 | V0 | Q1],   H0 -> [K1 | V1]
    wx = jnp.concatenate([wk0, wv0, wq1], axis=1)   # (dim_in, 3*dim_V)
    bx = jnp.concatenate([bk0, bv0, bq1], axis=1)   # (1, 3*dim_V)
    wh = jnp.concatenate([wk1, wv1], axis=1)        # (dim_V, 2*dim_V)
    bh = jnp.concatenate([bk1, bv1], axis=1)        # (1, 2*dim_V)

    Xf = X.reshape(B * N, dim_in)
    I2 = I.reshape(num_inds, dim_V)
    weights = (wq0, bq0, wx, bx, wo0, bo0, wh, bh, wo1, bo1)

    def full_spec(a):
        return pl.BlockSpec(a.shape, lambda b: (0, 0))

    kern = functools.partial(
        isab_kernel, num_heads=num_heads, block_b=block_b, seq_len=N,
        num_inds=num_inds, dim_V=dim_V,
        compute_dtype=compute_dtype, approx_recip=approx_recip)

    # Explicit VMEM budget: double-buffered X / output blocks plus the live
    # f32 intermediates of the fused block, with 2x headroom, clamped to the
    # v7x 64 MiB physical ceiling (>= the 32 MiB default scoped limit).
    itm = 4
    est = itm * (2 * rows_x * dim_in + 2 * rows_x * dim_V          # I/O (double buffered)
                 + 7 * rows_x * dim_V                              # xproj + MAB1 temporaries
                 + 8 * block_b * num_inds * dim_V                  # MAB0 / H0 temporaries
                 + sum(int(w.size) for w in weights) + num_inds * dim_V)
    vmem_limit = int(min(64 * 2 ** 20, max(32 * 2 ** 20, 2 * est)))

    out = pl.pallas_call(
        kern,
        out_shape=jax.ShapeDtypeStruct((B * N, dim_V), jnp.float32),
        grid=grid,
        in_specs=[pl.BlockSpec((rows_x, dim_in), lambda b: (b, 0)),
                  full_spec(I2)] + [full_spec(w) for w in weights],
        out_specs=pl.BlockSpec((rows_x, dim_V), lambda b: (b, 0)),
        compiler_params=pltpu.CompilerParams(
            dimension_semantics=("parallel",),
            vmem_limit_bytes=vmem_limit),
    )(Xf, I2, *weights)
    return out.reshape(B, N, dim_V)


# ----------------------------------------------------------------------------
# Parameter construction (deterministic, in-script).
# ----------------------------------------------------------------------------
def linear_params(key, d_in, d_out):
    # nn.Linear uniform(-1/sqrt(d_in), 1/sqrt(d_in)); weight pre-transposed to
    # (d_in, d_out) so y = x @ W + b; bias stored as (1, d_out).
    kw, kb = jax.random.split(key)
    bound = 1.0 / math.sqrt(d_in)
    w = jax.random.uniform(kw, (d_in, d_out), jnp.float32, -bound, bound)
    b = jax.random.uniform(kb, (1, d_out), jnp.float32, -bound, bound)
    return w, b


def make_mab_params(key, dim_Q, dim_K, dim_V):
    k0, k1, k2, k3 = jax.random.split(key, 4)
    wq, bq = linear_params(k0, dim_Q, dim_V)
    wk, bk = linear_params(k1, dim_K, dim_V)
    wv, bv = linear_params(k2, dim_K, dim_V)
    wo, bo = linear_params(k3, dim_V, dim_V)
    return (wq, bq, wk, bk, wv, bv, wo, bo)


def make_isab_params(key, dim_in, dim_out, num_inds):
    ki, k0, k1 = jax.random.split(key, 3)
    # xavier_uniform on (1, num_inds, dim_out)
    fan_in, fan_out = num_inds * dim_out, dim_out
    bound = math.sqrt(6.0 / (fan_in + fan_out))
    I = jax.random.uniform(ki, (1, num_inds, dim_out), jnp.float32, -bound, bound)
    mab0 = make_mab_params(k0, dim_out, dim_in, dim_out)   # MAB(dim_out, dim_in, dim_out)
    mab1 = make_mab_params(k1, dim_in, dim_out, dim_out)   # MAB(dim_in, dim_out, dim_out)
    return I, mab0, mab1


# ----------------------------------------------------------------------------
# Pure-JAX reference (correctness check).
# ----------------------------------------------------------------------------
def mab_ref(Q, K, params, num_heads):
    wq, bq, wk, bk, wv, bv, wo, bo = params
    dim_V = wq.shape[1]
    ds = dim_V // num_heads
    Qp = Q @ wq + bq
    Kp = K @ wk + bk
    Vp = K @ wv + bv
    outs = []
    for h in range(num_heads):
        qh = Qp[..., h * ds:(h + 1) * ds]
        kh = Kp[..., h * ds:(h + 1) * ds]
        vh = Vp[..., h * ds:(h + 1) * ds]
        a = jax.nn.softmax(jnp.einsum("bqd,bkd->bqk", qh, kh) / math.sqrt(dim_V), axis=-1)
        outs.append(qh + jnp.einsum("bqk,bkd->bqd", a, vh))
    O = jnp.concatenate(outs, axis=-1)
    return O + jax.nn.relu(O @ wo + bo)


def isab_ref(X, I, mab0_params, mab1_params, num_heads):
    B = X.shape[0]
    Y = jnp.broadcast_to(I, (B,) + I.shape[1:])
    H0 = mab_ref(Y, X, mab0_params, num_heads)
    H1 = mab_ref(X, H0, mab1_params, num_heads)
    return H1


if __name__ == "__main__":
    # Small shapes: batch=2, seq=8, dim_in=4, dim_out=32, heads=4, num_inds=8.
    B, N = 2, 8
    dim_in, dim_out = 4, 32
    num_heads, num_inds = 4, 8

    key = jax.random.PRNGKey(0)
    kx, kp = jax.random.split(key)
    X = jax.random.normal(kx, (B, N, dim_in), jnp.float32)
    I, mab0_params, mab1_params = make_isab_params(kp, dim_in, dim_out, num_inds)

    H1_ref = isab_ref(X, I, mab0_params, mab1_params, num_heads)

    # Exact path (f32 MXU operands, exact reciprocal): tight check.
    H1 = jax.block_until_ready(
        isab_pallas(X, I, mab0_params, mab1_params, num_heads))
    assert H1.shape == (B, N, dim_out)
    assert jnp.allclose(H1, H1_ref, atol=1e-4, rtol=1e-4), "f32 kernel mismatch"

    # Fast path (bf16 MXU operands with f32 accumulation + approx reciprocal):
    # looser tolerance, verifies the throughput-oriented configuration runs.
    H1_fast = jax.block_until_ready(
        isab_pallas(X, I, mab0_params, mab1_params, num_heads,
                    compute_dtype=jnp.bfloat16, approx_recip=True))
    assert jnp.allclose(H1_fast, H1_ref, atol=5e-2, rtol=5e-2), "bf16 kernel mismatch"

    print("KERNEL_OK")
</pallas_src>

<mosaic_0001>
module attributes {stable_mosaic.version = 11 : i64} {
  func.func @isab_kernel(%arg0: i32, %arg1: memref<16x4xf32, #tpu.memory_space<vmem>>, %arg2: memref<8x32xf32, #tpu.memory_space<vmem>>, %arg3: memref<32x32xf32, #tpu.memory_space<vmem>>, %arg4: memref<1x32xf32, #tpu.memory_space<vmem>>, %arg5: memref<4x96xf32, #tpu.memory_space<vmem>>, %arg6: memref<1x96xf32, #tpu.memory_space<vmem>>, %arg7: memref<32x32xf32, #tpu.memory_space<vmem>>, %arg8: memref<1x32xf32, #tpu.memory_space<vmem>>, %arg9: memref<32x64xf32, #tpu.memory_space<vmem>>, %arg10: memref<1x64xf32, #tpu.memory_space<vmem>>, %arg11: memref<32x32xf32, #tpu.memory_space<vmem>>, %arg12: memref<1x32xf32, #tpu.memory_space<vmem>>, %arg13: memref<16x32xf32, #tpu.memory_space<vmem>>) attributes {dimension_semantics = [#tpu.dimension_semantics<parallel>], iteration_bounds = array<i64: 1>, scalar_prefetch = 0 : i64, scratch_operands = 0 : i64, tpu.core_type = #tpu.core_type<tc>, window_params = [{transform_indices = @transform_0, window_bounds = array<i64: 16, 4>}, {pipeline_mode = #tpu.pipeline_mode<synchronous>, transform_indices = @transform_1, window_bounds = array<i64: 8, 32>}, {pipeline_mode = #tpu.pipeline_mode<synchronous>, transform_indices = @transform_2, window_bounds = array<i64: 32, 32>}, {pipeline_mode = #tpu.pipeline_mode<synchronous>, transform_indices = @transform_3, window_bounds = array<i64: 1, 32>}, {pipeline_mode = #tpu.pipeline_mode<synchronous>, transform_indices = @transform_4, window_bounds = array<i64: 4, 96>}, {pipeline_mode = #tpu.pipeline_mode<synchronous>, transform_indices = @transform_5, window_bounds = array<i64: 1, 96>}, {pipeline_mode = #tpu.pipeline_mode<synchronous>, transform_indices = @transform_6, window_bounds = array<i64: 32, 32>}, {pipeline_mode = #tpu.pipeline_mode<synchronous>, transform_indices = @transform_7, window_bounds = array<i64: 1, 32>}, {pipeline_mode = #tpu.pipeline_mode<synchronous>, transform_indices = @transform_8, window_bounds = array<i64: 32, 64>}, {pipeline_mode = #tpu.pipeline_mode<synchronous>, transform_indices = @transform_9, window_bounds = array<i64: 1, 64>}, {pipeline_mode = #tpu.pipeline_mode<synchronous>, transform_indices = @transform_10, window_bounds = array<i64: 32, 32>}, {pipeline_mode = #tpu.pipeline_mode<synchronous>, transform_indices = @transform_11, window_bounds = array<i64: 1, 32>}, {transform_indices = @transform_12, window_bounds = array<i64: 16, 32>}]} {
    %c0 = arith.constant 0 : index
    %c0_0 = arith.constant 0 : index
    %0 = vector.load %arg1[%c0, %c0_0] : memref<16x4xf32, #tpu.memory_space<vmem>>, vector<16x4xf32>
    %c0_1 = arith.constant 0 : index
    %c0_2 = arith.constant 0 : index
    %1 = vector.load %arg2[%c0_1, %c0_2] : memref<8x32xf32, #tpu.memory_space<vmem>>, vector<8x32xf32>
    %c0_3 = arith.constant 0 : index
    %c0_4 = arith.constant 0 : index
    %2 = vector.load %arg5[%c0_3, %c0_4] : memref<4x96xf32, #tpu.memory_space<vmem>>, vector<4x96xf32>
    %cst = arith.constant dense<0.000000e+00> : vector<16x96xf32>
    %3 = tpu.matmul %0, %2, %cst {dimension_numbers = #tpu.dot_dimension_numbers<[1], [0], [0], [1], [0, 0, 1, 1], [], []>} : vector<16x4xf32>, vector<4x96xf32>, vector<16x96xf32> -> vector<16x96xf32>
    %c0_5 = arith.constant 0 : index
    %c0_6 = arith.constant 0 : index
    %4 = vector.load %arg6[%c0_5, %c0_6] : memref<1x96xf32, #tpu.memory_space<vmem>>, vector<1x96xf32>
    %5 = vector.broadcast %4 : vector<1x96xf32> to vector<16x96xf32>
    %6 = arith.addf %3, %5 : vector<16x96xf32>
    %7 = vector.extract_strided_slice %6 {offsets = [0, 0], sizes = [16, 32], strides = [1, 1]} : vector<16x96xf32> to vector<16x32xf32>
    %8 = vector.shape_cast %7 : vector<16x32xf32> to vector<2x8x32xf32>
    %9 = vector.extract_strided_slice %6 {offsets = [0, 32], sizes = [16, 32], strides = [1, 1]} : vector<16x96xf32> to vector<16x32xf32>
    %10 = vector.shape_cast %9 : vector<16x32xf32> to vector<2x8x32xf32>
    %11 = vector.extract_strided_slice %6 {offsets = [0, 64], sizes = [16, 32], strides = [1, 1]} : vector<16x96xf32> to vector<16x32xf32>
    %c0_7 = arith.constant 0 : index
    %c0_8 = arith.constant 0 : index
    %12 = vector.load %arg3[%c0_7, %c0_8] : memref<32x32xf32, #tpu.memory_space<vmem>>, vector<32x32xf32>
    %cst_9 = arith.constant dense<0.000000e+00> : vector<8x32xf32>
    %13 = tpu.matmul %1, %12, %cst_9 {dimension_numbers = #tpu.dot_dimension_numbers<[1], [0], [0], [1], [0, 0, 1, 1], [], []>} : vector<8x32xf32>, vector<32x32xf32>, vector<8x32xf32> -> vector<8x32xf32>
    %c0_10 = arith.constant 0 : index
    %c0_11 = arith.constant 0 : index
    %14 = vector.load %arg4[%c0_10, %c0_11] : memref<1x32xf32, #tpu.memory_space<vmem>>, vector<1x32xf32>
    %15 = vector.broadcast %14 : vector<1x32xf32> to vector<8x32xf32>
    %16 = arith.addf %13, %15 : vector<8x32xf32>
    %cst_12 = arith.constant 0.176776692 : f32
    %17 = vector.broadcast %cst_12 : f32 to vector<8x32xf32>
    %18 = arith.mulf %16, %17 : vector<8x32xf32>
    %19 = vector.shape_cast %18 : vector<8x32xf32> to vector<1x8x32xf32>
    %20 = vector.shape_cast %19 : vector<1x8x32xf32> to vector<1x8x32xf32>
    %21 = vector.broadcast %20 : vector<1x8x32xf32> to vector<2x8x32xf32>
    %22 = vector.extract_strided_slice %21 {offsets = [0, 0, 0], sizes = [2, 8, 8], strides = [1, 1, 1]} : vector<2x8x32xf32> to vector<2x8x8xf32>
    %23 = vector.extract_strided_slice %8 {offsets = [0, 0, 0], sizes = [2, 8, 8], strides = [1, 1, 1]} : vector<2x8x32xf32> to vector<2x8x8xf32>
    %24 = vector.extract_strided_slice %10 {offsets = [0, 0, 0], sizes = [2, 8, 8], strides = [1, 1, 1]} : vector<2x8x32xf32> to vector<2x8x8xf32>
    "tpu.trace_start"() <{level = 10 : i32, message = "bqd,bkd->bqk"}> : () -> ()
    %cst_13 = arith.constant dense<0.000000e+00> : vector<2x8x8xf32>
    %25 = tpu.matmul %22, %23, %cst_13 {dimension_numbers = #tpu.dot_dimension_numbers<[2], [2], [1], [1], [0, 0, 0, 1, 1, 1], [0], [0]>} : vector<2x8x8xf32>, vector<2x8x8xf32>, vector<2x8x8xf32> -> vector<2x8x8xf32>
    "tpu.trace_stop"() : () -> ()
    %cst_14 = arith.constant dense<0xFF800000> : vector<2x8xf32>
    %26 = vector.multi_reduction <maximumf>, %25, %cst_14 [2] : vector<2x8x8xf32> to vector<2x8xf32>
    %27 = vector.shape_cast %26 : vector<2x8xf32> to vector<2x8x1xf32>
    %28 = vector.broadcast %27 : vector<2x8x1xf32> to vector<2x8x8xf32>
    %29 = arith.subf %25, %28 : vector<2x8x8xf32>
    %30 = math.exp %29 : vector<2x8x8xf32>
    %cst_15 = arith.constant dense<0.000000e+00> : vector<2x8xf32>
    %31 = vector.multi_reduction <add>, %30, %cst_15 [2] : vector<2x8x8xf32> to vector<2x8xf32>
    %32 = vector.shape_cast %31 : vector<2x8xf32> to vector<2x8x1xf32>
    %33 = tpu.reciprocal %32 : vector<2x8x1xf32> -> vector<2x8x1xf32>
    %34 = vector.broadcast %33 : vector<2x8x1xf32> to vector<2x8x8xf32>
    %35 = arith.mulf %30, %34 : vector<2x8x8xf32>
    "tpu.trace_start"() <{level = 10 : i32, message = "bqk,bkd->bqd"}> : () -> ()
    %cst_16 = arith.constant dense<0.000000e+00> : vector<2x8x8xf32>
    %36 = tpu.matmul %35, %24, %cst_16 {dimension_numbers = #tpu.dot_dimension_numbers<[2], [1], [1], [2], [0, 0, 0, 1, 1, 2], [0], [0]>} : vector<2x8x8xf32>, vector<2x8x8xf32>, vector<2x8x8xf32> -> vector<2x8x8xf32>
    "tpu.trace_stop"() : () -> ()
    %37 = vector.extract_strided_slice %16 {offsets = [0, 0], sizes = [8, 8], strides = [1, 1]} : vector<8x32xf32> to vector<8x8xf32>
    %38 = vector.shape_cast %37 : vector<8x8xf32> to vector<1x8x8xf32>
    %39 = vector.broadcast %38 : vector<1x8x8xf32> to vector<2x8x8xf32>
    %40 = arith.addf %39, %36 : vector<2x8x8xf32>
    %41 = vector.extract_strided_slice %21 {offsets = [0, 0, 8], sizes = [2, 8, 8], strides = [1, 1, 1]} : vector<2x8x32xf32> to vector<2x8x8xf32>
    %42 = vector.extract_strided_slice %8 {offsets = [0, 0, 8], sizes = [2, 8, 8], strides = [1, 1, 1]} : vector<2x8x32xf32> to vector<2x8x8xf32>
    %43 = vector.extract_strided_slice %10 {offsets = [0, 0, 8], sizes = [2, 8, 8], strides = [1, 1, 1]} : vector<2x8x32xf32> to vector<2x8x8xf32>
    "tpu.trace_start"() <{level = 10 : i32, message = "bqd,bkd->bqk"}> : () -> ()
    %cst_17 = arith.constant dense<0.000000e+00> : vector<2x8x8xf32>
    %44 = tpu.matmul %41, %42, %cst_17 {dimension_numbers = #tpu.dot_dimension_numbers<[2], [2], [1], [1], [0, 0, 0, 1, 1, 1], [0], [0]>} : vector<2x8x8xf32>, vector<2x8x8xf32>, vector<2x8x8xf32> -> vector<2x8x8xf32>
    "tpu.trace_stop"() : () -> ()
    %cst_18 = arith.constant dense<0xFF800000> : vector<2x8xf32>
    %45 = vector.multi_reduction <maximumf>, %44, %cst_18 [2] : vector<2x8x8xf32> to vector<2x8xf32>
    %46 = vector.shape_cast %45 : vector<2x8xf32> to vector<2x8x1xf32>
    %47 = vector.broadcast %46 : vector<2x8x1xf32> to vector<2x8x8xf32>
    %48 = arith.subf %44, %47 : vector<2x8x8xf32>
    %49 = math.exp %48 : vector<2x8x8xf32>
    %cst_19 = arith.constant dense<0.000000e+00> : vector<2x8xf32>
    %50 = vector.multi_reduction <add>, %49, %cst_19 [2] : vector<2x8x8xf32> to vector<2x8xf32>
    %51 = vector.shape_cast %50 : vector<2x8xf32> to vector<2x8x1xf32>
    %52 = tpu.reciprocal %51 : vector<2x8x1xf32> -> vector<2x8x1xf32>
    %53 = vector.broadcast %52 : vector<2x8x1xf32> to vector<2x8x8xf32>
    %54 = arith.mulf %49, %53 : vector<2x8x8xf32>
    "tpu.trace_start"() <{level = 10 : i32, message = "bqk,bkd->bqd"}> : () -> ()
    %cst_20 = arith.constant dense<0.000000e+00> : vector<2x8x8xf32>
    %55 = tpu.matmul %54, %43, %cst_20 {dimension_numbers = #tpu.dot_dimension_numbers<[2], [1], [1], [2], [0, 0, 0, 1, 1, 2], [0], [0]>} : vector<2x8x8xf32>, vector<2x8x8xf32>, vector<2x8x8xf32> -> vector<2x8x8xf32>
    "tpu.trace_stop"() : () -> ()
    %56 = vector.extract_strided_slice %16 {offsets = [0, 8], sizes = [8, 8], strides = [1, 1]} : vector<8x32xf32> to vector<8x8xf32>
    %57 = vector.shape_cast %56 : vector<8x8xf32> to vector<1x8x8xf32>
    %58 = vector.broadcast %57 : vector<1x8x8xf32> to vector<2x8x8xf32>
    %59 = arith.addf %58, %55 : vector<2x8x8xf32>
    %60 = vector.extract_strided_slice %21 {offsets = [0, 0, 16], sizes = [2, 8, 8], strides = [1, 1, 1]} : vector<2x8x32xf32> to vector<2x8x8xf32>
    %61 = vector.extract_strided_slice %8 {offsets = [0, 0, 16], sizes = [2, 8, 8], strides = [1, 1, 1]} : vector<2x8x32xf32> to vector<2x8x8xf32>
    %62 = vector.extract_strided_slice %10 {offsets = [0, 0, 16], sizes = [2, 8, 8], strides = [1, 1, 1]} : vector<2x8x32xf32> to vector<2x8x8xf32>
    "tpu.trace_start"() <{level = 10 : i32, message = "bqd,bkd->bqk"}> : () -> ()
    %cst_21 = arith.constant dense<0.000000e+00> : vector<2x8x8xf32>
    %63 = tpu.matmul %60, %61, %cst_21 {dimension_numbers = #tpu.dot_dimension_numbers<[2], [2], [1], [1], [0, 0, 0, 1, 1, 1], [0], [0]>} : vector<2x8x8xf32>, vector<2x8x8xf32>, vector<2x8x8xf32> -> vector<2x8x8xf32>
    "tpu.trace_stop"() : () -> ()
    %cst_22 = arith.constant dense<0xFF800000> : vector<2x8xf32>
    %64 = vector.multi_reduction <maximumf>, %63, %cst_22 [2] : vector<2x8x8xf32> to vector<2x8xf32>
    %65 = vector.shape_cast %64 : vector<2x8xf32> to vector<2x8x1xf32>
    %66 = vector.broadcast %65 : vector<2x8x1xf32> to vector<2x8x8xf32>
    %67 = arith.subf %63, %66 : vector<2x8x8xf32>
    %68 = math.exp %67 : vector<2x8x8xf32>
    %cst_23 = arith.constant dense<0.000000e+00> : vector<2x8xf32>
    %69 = vector.multi_reduction <add>, %68, %cst_23 [2] : vector<2x8x8xf32> to vector<2x8xf32>
    %70 = vector.shape_cast %69 : vector<2x8xf32> to vector<2x8x1xf32>
    %71 = tpu.reciprocal %70 : vector<2x8x1xf32> -> vector<2x8x1xf32>
    %72 = vector.broadcast %71 : vector<2x8x1xf32> to vector<2x8x8xf32>
    %73 = arith.mulf %68, %72 : vector<2x8x8xf32>
    "tpu.trace_start"() <{level = 10 : i32, message = "bqk,bkd->bqd"}> : () -> ()
    %cst_24 = arith.constant dense<0.000000e+00> : vector<2x8x8xf32>
    %74 = tpu.matmul %73, %62, %cst_24 {dimension_numbers = #tpu.dot_dimension_numbers<[2], [1], [1], [2], [0, 0, 0, 1, 1, 2], [0], [0]>} : vector<2x8x8xf32>, vector<2x8x8xf32>, vector<2x8x8xf32> -> vector<2x8x8xf32>
    "tpu.trace_stop"() : () -> ()
    %75 = vector.extract_strided_slice %16 {offsets = [0, 16], sizes = [8, 8], strides = [1, 1]} : vector<8x32xf32> to vector<8x8xf32>
    %76 = vector.shape_cast %75 : vector<8x8xf32> to vector<1x8x8xf32>
    %77 = vector.broadcast %76 : vector<1x8x8xf32> to vector<2x8x8xf32>
    %78 = arith.addf %77, %74 : vector<2x8x8xf32>
    %79 = vector.extract_strided_slice %21 {offsets = [0, 0, 24], sizes = [2, 8, 8], strides = [1, 1, 1]} : vector<2x8x32xf32> to vector<2x8x8xf32>
    %80 = vector.extract_strided_slice %8 {offsets = [0, 0, 24], sizes = [2, 8, 8], strides = [1, 1, 1]} : vector<2x8x32xf32> to vector<2x8x8xf32>
    %81 = vector.extract_strided_slice %10 {offsets = [0, 0, 24], sizes = [2, 8, 8], strides = [1, 1, 1]} : vector<2x8x32xf32> to vector<2x8x8xf32>
    "tpu.trace_start"() <{level = 10 : i32, message = "bqd,bkd->bqk"}> : () -> ()
    %cst_25 = arith.constant dense<0.000000e+00> : vector<2x8x8xf32>
    %82 = tpu.matmul %79, %80, %cst_25 {dimension_numbers = #tpu.dot_dimension_numbers<[2], [2], [1], [1], [0, 0, 0, 1, 1, 1], [0], [0]>} : vector<2x8x8xf32>, vector<2x8x8xf32>, vector<2x8x8xf32> -> vector<2x8x8xf32>
    "tpu.trace_stop"() : () -> ()
    %cst_26 = arith.constant dense<0xFF800000> : vector<2x8xf32>
    %83 = vector.multi_reduction <maximumf>, %82, %cst_26 [2] : vector<2x8x8xf32> to vector<2x8xf32>
    %84 = vector.shape_cast %83 : vector<2x8xf32> to vector<2x8x1xf32>
    %85 = vector.broadcast %84 : vector<2x8x1xf32> to vector<2x8x8xf32>
    %86 = arith.subf %82, %85 : vector<2x8x8xf32>
    %87 = math.exp %86 : vector<2x8x8xf32>
    %cst_27 = arith.constant dense<0.000000e+00> : vector<2x8xf32>
    %88 = vector.multi_reduction <add>, %87, %cst_27 [2] : vector<2x8x8xf32> to vector<2x8xf32>
    %89 = vector.shape_cast %88 : vector<2x8xf32> to vector<2x8x1xf32>
    %90 = tpu.reciprocal %89 : vector<2x8x1xf32> -> vector<2x8x1xf32>
    %91 = vector.broadcast %90 : vector<2x8x1xf32> to vector<2x8x8xf32>
    %92 = arith.mulf %87, %91 : vector<2x8x8xf32>
    "tpu.trace_start"() <{level = 10 : i32, message = "bqk,bkd->bqd"}> : () -> ()
    %cst_28 = arith.constant dense<0.000000e+00> : vector<2x8x8xf32>
    %93 = tpu.matmul %92, %81, %cst_28 {dimension_numbers = #tpu.dot_dimension_numbers<[2], [1], [1], [2], [0, 0, 0, 1, 1, 2], [0], [0]>} : vector<2x8x8xf32>, vector<2x8x8xf32>, vector<2x8x8xf32> -> vector<2x8x8xf32>
    "tpu.trace_stop"() : () -> ()
    %94 = vector.extract_strided_slice %16 {offsets = [0, 24], sizes = [8, 8], strides = [1, 1]} : vector<8x32xf32> to vector<8x8xf32>
    %95 = vector.shape_cast %94 : vector<8x8xf32> to vector<1x8x8xf32>
    %96 = vector.broadcast %95 : vector<1x8x8xf32> to vector<2x8x8xf32>
    %97 = arith.addf %96, %93 : vector<2x8x8xf32>
    %98 = tpu.concatenate %40, %59, %78, %97 in 2 : vector<2x8x8xf32>, vector<2x8x8xf32>, vector<2x8x8xf32>, vector<2x8x8xf32> -> vector<2x8x32xf32>
    %99 = vector.shape_cast %98 : vector<2x8x32xf32> to vector<16x32xf32>
    %c0_29 = arith.constant 0 : index
    %c0_30 = arith.constant 0 : index
    %100 = vector.load %arg7[%c0_29, %c0_30] : memref<32x32xf32, #tpu.memory_space<vmem>>, vector<32x32xf32>
    %cst_31 = arith.constant dense<0.000000e+00> : vector<16x32xf32>
    %101 = tpu.matmul %99, %100, %cst_31 {dimension_numbers = #tpu.dot_dimension_numbers<[1], [0], [0], [1], [0, 0, 1, 1], [], []>} : vector<16x32xf32>, vector<32x32xf32>, vector<16x32xf32> -> vector<16x32xf32>
    %c0_32 = arith.constant 0 : index
    %c0_33 = arith.constant 0 : index
    %102 = vector.load %arg8[%c0_32, %c0_33] : memref<1x32xf32, #tpu.memory_space<vmem>>, vector<1x32xf32>
    %103 = vector.broadcast %102 : vector<1x32xf32> to vector<16x32xf32>
    %104 = arith.addf %101, %103 : vector<16x32xf32>
    %cst_34 = arith.constant 0.000000e+00 : f32
    %105 = vector.broadcast %cst_34 : f32 to vector<16x32xf32>
    %106 = arith.maximumf %104, %105 : vector<16x32xf32>
    %107 = arith.addf %99, %106 : vector<16x32xf32>
    %c0_35 = arith.constant 0 : index
    %c0_36 = arith.constant 0 : index
    %108 = vector.load %arg9[%c0_35, %c0_36] : memref<32x64xf32, #tpu.memory_space<vmem>>, vector<32x64xf32>
    %cst_37 = arith.constant dense<0.000000e+00> : vector<16x64xf32>
    %109 = tpu.matmul %107, %108, %cst_37 {dimension_numbers = #tpu.dot_dimension_numbers<[1], [0], [0], [1], [0, 0, 1, 1], [], []>} : vector<16x32xf32>, vector<32x64xf32>, vector<16x64xf32> -> vector<16x64xf32>
    %c0_38 = arith.constant 0 : index
    %c0_39 = arith.constant 0 : index
    %110 = vector.load %arg10[%c0_38, %c0_39] : memref<1x64xf32, #tpu.memory_space<vmem>>, vector<1x64xf32>
    %111 = vector.broadcast %110 : vector<1x64xf32> to vector<16x64xf32>
    %112 = arith.addf %109, %111 : vector<16x64xf32>
    %113 = vector.extract_strided_slice %112 {offsets = [0, 0], sizes = [16, 32], strides = [1, 1]} : vector<16x64xf32> to vector<16x32xf32>
    %114 = vector.shape_cast %113 : vector<16x32xf32> to vector<2x8x32xf32>
    %115 = vector.extract_strided_slice %112 {offsets = [0, 32], sizes = [16, 32], strides = [1, 1]} : vector<16x64xf32> to vector<16x32xf32>
    %116 = vector.shape_cast %115 : vector<16x32xf32> to vector<2x8x32xf32>
    %117 = vector.shape_cast %11 : vector<16x32xf32> to vector<2x8x32xf32>
    %cst_40 = arith.constant 0.176776692 : f32
    %118 = vector.broadcast %cst_40 : f32 to vector<2x8x32xf32>
    %119 = arith.mulf %117, %118 : vector<2x8x32xf32>
    %120 = vector.extract_strided_slice %119 {offsets = [0, 0, 0], sizes = [2, 8, 8], strides = [1, 1, 1]} : vector<2x8x32xf32> to vector<2x8x8xf32>
    %121 = vector.extract_strided_slice %114 {offsets = [0, 0, 0], sizes = [2, 8, 8], strides = [1, 1, 1]} : vector<2x8x32xf32> to vector<2x8x8xf32>
    %122 = vector.extract_strided_slice %116 {offsets = [0, 0, 0], sizes = [2, 8, 8], strides = [1, 1, 1]} : vector<2x8x32xf32> to vector<2x8x8xf32>
    "tpu.trace_start"() <{level = 10 : i32, message = "bqd,bkd->bqk"}> : () -> ()
    %cst_41 = arith.constant dense<0.000000e+00> : vector<2x8x8xf32>
    %123 = tpu.matmul %120, %121, %cst_41 {dimension_numbers = #tpu.dot_dimension_numbers<[2], [2], [1], [1], [0, 0, 0, 1, 1, 1], [0], [0]>} : vector<2x8x8xf32>, vector<2x8x8xf32>, vector<2x8x8xf32> -> vector<2x8x8xf32>
    "tpu.trace_stop"() : () -> ()
    %cst_42 = arith.constant dense<0xFF800000> : vector<2x8xf32>
    %124 = vector.multi_reduction <maximumf>, %123, %cst_42 [2] : vector<2x8x8xf32> to vector<2x8xf32>
    %125 = vector.shape_cast %124 : vector<2x8xf32> to vector<2x8x1xf32>
    %126 = vector.broadcast %125 : vector<2x8x1xf32> to vector<2x8x8xf32>
    %127 = arith.subf %123, %126 : vector<2x8x8xf32>
    %128 = math.exp %127 : vector<2x8x8xf32>
    %cst_43 = arith.constant dense<0.000000e+00> : vector<2x8xf32>
    %129 = vector.multi_reduction <add>, %128, %cst_43 [2] : vector<2x8x8xf32> to vector<2x8xf32>
    %130 = vector.shape_cast %129 : vector<2x8xf32> to vector<2x8x1xf32>
    %131 = tpu.reciprocal %130 : vector<2x8x1xf32> -> vector<2x8x1xf32>
    %132 = vector.broadcast %131 : vector<2x8x1xf32> to vector<2x8x8xf32>
    %133 = arith.mulf %128, %132 : vector<2x8x8xf32>
    "tpu.trace_start"() <{level = 10 : i32, message = "bqk,bkd->bqd"}> : () -> ()
    %cst_44 = arith.constant dense<0.000000e+00> : vector<2x8x8xf32>
    %134 = tpu.matmul %133, %122, %cst_44 {dimension_numbers = #tpu.dot_dimension_numbers<[2], [1], [1], [2], [0, 0, 0, 1, 1, 2], [0], [0]>} : vector<2x8x8xf32>, vector<2x8x8xf32>, vector<2x8x8xf32> -> vector<2x8x8xf32>
    "tpu.trace_stop"() : () -> ()
    %135 = vector.extract_strided_slice %117 {offsets = [0, 0, 0], sizes = [2, 8, 8], strides = [1, 1, 1]} : vector<2x8x32xf32> to vector<2x8x8xf32>
    %136 = arith.addf %135, %134 : vector<2x8x8xf32>
    %137 = vector.extract_strided_slice %119 {offsets = [0, 0, 8], sizes = [2, 8, 8], strides = [1, 1, 1]} : vector<2x8x32xf32> to vector<2x8x8xf32>
    %138 = vector.extract_strided_slice %114 {offsets = [0, 0, 8], sizes = [2, 8, 8], strides = [1, 1, 1]} : vector<2x8x32xf32> to vector<2x8x8xf32>
    %139 = vector.extract_strided_slice %116 {offsets = [0, 0, 8], sizes = [2, 8, 8], strides = [1, 1, 1]} : vector<2x8x32xf32> to vector<2x8x8xf32>
    "tpu.trace_start"() <{level = 10 : i32, message = "bqd,bkd->bqk"}> : () -> ()
    %cst_45 = arith.constant dense<0.000000e+00> : vector<2x8x8xf32>
    %140 = tpu.matmul %137, %138, %cst_45 {dimension_numbers = #tpu.dot_dimension_numbers<[2], [2], [1], [1], [0, 0, 0, 1, 1, 1], [0], [0]>} : vector<2x8x8xf32>, vector<2x8x8xf32>, vector<2x8x8xf32> -> vector<2x8x8xf32>
    "tpu.trace_stop"() : () -> ()
    %cst_46 = arith.constant dense<0xFF800000> : vector<2x8xf32>
    %141 = vector.multi_reduction <maximumf>, %140, %cst_46 [2] : vector<2x8x8xf32> to vector<2x8xf32>
    %142 = vector.shape_cast %141 : vector<2x8xf32> to vector<2x8x1xf32>
    %143 = vector.broadcast %142 : vector<2x8x1xf32> to vector<2x8x8xf32>
    %144 = arith.subf %140, %143 : vector<2x8x8xf32>
    %145 = math.exp %144 : vector<2x8x8xf32>
    %cst_47 = arith.constant dense<0.000000e+00> : vector<2x8xf32>
    %146 = vector.multi_reduction <add>, %145, %cst_47 [2] : vector<2x8x8xf32> to vector<2x8xf32>
    %147 = vector.shape_cast %146 : vector<2x8xf32> to vector<2x8x1xf32>
    %148 = tpu.reciprocal %147 : vector<2x8x1xf32> -> vector<2x8x1xf32>
    %149 = vector.broadcast %148 : vector<2x8x1xf32> to vector<2x8x8xf32>
    %150 = arith.mulf %145, %149 : vector<2x8x8xf32>
    "tpu.trace_start"() <{level = 10 : i32, message = "bqk,bkd->bqd"}> : () -> ()
    %cst_48 = arith.constant dense<0.000000e+00> : vector<2x8x8xf32>
    %151 = tpu.matmul %150, %139, %cst_48 {dimension_numbers = #tpu.dot_dimension_numbers<[2], [1], [1], [2], [0, 0, 0, 1, 1, 2], [0], [0]>} : vector<2x8x8xf32>, vector<2x8x8xf32>, vector<2x8x8xf32> -> vector<2x8x8xf32>
    "tpu.trace_stop"() : () -> ()
    %152 = vector.extract_strided_slice %117 {offsets = [0, 0, 8], sizes = [2, 8, 8], strides = [1, 1, 1]} : vector<2x8x32xf32> to vector<2x8x8xf32>
    %153 = arith.addf %152, %151 : vector<2x8x8xf32>
    %154 = vector.extract_strided_slice %119 {offsets = [0, 0, 16], sizes = [2, 8, 8], strides = [1, 1, 1]} : vector<2x8x32xf32> to vector<2x8x8xf32>
    %155 = vector.extract_strided_slice %114 {offsets = [0, 0, 16], sizes = [2, 8, 8], strides = [1, 1, 1]} : vector<2x8x32xf32> to vector<2x8x8xf32>
    %156 = vector.extract_strided_slice %116 {offsets = [0, 0, 16], sizes = [2, 8, 8], strides = [1, 1, 1]} : vector<2x8x32xf32> to vector<2x8x8xf32>
    "tpu.trace_start"() <{level = 10 : i32, message = "bqd,bkd->bqk"}> : () -> ()
    %cst_49 = arith.constant dense<0.000000e+00> : vector<2x8x8xf32>
    %157 = tpu.matmul %154, %155, %cst_49 {dimension_numbers = #tpu.dot_dimension_numbers<[2], [2], [1], [1], [0, 0, 0, 1, 1, 1], [0], [0]>} : vector<2x8x8xf32>, vector<2x8x8xf32>, vector<2x8x8xf32> -> vector<2x8x8xf32>
    "tpu.trace_stop"() : () -> ()
    %cst_50 = arith.constant dense<0xFF800000> : vector<2x8xf32>
    %158 = vector.multi_reduction <maximumf>, %157, %cst_50 [2] : vector<2x8x8xf32> to vector<2x8xf32>
    %159 = vector.shape_cast %158 : vector<2x8xf32> to vector<2x8x1xf32>
    %160 = vector.broadcast %159 : vector<2x8x1xf32> to vector<2x8x8xf32>
    %161 = arith.subf %157, %160 : vector<2x8x8xf32>
    %162 = math.exp %161 : vector<2x8x8xf32>
    %cst_51 = arith.constant dense<0.000000e+00> : vector<2x8xf32>
    %163 = vector.multi_reduction <add>, %162, %cst_51 [2] : vector<2x8x8xf32> to vector<2x8xf32>
    %164 = vector.shape_cast %163 : vector<2x8xf32> to vector<2x8x1xf32>
    %165 = tpu.reciprocal %164 : vector<2x8x1xf32> -> vector<2x8x1xf32>
    %166 = vector.broadcast %165 : vector<2x8x1xf32> to vector<2x8x8xf32>
    %167 = arith.mulf %162, %166 : vector<2x8x8xf32>
    "tpu.trace_start"() <{level = 10 : i32, message = "bqk,bkd->bqd"}> : () -> ()
    %cst_52 = arith.constant dense<0.000000e+00> : vector<2x8x8xf32>
    %168 = tpu.matmul %167, %156, %cst_52 {dimension_numbers = #tpu.dot_dimension_numbers<[2], [1], [1], [2], [0, 0, 0, 1, 1, 2], [0], [0]>} : vector<2x8x8xf32>, vector<2x8x8xf32>, vector<2x8x8xf32> -> vector<2x8x8xf32>
    "tpu.trace_stop"() : () -> ()
    %169 = vector.extract_strided_slice %117 {offsets = [0, 0, 16], sizes = [2, 8, 8], strides = [1, 1, 1]} : vector<2x8x32xf32> to vector<2x8x8xf32>
    %170 = arith.addf %169, %168 : vector<2x8x8xf32>
    %171 = vector.extract_strided_slice %119 {offsets = [0, 0, 24], sizes = [2, 8, 8], strides = [1, 1, 1]} : vector<2x8x32xf32> to vector<2x8x8xf32>
    %172 = vector.extract_strided_slice %114 {offsets = [0, 0, 24], sizes = [2, 8, 8], strides = [1, 1, 1]} : vector<2x8x32xf32> to vector<2x8x8xf32>
    %173 = vector.extract_strided_slice %116 {offsets = [0, 0, 24], sizes = [2, 8, 8], strides = [1, 1, 1]} : vector<2x8x32xf32> to vector<2x8x8xf32>
    "tpu.trace_start"() <{level = 10 : i32, message = "bqd,bkd->bqk"}> : () -> ()
    %cst_53 = arith.constant dense<0.000000e+00> : vector<2x8x8xf32>
    %174 = tpu.matmul %171, %172, %cst_53 {dimension_numbers = #tpu.dot_dimension_numbers<[2], [2], [1], [1], [0, 0, 0, 1, 1, 1], [0], [0]>} : vector<2x8x8xf32>, vector<2x8x8xf32>, vector<2x8x8xf32> -> vector<2x8x8xf32>
    "tpu.trace_stop"() : () -> ()
    %cst_54 = arith.constant dense<0xFF800000> : vector<2x8xf32>
    %175 = vector.multi_reduction <maximumf>, %174, %cst_54 [2] : vector<2x8x8xf32> to vector<2x8xf32>
    %176 = vector.shape_cast %175 : vector<2x8xf32> to vector<2x8x1xf32>
    %177 = vector.broadcast %176 : vector<2x8x1xf32> to vector<2x8x8xf32>
    %178 = arith.subf %174, %177 : vector<2x8x8xf32>
    %179 = math.exp %178 : vector<2x8x8xf32>
    %cst_55 = arith.constant dense<0.000000e+00> : vector<2x8xf32>
    %180 = vector.multi_reduction <add>, %179, %cst_55 [2] : vector<2x8x8xf32> to vector<2x8xf32>
    %181 = vector.shape_cast %180 : vector<2x8xf32> to vector<2x8x1xf32>
    %182 = tpu.reciprocal %181 : vector<2x8x1xf32> -> vector<2x8x1xf32>
    %183 = vector.broadcast %182 : vector<2x8x1xf32> to vector<2x8x8xf32>
    %184 = arith.mulf %179, %183 : vector<2x8x8xf32>
    "tpu.trace_start"() <{level = 10 : i32, message = "bqk,bkd->bqd"}> : () -> ()
    %cst_56 = arith.constant dense<0.000000e+00> : vector<2x8x8xf32>
    %185 = tpu.matmul %184, %173, %cst_56 {dimension_numbers = #tpu.dot_dimension_numbers<[2], [1], [1], [2], [0, 0, 0, 1, 1, 2], [0], [0]>} : vector<2x8x8xf32>, vector<2x8x8xf32>, vector<2x8x8xf32> -> vector<2x8x8xf32>
    "tpu.trace_stop"() : () -> ()
    %186 = vector.extract_strided_slice %117 {offsets = [0, 0, 24], sizes = [2, 8, 8], strides = [1, 1, 1]} : vector<2x8x32xf32> to vector<2x8x8xf32>
    %187 = arith.addf %186, %185 : vector<2x8x8xf32>
    %188 = tpu.concatenate %136, %153, %170, %187 in 2 : vector<2x8x8xf32>, vector<2x8x8xf32>, vector<2x8x8xf32>, vector<2x8x8xf32> -> vector<2x8x32xf32>
    %189 = vector.shape_cast %188 : vector<2x8x32xf32> to vector<16x32xf32>
    %c0_57 = arith.constant 0 : index
    %c0_58 = arith.constant 0 : index
    %190 = vector.load %arg11[%c0_57, %c0_58] : memref<32x32xf32, #tpu.memory_space<vmem>>, vector<32x32xf32>
    %cst_59 = arith.constant dense<0.000000e+00> : vector<16x32xf32>
    %191 = tpu.matmul %189, %190, %cst_59 {dimension_numbers = #tpu.dot_dimension_numbers<[1], [0], [0], [1], [0, 0, 1, 1], [], []>} : vector<16x32xf32>, vector<32x32xf32>, vector<16x32xf32> -> vector<16x32xf32>
    %c0_60 = arith.constant 0 : index
    %c0_61 = arith.constant 0 : index
    %192 = vector.load %arg12[%c0_60, %c0_61] : memref<1x32xf32, #tpu.memory_space<vmem>>, vector<1x32xf32>
    %193 = vector.broadcast %192 : vector<1x32xf32> to vector<16x32xf32>
    %194 = arith.addf %191, %193 : vector<16x32xf32>
    %cst_62 = arith.constant 0.000000e+00 : f32
    %195 = vector.broadcast %cst_62 : f32 to vector<16x32xf32>
    %196 = arith.maximumf %194, %195 : vector<16x32xf32>
    %197 = arith.addf %189, %196 : vector<16x32xf32>
    %c0_63 = arith.constant 0 : index
    %c0_64 = arith.constant 0 : index
    %198 = vector.load %arg13[%c0_63, %c0_64] : memref<16x32xf32, #tpu.memory_space<vmem>>, vector<16x32xf32>
    tpu.vector_store %arg13[%c0_63, %c0_64], %197 {strides = array<i32>} : memref<16x32xf32, #tpu.memory_space<vmem>>, vector<16x32xf32>,
    return
  }
  func.func @transform_0(%arg0: i32) -> (i32, i32) {
    %c0_i32 = arith.constant 0 : i32
    %c0_i32_0 = arith.constant 0 : i32
    return %arg0, %c0_i32 : i32, i32
  }
  func.func @transform_1(%arg0: i32) -> (i32, i32) {
    %c0_i32 = arith.constant 0 : i32
    %c0_i32_0 = arith.constant 0 : i32
    %c0_i32_1 = arith.constant 0 : i32
    return %c0_i32, %c0_i32_0 : i32, i32
  }
  func.func @transform_2(%arg0: i32) -> (i32, i32) {
    %c0_i32 = arith.constant 0 : i32
    %c0_i32_0 = arith.constant 0 : i32
    %c0_i32_1 = arith.constant 0 : i32
    return %c0_i32, %c0_i32_0 : i32, i32
  }
  func.func @transform_3(%arg0: i32) -> (i32, i32) {
    %c0_i32 = arith.constant 0 : i32
    %c0_i32_0 = arith.constant 0 : i32
    %c0_i32_1 = arith.constant 0 : i32
    return %c0_i32, %c0_i32_0 : i32, i32
  }
  func.func @transform_4(%arg0: i32) -> (i32, i32) {
    %c0_i32 = arith.constant 0 : i32
    %c0_i32_0 = arith.constant 0 : i32
    %c0_i32_1 = arith.constant 0 : i32
    return %c0_i32, %c0_i32_0 : i32, i32
  }
  func.func @transform_5(%arg0: i32) -> (i32, i32) {
    %c0_i32 = arith.constant 0 : i32
    %c0_i32_0 = arith.constant 0 : i32
    %c0_i32_1 = arith.constant 0 : i32
    return %c0_i32, %c0_i32_0 : i32, i32
  }
  func.func @transform_6(%arg0: i32) -> (i32, i32) {
    %c0_i32 = arith.constant 0 : i32
    %c0_i32_0 = arith.constant 0 : i32
    %c0_i32_1 = arith.constant 0 : i32
    return %c0_i32, %c0_i32_0 : i32, i32
  }
  func.func @transform_7(%arg0: i32) -> (i32, i32) {
    %c0_i32 = arith.constant 0 : i32
    %c0_i32_0 = arith.constant 0 : i32
    %c0_i32_1 = arith.constant 0 : i32
    return %c0_i32, %c0_i32_0 : i32, i32
  }
  func.func @transform_8(%arg0: i32) -> (i32, i32) {
    %c0_i32 = arith.constant 0 : i32
    %c0_i32_0 = arith.constant 0 : i32
    %c0_i32_1 = arith.constant 0 : i32
    return %c0_i32, %c0_i32_0 : i32, i32
  }
  func.func @transform_9(%arg0: i32) -> (i32, i32) {
    %c0_i32 = arith.constant 0 : i32
    %c0_i32_0 = arith.constant 0 : i32
    %c0_i32_1 = arith.constant 0 : i32
    return %c0_i32, %c0_i32_0 : i32, i32
  }
  func.func @transform_10(%arg0: i32) -> (i32, i32) {
    %c0_i32 = arith.constant 0 : i32
    %c0_i32_0 = arith.constant 0 : i32
    %c0_i32_1 = arith.constant 0 : i32
    return %c0_i32, %c0_i32_0 : i32, i32
  }
  func.func @transform_11(%arg0: i32) -> (i32, i32) {
    %c0_i32 = arith.constant 0 : i32
    %c0_i32_0 = arith.constant 0 : i32
    %c0_i32_1 = arith.constant 0 : i32
    return %c0_i32, %c0_i32_0 : i32, i32
  }
  func.func @transform_12(%arg0: i32) -> (i32, i32) {
    %c0_i32 = arith.constant 0 : i32
    %c0_i32_0 = arith.constant 0 : i32
    return %arg0, %c0_i32 : i32, i32
  }
}

</mosaic_0001>

<llo_original>
// kernel: tpu_custom_call.1
$region0: #{tpu_custom_call.1}
  #allocation0 [shape = 'u32[]', space=smem, size = 0x4, offset = 0x4, fixed_abs, tag = 'smem constant byte address 0x4 - core index']
  #allocation1 [shape = 'u32[144,128]{1,0:T(1,128)}', space=vmem, size = 0x12000, scoped, tag = 'internal scratch']
  %s0 = inlined_call_operand.vmem [shape: f32[16,4], index: 0, kind: input, shape index: {}]
  %s1 = inlined_call_operand.hbm [shape: f32[8,32], index: 1, kind: input, shape index: {}]
  %s2 = inlined_call_operand.hbm [shape: f32[32,32], index: 2, kind: input, shape index: {}]
  %s3 = inlined_call_operand.vmem [shape: f32[1,32], index: 3, kind: input, shape index: {}]
  %s4 = inlined_call_operand.hbm [shape: f32[4,96], index: 4, kind: input, shape index: {}]
  %s5 = inlined_call_operand.vmem [shape: f32[1,96], index: 5, kind: input, shape index: {}]
  %s6 = inlined_call_operand.hbm [shape: f32[32,32], index: 6, kind: input, shape index: {}]
  %s7 = inlined_call_operand.hbm [shape: f32[1,32], index: 7, kind: input, shape index: {}]
  %s8 = inlined_call_operand.vmem [shape: f32[32,64], index: 8, kind: input, shape index: {}]
  %s9 = inlined_call_operand.vmem [shape: f32[1,64], index: 9, kind: input, shape index: {}]
  %s10 = inlined_call_operand.hbm [shape: f32[32,32], index: 10, kind: input, shape index: {}]
  %s11 = inlined_call_operand.vmem [shape: f32[1,32], index: 11, kind: input, shape index: {}]
  %s12 = inlined_call_operand.hbm [shape: f32[16,32], index: 12, kind: output, shape index: {}]
  %s13 = sld [smem:[#allocation0]]
  $region82: #{tpu_custom_call.1} parent=0
    _
  %s15 = ssub.s32 1, %s13
  %s16 = scalar_select 0, %s15, %s13
  $region1: #{tpu_custom_call.1} parent=0
    #allocation2 [shape = 'u8[4096]{0}', space=vmem, size = 0x1000, scoped, tag = 'input window, operand 1, single buffered']
    #allocation3 [shape = 's32[1]{0}', space=sflag, size = 0x4, scoped, tag = 'scoped memory for tpu_custom_call.1']
    #allocation4 [shape = 's32[1]{0}', space=sflag, size = 0x4, scoped, tag = 'scoped memory for tpu_custom_call.1']
    #allocation5 [shape = 'u8[16384]{0}', space=vmem, size = 0x4000, scoped, tag = 'input window, operand 2, single buffered']
    #allocation6 [shape = 's32[1]{0}', space=sflag, size = 0x4, scoped, tag = 'scoped memory for tpu_custom_call.1']
    #allocation7 [shape = 'u8[2048]{0}', space=vmem, size = 0x800, scoped, tag = 'input window, operand 4, single buffered']
    #allocation8 [shape = 'u8[16384]{0}', space=vmem, size = 0x4000, scoped, tag = 'input window, operand 6, single buffered']
    #allocation9 [shape = 's32[1]{0}', space=sflag, size = 0x4, scoped, tag = 'scoped memory for tpu_custom_call.1']
    #allocation10 [shape = 'u8[512]{0}', space=vmem, size = 0x400, scoped, tag = 'input window, operand 7, single buffered']
    #allocation11 [shape = 'u8[16384]{0}', space=vmem, size = 0x4000, scoped, tag = 'input window, operand 10, single buffered']
    #allocation12 [shape = 's32[1]{0}', space=sflag, size = 0x4, scoped, tag = 'scoped memory for tpu_custom_call.1']
    #allocation13 [shape = 'u8[8192]{0}', space=vmem, size = 0x2000, scoped, tag = 'output window, operand 0, single buffered']
    %17 = vsyncpa [#allocation3], 0
    %18 = vsyncpa [#allocation6], 0
    %19 = vsyncpa [#allocation9], 0
    %20 = vsyncpa [#allocation12], 0
    %21 = vsyncpa [#allocation4], 0
    // Predicated region
    $region2: #{tpu_custom_call.1} parent=1 // pred_check
      _
    $region3: #{tpu_custom_call.1} parent=1 // pred_check_branch
      %23 = sbr.rel (0) target = $region5
    $region4: #{tpu_custom_call.1} parent=1 // pred_region
      _
    $region5: #{tpu_custom_call.1} parent=1 // pred_fallthru
      _
    // Predicated region
    $region6: #{tpu_custom_call.1} parent=1 // pred_check
      _
    $region7: #{tpu_custom_call.1} parent=1 // pred_check_branch
      %25 = sbr.rel (0) target = $region9
    $region8: #{tpu_custom_call.1} parent=1 // pred_region
      %s27 = ssub.s32 128, 128
      %28 = vsyncadd [#allocation3], %s27
      %s30 = sshll.u32 [#allocation2], 4
      %s31 = int_to_ptr.vmem [resolvable:$true] %s30
      %33 = dma.hbm_to_vmem [thread:$0]  %s1, 128, %s31, [#allocation3]
    $region9: #{tpu_custom_call.1} parent=1 // pred_fallthru
      _
    // Predicated region
    $region10: #{tpu_custom_call.1} parent=1 // pred_check
      _
    $region11: #{tpu_custom_call.1} parent=1 // pred_check_branch
      %35 = sbr.rel (0) target = $region13
    $region12: #{tpu_custom_call.1} parent=1 // pred_region
      %s37 = ssub.s32 512, 512
      %38 = vsyncadd [#allocation6], %s37
      %s39 = sshll.u32 [#allocation5], 4
      %s40 = int_to_ptr.vmem [resolvable:$true] %s39
      %45 = dma.hbm_to_vmem [thread:$0]  %s2, 512, %s40, [#allocation6], 128, 128, 8
    $region13: #{tpu_custom_call.1} parent=1 // pred_fallthru
      _
    // Predicated region
    $region14: #{tpu_custom_call.1} parent=1 // pred_check
      _
    $region15: #{tpu_custom_call.1} parent=1 // pred_check_branch
      %47 = sbr.rel (0) target = $region17
    $region16: #{tpu_custom_call.1} parent=1 // pred_region
      _
    $region17: #{tpu_custom_call.1} parent=1 // pred_fallthru
      _
    // Predicated region
    $region18: #{tpu_custom_call.1} parent=1 // pred_check
      _
    $region19: #{tpu_custom_call.1} parent=1 // pred_check_branch
      %49 = sbr.rel (0) target = $region21
    $region20: #{tpu_custom_call.1} parent=1 // pred_region
      %s51 = ssub.s32 64, 64
      %52 = vsyncadd [#allocation6], %s51
      %s54 = sshll.u32 [#allocation7], 4
      %s55 = int_to_ptr.vmem [resolvable:$true] %s54
      %57 = dma.hbm_to_vmem [thread:$0]  %s4, 64, %s55, [#allocation6]
    $region21: #{tpu_custom_call.1} parent=1 // pred_fallthru
      _
    // Predicated region
    $region22: #{tpu_custom_call.1} parent=1 // pred_check
      _
    $region23: #{tpu_custom_call.1} parent=1 // pred_check_branch
      %59 = sbr.rel (0) target = $region25
    $region24: #{tpu_custom_call.1} parent=1 // pred_region
      _
    $region25: #{tpu_custom_call.1} parent=1 // pred_fallthru
      _
    // Predicated region
    $region26: #{tpu_custom_call.1} parent=1 // pred_check
      _
    $region27: #{tpu_custom_call.1} parent=1 // pred_check_branch
      %61 = sbr.rel (0) target = $region29
    $region28: #{tpu_custom_call.1} parent=1 // pred_region
      %s63 = ssub.s32 512, 512
      %64 = vsyncadd [#allocation9], %s63
      %s65 = sshll.u32 [#allocation8], 4
      %s66 = int_to_ptr.vmem [resolvable:$true] %s65
      %71 = dma.hbm_to_vmem [thread:$0]  %s6, 512, %s66, [#allocation9], 128, 128, 8
    $region29: #{tpu_custom_call.1} parent=1 // pred_fallthru
      _
    // Predicated region
    $region30: #{tpu_custom_call.1} parent=1 // pred_check
      _
    $region31: #{tpu_custom_call.1} parent=1 // pred_check_branch
      %73 = sbr.rel (0) target = $region33
    $region32: #{tpu_custom_call.1} parent=1 // pred_region
      %s75 = ssub.s32 16, 16
      %76 = vsyncadd [#allocation9], %s75
      %s78 = sshll.u32 [#allocation10], 4
      %s79 = int_to_ptr.vmem [resolvable:$true] %s78
      %81 = dma.hbm_to_vmem [thread:$0]  %s7, 16, %s79, [#allocation9]
    $region33: #{tpu_custom_call.1} parent=1 // pred_fallthru
      _
    // Predicated region
    $region34: #{tpu_custom_call.1} parent=1 // pred_check
      _
    $region35: #{tpu_custom_call.1} parent=1 // pred_check_branch
      %83 = sbr.rel (0) target = $region37
    $region36: #{tpu_custom_call.1} parent=1 // pred_region
      _
    $region37: #{tpu_custom_call.1} parent=1 // pred_fallthru
      _
    // Predicated region
    $region38: #{tpu_custom_call.1} parent=1 // pred_check
      _
    $region39: #{tpu_custom_call.1} parent=1 // pred_check_branch
      %85 = sbr.rel (0) target = $region41
    $region40: #{tpu_custom_call.1} parent=1 // pred_region
      _
    $region41: #{tpu_custom_call.1} parent=1 // pred_fallthru
      _
    // Predicated region
    $region42: #{tpu_custom_call.1} parent=1 // pred_check
      _
    $region43: #{tpu_custom_call.1} parent=1 // pred_check_branch
      %87 = sbr.rel (0) target = $region45
    $region44: #{tpu_custom_call.1} parent=1 // pred_region
      %s89 = ssub.s32 512, 512
      %90 = vsyncadd [#allocation12], %s89
      %s91 = sshll.u32 [#allocation11], 4
      %s92 = int_to_ptr.vmem [resolvable:$true] %s91
      %97 = dma.hbm_to_vmem [thread:$0]  %s10, 512, %s92, [#allocation12], 128, 128, 8
    $region45: #{tpu_custom_call.1} parent=1 // pred_fallthru
      _
    // Predicated region
    $region46: #{tpu_custom_call.1} parent=1 // pred_check
      _
    $region47: #{tpu_custom_call.1} parent=1 // pred_check_branch
      %99 = sbr.rel (0) target = $region49
    $region48: #{tpu_custom_call.1} parent=1 // pred_region
      _
    $region49: #{tpu_custom_call.1} parent=1 // pred_fallthru
      _
    // Predicated region
    $region50: #{tpu_custom_call.1} parent=1 // pred_check
      _
    $region51: #{tpu_custom_call.1} parent=1 // pred_check_branch
      %101 = sbr.rel (0) target = $region53
    $region52: #{tpu_custom_call.1} parent=1 // pred_region
      %102 = dma.done [#allocation3], 128
    $region53: #{tpu_custom_call.1} parent=1 // pred_fallthru
      _
    // Predicated region
    $region54: #{tpu_custom_call.1} parent=1 // pred_check
      _
    $region55: #{tpu_custom_call.1} parent=1 // pred_check_branch
      %104 = sbr.rel (0) target = $region57
    $region56: #{tpu_custom_call.1} parent=1 // pred_region
      %105 = dma.done [#allocation6], 512
    $region57: #{tpu_custom_call.1} parent=1 // pred_fallthru
      _
    // Predicated region
    $region58: #{tpu_custom_call.1} parent=1 // pred_check
      _
    $region59: #{tpu_custom_call.1} parent=1 // pred_check_branch
      %107 = sbr.rel (0) target = $region61
    $region60: #{tpu_custom_call.1} parent=1 // pred_region
      %108 = dma.done [#allocation6], 64
    $region61: #{tpu_custom_call.1} parent=1 // pred_fallthru
      _
    // Predicated region
    $region62: #{tpu_custom_call.1} parent=1 // pred_check
      _
    $region63: #{tpu_custom_call.1} parent=1 // pred_check_branch
      %110 = sbr.rel (0) target = $region65
    $region64: #{tpu_custom_call.1} parent=1 // pred_region
      %111 = dma.done [#allocation9], 512
    $region65: #{tpu_custom_call.1} parent=1 // pred_fallthru
      _
    // Predicated region
    $region66: #{tpu_custom_call.1} parent=1 // pred_check
      _
    $region67: #{tpu_custom_call.1} parent=1 // pred_check_branch
      %113 = sbr.rel (0) target = $region69
    $region68: #{tpu_custom_call.1} parent=1 // pred_region
      %114 = dma.done [#allocation9], 16
    $region69: #{tpu_custom_call.1} parent=1 // pred_fallthru
      _
    // Predicated region
    $region70: #{tpu_custom_call.1} parent=1 // pred_check
      _
    $region71: #{tpu_custom_call.1} parent=1 // pred_check_branch
      %116 = sbr.rel (0) target = $region73
    $region72: #{tpu_custom_call.1} parent=1 // pred_region
      %117 = dma.done [#allocation12], 512
    $region73: #{tpu_custom_call.1} parent=1 // pred_fallthru
      _
    %v118 = vld [vmem:[%s0] sm:$0xff]
    %v119 = vld [vmem:[%s0 + $0x8] sm:$0xff]
    %v120 = vld [vmem:[#allocation2] sm:$0xff]
    %v121 = vld [vmem:[#allocation7] sm:$0xf]
    %v122 = vld [vmem:[%s5] sm:$0x1]
    %v124 = vlaneseq
    %v125 = vshrl.u32 %v124, 7
    %v126 = vsub.s32 0, %v125
    %v127 = vrot.slane %v122, %v126
    %vm129 = vcmask 31744
    %v131 = vsel %vm129, %v118, 0
    %v134 = vsel %vm129, %v119, 0
    %vm136 = vcmask 1043456
    %v138 = vsel %vm136, %v121, 0
    %140 = vmatprep.subr.mxu0 0.0
    %141 = vmatpush1.msra.mxu0 0.0
    %142 = vmatprep.subr.mxu0 0.0
    %143 = vmatpush1.msra.mxu0 0.0
    %144 = vmatprep.subr.mxu0 0.0
    %145 = vmatpush1.msra.mxu0 0.0
    %146 = vmatprep.subr.mxu0 0.0
    %147 = vmatpush1.msra.mxu0 0.0
    %148 = vmatprep.subr.mxu0 0.0
    %149 = vmatpush1.msra.mxu0 0.0
    %150 = vmatprep.subr.mxu0 0.0
    %151 = vmatpush1.msra.mxu0 0.0
    %152 = vmatprep.subr.mxu0 0.0
    %153 = vmatpush1.msra.mxu0 0.0
    %154 = vmatprep.subr.mxu0 0.0
    %155 = vmatpush1.msra.mxu0 0.0
    %156 = vmatprep.subr.mxu0 0.0
    %157 = vmatpush1.msra.mxu0 0.0
    %158 = vmatprep.subr.mxu0 0.0
    %159 = vmatpush1.msra.mxu0 0.0
    %160 = vmatprep.subr.mxu0 0.0
    %161 = vmatpush1.msra.mxu0 0.0
    %162 = vmatprep.subr.mxu0 0.0
    %163 = vmatpush1.msra.mxu0 0.0
    %164 = vmatprep.subr.mxu0 0.0
    %165 = vmatpush1.msra.mxu0 0.0
    %166 = vmatprep.subr.mxu0 0.0
    %167 = vmatpush1.msra.mxu0 0.0
    %168 = vmatprep.subr.mxu0 0.0
    %169 = vmatpush1.msra.mxu0 0.0
    %170 = vmatprep.subr.mxu0 0.0
    %171 = vmatpush1.msra.mxu0 %v138
    %172 = vmatprep.subr.mxu0 0.0
    %173 = vmatpush2.msra.mxu0 0.0
    %174 = vmatprep.subr.mxu0 0.0
    %175 = vmatpush2.msra.mxu0 0.0
    %176 = vmatprep.subr.mxu0 0.0
    %177 = vmatpush2.msra.mxu0 0.0
    %178 = vmatprep.subr.mxu0 0.0
    %179 = vmatpush2.msra.mxu0 0.0
    %180 = vmatprep.subr.mxu0 0.0
    %181 = vmatpush2.msra.mxu0 0.0
    %182 = vmatprep.subr.mxu0 0.0
    %183 = vmatpush2.msra.mxu0 0.0
    %184 = vmatprep.subr.mxu0 0.0
    %185 = vmatpush2.msra.mxu0 0.0
    %186 = vmatprep.subr.mxu0 0.0
    %187 = vmatpush2.msra.mxu0 0.0
    %188 = vmatprep.subr.mxu0 0.0
    %189 = vmatpush2.msra.mxu0 0.0
    %190 = vmatprep.subr.mxu0 0.0
    %191 = vmatpush2.msra.mxu0 0.0
    %192 = vmatprep.subr.mxu0 0.0
    %193 = vmatpush2.msra.mxu0 0.0
    %194 = vmatprep.subr.mxu0 0.0
    %195 = vmatpush2.msra.mxu0 0.0
    %196 = vmatprep.subr.mxu0 0.0
    %197 = vmatpush2.msra.mxu0 0.0
    %198 = vmatprep.subr.mxu0 0.0
    %199 = vmatpush2.msra.mxu0 0.0
    %200 = vmatprep.subr.mxu0 0.0
    %201 = vmatpush2.msra.mxu0 0.0
    %202 = vmatprep.subr.mxu0 0.0
    %203 = vmatpush2.msra.mxu0 0.0
    %204 = vmatprep.mubr.f32.mxu0 0.0
    %205 = vmatmul.mubr.f32.gmra.mxu0 %v131
    %v206 = vpop.f32.mrf.mxu0
    %v207 = vadd.f32 %v127, %v206
    %v208 = vpop.f32.mrf.mxu0
    %209 = vmatprep.mubr.f32.mxu0 0.0
    %210 = vmatmul.mubr.f32.gmra.mxu0 %v134
    %v211 = vpop.f32.mrf.mxu0
    %v212 = vadd.f32 %v127, %v211
    %v213 = vpop.f32.mrf.mxu0
    %214 = vdwg.mxu0
    %v215 = vld [vmem:[#allocation5] sm:$0xff]
    %v216 = vld [vmem:[#allocation5 + $0x8] sm:$0xff]
    %v217 = vld [vmem:[#allocation5 + $0x10] sm:$0xff]
    %v218 = vld [vmem:[#allocation5 + $0x18] sm:$0xff]
    %v219 = vld [vmem:[%s3] sm:$0x1]
    %v221 = vlaneseq
    %v222 = vshrl.u32 %v221, 7
    %v223 = vsub.s32 0, %v222
    %v224 = vrot.slane %v219, %v223
    %vm226 = vcmask 261120
    %v228 = vsel %vm226, %v120, 0
    %230 = vmatprep.subr.mxu0 0.0
    %231 = vmatpush1.msra.mxu0 0.0
    %232 = vmatprep.subr.mxu0 0.0
    %233 = vmatpush1.msra.mxu0 0.0
    %234 = vmatprep.subr.mxu0 0.0
    %235 = vmatpush1.msra.mxu0 0.0
    %236 = vmatprep.subr.mxu0 0.0
    %237 = vmatpush1.msra.mxu0 0.0
    %238 = vmatprep.subr.mxu0 0.0
    %239 = vmatpush1.msra.mxu0 0.0
    %240 = vmatprep.subr.mxu0 0.0
    %241 = vmatpush1.msra.mxu0 0.0
    %242 = vmatprep.subr.mxu0 0.0
    %243 = vmatpush1.msra.mxu0 0.0
    %244 = vmatprep.subr.mxu0 0.0
    %245 = vmatpush1.msra.mxu0 0.0
    %246 = vmatprep.subr.mxu0 0.0
    %247 = vmatpush1.msra.mxu0 0.0
    %248 = vmatprep.subr.mxu0 0.0
    %249 = vmatpush1.msra.mxu0 0.0
    %250 = vmatprep.subr.mxu0 0.0
    %251 = vmatpush1.msra.mxu0 0.0
    %252 = vmatprep.subr.mxu0 0.0
    %253 = vmatpush1.msra.mxu0 0.0
    %254 = vmatprep.subr.mxu0 0.0
    %255 = vmatpush1.msra.mxu0 %v218
    %256 = vmatprep.subr.mxu0 0.0
    %257 = vmatpush1.msra.mxu0 %v217
    %258 = vmatprep.subr.mxu0 0.0
    %259 = vmatpush1.msra.mxu0 %v216
    %260 = vmatprep.subr.mxu0 0.0
    %261 = vmatpush1.msra.mxu0 %v215
    %262 = vmatprep.subr.mxu0 0.0
    %263 = vmatpush2.msra.mxu0 0.0
    %264 = vmatprep.subr.mxu0 0.0
    %265 = vmatpush2.msra.mxu0 0.0
    %266 = vmatprep.subr.mxu0 0.0
    %267 = vmatpush2.msra.mxu0 0.0
    %268 = vmatprep.subr.mxu0 0.0
    %269 = vmatpush2.msra.mxu0 0.0
    %270 = vmatprep.subr.mxu0 0.0
    %271 = vmatpush2.msra.mxu0 0.0
    %272 = vmatprep.subr.mxu0 0.0
    %273 = vmatpush2.msra.mxu0 0.0
    %274 = vmatprep.subr.mxu0 0.0
    %275 = vmatpush2.msra.mxu0 0.0
    %276 = vmatprep.subr.mxu0 0.0
    %277 = vmatpush2.msra.mxu0 0.0
    %278 = vmatprep.subr.mxu0 0.0
    %279 = vmatpush2.msra.mxu0 0.0
    %280 = vmatprep.subr.mxu0 0.0
    %281 = vmatpush2.msra.mxu0 0.0
    %282 = vmatprep.subr.mxu0 0.0
    %283 = vmatpush2.msra.mxu0 0.0
    %284 = vmatprep.subr.mxu0 0.0
    %285 = vmatpush2.msra.mxu0 0.0
    %286 = vmatprep.subr.mxu0 0.0
    %287 = vmatpush2.msra.mxu0 0.0
    %288 = vmatprep.subr.mxu0 0.0
    %289 = vmatpush2.msra.mxu0 0.0
    %290 = vmatprep.subr.mxu0 0.0
    %291 = vmatpush2.msra.mxu0 0.0
    %292 = vmatprep.subr.mxu0 0.0
    %293 = vmatpush2.msra.mxu0 0.0
    %294 = vmatprep.mubr.f32.mxu0 0.0
    %295 = vmatmul.mubr.f32.gmra.mxu0 %v228
    %v296 = vpop.f32.mrf.mxu0
    %v297 = vadd.f32 %v224, %v296
    %v298 = vpop.f32.mrf.mxu0
    %299 = vdwg.mxu0
    %v300 = vmul.f32 %v297, 0.17677669
    %vm301 = vcmask 64512
    %v303 = vsel %vm301, %v300, 0
    %v306 = vsel %vm301, %v207, 0
    %308 = vmatprep.subr.mxu0 0.0
    %309 = vmatpush1.xpose.msra.mxu0 0.0
    %310 = vmatprep.subr.mxu0 0.0
    %311 = vmatpush1.xpose.msra.mxu0 0.0
    %312 = vmatprep.subr.mxu0 0.0
    %313 = vmatpush1.xpose.msra.mxu0 0.0
    %314 = vmatprep.subr.mxu0 0.0
    %315 = vmatpush1.xpose.msra.mxu0 0.0
    %316 = vmatprep.subr.mxu0 0.0
    %317 = vmatpush1.xpose.msra.mxu0 0.0
    %318 = vmatprep.subr.mxu0 0.0
    %319 = vmatpush1.xpose.msra.mxu0 0.0
    %320 = vmatprep.subr.mxu0 0.0
    %321 = vmatpush1.xpose.msra.mxu0 0.0
    %322 = vmatprep.subr.mxu0 0.0
    %323 = vmatpush1.xpose.msra.mxu0 0.0
    %324 = vmatprep.subr.mxu0 0.0
    %325 = vmatpush1.xpose.msra.mxu0 0.0
    %326 = vmatprep.subr.mxu0 0.0
    %327 = vmatpush1.xpose.msra.mxu0 0.0
    %328 = vmatprep.subr.mxu0 0.0
    %329 = vmatpush1.xpose.msra.mxu0 0.0
    %330 = vmatprep.subr.mxu0 0.0
    %331 = vmatpush1.xpose.msra.mxu0 0.0
    %332 = vmatprep.subr.mxu0 0.0
    %333 = vmatpush1.xpose.msra.mxu0 0.0
    %334 = vmatprep.subr.mxu0 0.0
    %335 = vmatpush1.xpose.msra.mxu0 0.0
    %336 = vmatprep.subr.mxu0 0.0
    %337 = vmatpush1.xpose.msra.mxu0 0.0
    %338 = vmatprep.subr.mxu0 0.0
    %339 = vmatpush1.xpose.msra.mxu0 %v306
    %340 = vmatprep.subr.mxu0 0.0
    %341 = vmatpush2.xpose.msra.mxu0 0.0
    %342 = vmatprep.subr.mxu0 0.0
    %343 = vmatpush2.xpose.msra.mxu0 0.0
    %344 = vmatprep.subr.mxu0 0.0
    %345 = vmatpush2.xpose.msra.mxu0 0.0
    %346 = vmatprep.subr.mxu0 0.0
    %347 = vmatpush2.xpose.msra.mxu0 0.0
    %348 = vmatprep.subr.mxu0 0.0
    %349 = vmatpush2.xpose.msra.mxu0 0.0
    %350 = vmatprep.subr.mxu0 0.0
    %351 = vmatpush2.xpose.msra.mxu0 0.0
    %352 = vmatprep.subr.mxu0 0.0
    %353 = vmatpush2.xpose.msra.mxu0 0.0
    %354 = vmatprep.subr.mxu0 0.0
    %355 = vmatpush2.xpose.msra.mxu0 0.0
    %356 = vmatprep.subr.mxu0 0.0
    %357 = vmatpush2.xpose.msra.mxu0 0.0
    %358 = vmatprep.subr.mxu0 0.0
    %359 = vmatpush2.xpose.msra.mxu0 0.0
    %360 = vmatprep.subr.mxu0 0.0
    %361 = vmatpush2.xpose.msra.mxu0 0.0
    %362 = vmatprep.subr.mxu0 0.0
    %363 = vmatpush2.xpose.msra.mxu0 0.0
    %364 = vmatprep.subr.mxu0 0.0
    %365 = vmatpush2.xpose.msra.mxu0 0.0
    %366 = vmatprep.subr.mxu0 0.0
    %367 = vmatpush2.xpose.msra.mxu0 0.0
    %368 = vmatprep.subr.mxu0 0.0
    %369 = vmatpush2.xpose.msra.mxu0 0.0
    %370 = vmatprep.subr.mxu0 0.0
    %371 = vmatpush2.xpose.msra.mxu0 0.0
    %372 = vmatprep.mubr.f32.mxu0 0.0
    %373 = vmatmul.mubr.f32.gmra.mxu0 %v303
    %v374 = vpop.f32.mrf.mxu0
    %v375 = vadd.f32 0.0, %v374
    %v376 = vpop.f32.mrf.mxu0
    %377 = vdwg.mxu0
    %v379 = vsel %vm301, %v212, 0
    %381 = vmatprep.subr.mxu0 0.0
    %382 = vmatpush1.xpose.msra.mxu0 0.0
    %383 = vmatprep.subr.mxu0 0.0
    %384 = vmatpush1.xpose.msra.mxu0 0.0
    %385 = vmatprep.subr.mxu0 0.0
    %386 = vmatpush1.xpose.msra.mxu0 0.0
    %387 = vmatprep.subr.mxu0 0.0
    %388 = vmatpush1.xpose.msra.mxu0 0.0
    %389 = vmatprep.subr.mxu0 0.0
    %390 = vmatpush1.xpose.msra.mxu0 0.0
    %391 = vmatprep.subr.mxu0 0.0
    %392 = vmatpush1.xpose.msra.mxu0 0.0
    %393 = vmatprep.subr.mxu0 0.0
    %394 = vmatpush1.xpose.msra.mxu0 0.0
    %395 = vmatprep.subr.mxu0 0.0
    %396 = vmatpush1.xpose.msra.mxu0 0.0
    %397 = vmatprep.subr.mxu0 0.0
    %398 = vmatpush1.xpose.msra.mxu0 0.0
    %399 = vmatprep.subr.mxu0 0.0
    %400 = vmatpush1.xpose.msra.mxu0 0.0
    %401 = vmatprep.subr.mxu0 0.0
    %402 = vmatpush1.xpose.msra.mxu0 0.0
    %403 = vmatprep.subr.mxu0 0.0
    %404 = vmatpush1.xpose.msra.mxu0 0.0
    %405 = vmatprep.subr.mxu0 0.0
    %406 = vmatpush1.xpose.msra.mxu0 0.0
    %407 = vmatprep.subr.mxu0 0.0
    %408 = vmatpush1.xpose.msra.mxu0 0.0
    %409 = vmatprep.subr.mxu0 0.0
    %410 = vmatpush1.xpose.msra.mxu0 0.0
    %411 = vmatprep.subr.mxu0 0.0
    %412 = vmatpush1.xpose.msra.mxu0 %v379
    %413 = vmatprep.subr.mxu0 0.0
    %414 = vmatpush2.xpose.msra.mxu0 0.0
    %415 = vmatprep.subr.mxu0 0.0
    %416 = vmatpush2.xpose.msra.mxu0 0.0
    %417 = vmatprep.subr.mxu0 0.0
    %418 = vmatpush2.xpose.msra.mxu0 0.0
    %419 = vmatprep.subr.mxu0 0.0
    %420 = vmatpush2.xpose.msra.mxu0 0.0
    %421 = vmatprep.subr.mxu0 0.0
    %422 = vmatpush2.xpose.msra.mxu0 0.0
    %423 = vmatprep.subr.mxu0 0.0
    %424 = vmatpush2.xpose.msra.mxu0 0.0
    %425 = vmatprep.subr.mxu0 0.0
    %426 = vmatpush2.xpose.msra.mxu0 0.0
    %427 = vmatprep.subr.mxu0 0.0
    %428 = vmatpush2.xpose.msra.mxu0 0.0
    %429 = vmatprep.subr.mxu0 0.0
    %430 = vmatpush2.xpose.msra.mxu0 0.0
    %431 = vmatprep.subr.mxu0 0.0
    %432 = vmatpush2.xpose.msra.mxu0 0.0
    %433 = vmatprep.subr.mxu0 0.0
    %434 = vmatpush2.xpose.msra.mxu0 0.0
    %435 = vmatprep.subr.mxu0 0.0
    %436 = vmatpush2.xpose.msra.mxu0 0.0
    %437 = vmatprep.subr.mxu0 0.0
    %438 = vmatpush2.xpose.msra.mxu0 0.0
    %439 = vmatprep.subr.mxu0 0.0
    %440 = vmatpush2.xpose.msra.mxu0 0.0
    %441 = vmatprep.subr.mxu0 0.0
    %442 = vmatpush2.xpose.msra.mxu0 0.0
    %443 = vmatprep.subr.mxu0 0.0
    %444 = vmatpush2.xpose.msra.mxu0 0.0
    %445 = vmatprep.mubr.f32.mxu0 0.0
    %446 = vmatmul.mubr.f32.gmra.mxu0 %v303
    %v447 = vpop.f32.mrf.mxu0
    %v448 = vadd.f32 0.0, %v447
    %v449 = vpop.f32.mrf.mxu0
    %450 = vdwg.mxu0
    %v451 = vsel %vm301, %v375, -inf
    %452 = vmax.xlane.f32.xlu0 %v451
    %v453 = vpop.xlane.xlu0 %452
    %v454 = vsel %vm301, %v448, -inf
    %455 = vmax.xlane.f32.xlu0 %v454
    %v456 = vpop.xlane.xlu0 %455
    %v457 = vsub.f32 %v375, %v453
    %v458 = vsub.f32 %v448, %v456
    %v459 = vmul.f32 %v457, 1.442695
    %v460 = vpow.pop %v459
    %v461 = vmul.f32 %v458, 1.442695
    %v462 = vpow.pop %v461
    %v463 = vsel %vm301, %v460, 0.0
    %464 = vadd.xlane.f32.xlu0 %v463
    %v465 = vpop.xlane.xlu0 %464
    %v466 = vsel %vm301, %v462, 0.0
    %467 = vadd.xlane.f32.xlu0 %v466
    %v468 = vpop.xlane.xlu0 %467
    %v469 = vrcp.pop %v465
    %v470 = vrcp.pop %v468
    %v471 = vmul.f32 %v460, %v469
    %v472 = vmul.f32 %v462, %v470
    %473 = vrot.lane.b32.xlu0 %v207, 96
    %v474 = vpop.permute.xlu0 %473
    %v477 = vsel %vm301, %v471, 0
    %479 = vmatprep.subr.mxu0 0.0
    %480 = vmatpush1.msra.mxu0 0.0
    %481 = vmatprep.subr.mxu0 0.0
    %482 = vmatpush1.msra.mxu0 0.0
    %483 = vmatprep.subr.mxu0 0.0
    %484 = vmatpush1.msra.mxu0 0.0
    %485 = vmatprep.subr.mxu0 0.0
    %486 = vmatpush1.msra.mxu0 0.0
    %487 = vmatprep.subr.mxu0 0.0
    %488 = vmatpush1.msra.mxu0 0.0
    %489 = vmatprep.subr.mxu0 0.0
    %490 = vmatpush1.msra.mxu0 0.0
    %491 = vmatprep.subr.mxu0 0.0
    %492 = vmatpush1.msra.mxu0 0.0
    %493 = vmatprep.subr.mxu0 0.0
    %494 = vmatpush1.msra.mxu0 0.0
    %495 = vmatprep.subr.mxu0 0.0
    %496 = vmatpush1.msra.mxu0 0.0
    %497 = vmatprep.subr.mxu0 0.0
    %498 = vmatpush1.msra.mxu0 0.0
    %499 = vmatprep.subr.mxu0 0.0
    %500 = vmatpush1.msra.mxu0 0.0
    %501 = vmatprep.subr.mxu0 0.0
    %502 = vmatpush1.msra.mxu0 0.0
    %503 = vmatprep.subr.mxu0 0.0
    %504 = vmatpush1.msra.mxu0 0.0
    %505 = vmatprep.subr.mxu0 0.0
    %506 = vmatpush1.msra.mxu0 0.0
    %507 = vmatprep.subr.mxu0 0.0
    %508 = vmatpush1.msra.mxu0 0.0
    %509 = vmatprep.subr.mxu0 0.0
    %510 = vmatpush1.msra.mxu0 %v474
    %511 = vmatprep.subr.mxu0 0.0
    %512 = vmatpush2.msra.mxu0 0.0
    %513 = vmatprep.subr.mxu0 0.0
    %514 = vmatpush2.msra.mxu0 0.0
    %515 = vmatprep.subr.mxu0 0.0
    %516 = vmatpush2.msra.mxu0 0.0
    %517 = vmatprep.subr.mxu0 0.0
    %518 = vmatpush2.msra.mxu0 0.0
    %519 = vmatprep.subr.mxu0 0.0
    %520 = vmatpush2.msra.mxu0 0.0
    %521 = vmatprep.subr.mxu0 0.0
    %522 = vmatpush2.msra.mxu0 0.0
    %523 = vmatprep.subr.mxu0 0.0
    %524 = vmatpush2.msra.mxu0 0.0
    %525 = vmatprep.subr.mxu0 0.0
    %526 = vmatpush2.msra.mxu0 0.0
    %527 = vmatprep.subr.mxu0 0.0
    %528 = vmatpush2.msra.mxu0 0.0
    %529 = vmatprep.subr.mxu0 0.0
    %530 = vmatpush2.msra.mxu0 0.0
    %531 = vmatprep.subr.mxu0 0.0
    %532 = vmatpush2.msra.mxu0 0.0
    %533 = vmatprep.subr.mxu0 0.0
    %534 = vmatpush2.msra.mxu0 0.0
    %535 = vmatprep.subr.mxu0 0.0
    %536 = vmatpush2.msra.mxu0 0.0
    %537 = vmatprep.subr.mxu0 0.0
    %538 = vmatpush2.msra.mxu0 0.0
    %539 = vmatprep.subr.mxu0 0.0
    %540 = vmatpush2.msra.mxu0 0.0
    %541 = vmatprep.subr.mxu0 0.0
    %542 = vmatpush2.msra.mxu0 0.0
    %543 = vmatprep.mubr.f32.mxu0 0.0
    %544 = vmatmul.mubr.f32.gmra.mxu0 %v477
    %v545 = vpop.f32.mrf.mxu0
    %v546 = vadd.f32 0.0, %v545
    %v547 = vpop.f32.mrf.mxu0
    %548 = vdwg.mxu0
    %549 = vrot.lane.b32.xlu0 %v212, 96
    %v550 = vpop.permute.xlu0 %549
    %v553 = vsel %vm301, %v472, 0
    %555 = vmatprep.subr.mxu0 0.0
    %556 = vmatpush1.msra.mxu0 0.0
    %557 = vmatprep.subr.mxu0 0.0
    %558 = vmatpush1.msra.mxu0 0.0
    %559 = vmatprep.subr.mxu0 0.0
    %560 = vmatpush1.msra.mxu0 0.0
    %561 = vmatprep.subr.mxu0 0.0
    %562 = vmatpush1.msra.mxu0 0.0
    %563 = vmatprep.subr.mxu0 0.0
    %564 = vmatpush1.msra.mxu0 0.0
    %565 = vmatprep.subr.mxu0 0.0
    %566 = vmatpush1.msra.mxu0 0.0
    %567 = vmatprep.subr.mxu0 0.0
    %568 = vmatpush1.msra.mxu0 0.0
    %569 = vmatprep.subr.mxu0 0.0
    %570 = vmatpush1.msra.mxu0 0.0
    %571 = vmatprep.subr.mxu0 0.0
    %572 = vmatpush1.msra.mxu0 0.0
    %573 = vmatprep.subr.mxu0 0.0
    %574 = vmatpush1.msra.mxu0 0.0
    %575 = vmatprep.subr.mxu0 0.0
    %576 = vmatpush1.msra.mxu0 0.0
    %577 = vmatprep.subr.mxu0 0.0
    %578 = vmatpush1.msra.mxu0 0.0
    %579 = vmatprep.subr.mxu0 0.0
    %580 = vmatpush1.msra.mxu0 0.0
    %581 = vmatprep.subr.mxu0 0.0
    %582 = vmatpush1.msra.mxu0 0.0
    %583 = vmatprep.subr.mxu0 0.0
    %584 = vmatpush1.msra.mxu0 0.0
    %585 = vmatprep.subr.mxu0 0.0
    %586 = vmatpush1.msra.mxu0 %v550
    %587 = vmatprep.subr.mxu0 0.0
    %588 = vmatpush2.msra.mxu0 0.0
    %589 = vmatprep.subr.mxu0 0.0
    %590 = vmatpush2.msra.mxu0 0.0
    %591 = vmatprep.subr.mxu0 0.0
    %592 = vmatpush2.msra.mxu0 0.0
    %593 = vmatprep.subr.mxu0 0.0
    %594 = vmatpush2.msra.mxu0 0.0
    %595 = vmatprep.subr.mxu0 0.0
    %596 = vmatpush2.msra.mxu0 0.0
    %597 = vmatprep.subr.mxu0 0.0
    %598 = vmatpush2.msra.mxu0 0.0
    %599 = vmatprep.subr.mxu0 0.0
    %600 = vmatpush2.msra.mxu0 0.0
    %601 = vmatprep.subr.mxu0 0.0
    %602 = vmatpush2.msra.mxu0 0.0
    %603 = vmatprep.subr.mxu0 0.0
    %604 = vmatpush2.msra.mxu0 0.0
    %605 = vmatprep.subr.mxu0 0.0
    %606 = vmatpush2.msra.mxu0 0.0
    %607 = vmatprep.subr.mxu0 0.0
    %608 = vmatpush2.msra.mxu0 0.0
    %609 = vmatprep.subr.mxu0 0.0
    %610 = vmatpush2.msra.mxu0 0.0
    %611 = vmatprep.subr.mxu0 0.0
    %612 = vmatpush2.msra.mxu0 0.0
    %613 = vmatprep.subr.mxu0 0.0
    %614 = vmatpush2.msra.mxu0 0.0
    %615 = vmatprep.subr.mxu0 0.0
    %616 = vmatpush2.msra.mxu0 0.0
    %617 = vmatprep.subr.mxu0 0.0
    %618 = vmatpush2.msra.mxu0 0.0
    %619 = vmatprep.mubr.f32.mxu0 0.0
    %620 = vmatmul.mubr.f32.gmra.mxu0 %v553
    %v621 = vpop.f32.mrf.mxu0
    %v622 = vadd.f32 0.0, %v621
    %v623 = vpop.f32.mrf.mxu0
    %624 = vdwg.mxu0
    %v625 = vadd.f32 %v297, %v546
    %v626 = vadd.f32 %v297, %v622
    %627 = vrot.lane.b32.xlu0 %v300, 120
    %v628 = vpop.permute.xlu0 %627
    %629 = vrot.lane.b32.xlu0 %v207, 120
    %v630 = vpop.permute.xlu0 %629
    %v631 = vsel %vm301, %v628, 0
    %v633 = vsel %vm301, %v630, 0
    %635 = vmatprep.subr.mxu0 0.0
    %636 = vmatpush1.xpose.msra.mxu0 0.0
    %637 = vmatprep.subr.mxu0 0.0
    %638 = vmatpush1.xpose.msra.mxu0 0.0
    %639 = vmatprep.subr.mxu0 0.0
    %640 = vmatpush1.xpose.msra.mxu0 0.0
    %641 = vmatprep.subr.mxu0 0.0
    %642 = vmatpush1.xpose.msra.mxu0 0.0
    %643 = vmatprep.subr.mxu0 0.0
    %644 = vmatpush1.xpose.msra.mxu0 0.0
    %645 = vmatprep.subr.mxu0 0.0
    %646 = vmatpush1.xpose.msra.mxu0 0.0
    %647 = vmatprep.subr.mxu0 0.0
    %648 = vmatpush1.xpose.msra.mxu0 0.0
    %649 = vmatprep.subr.mxu0 0.0
    %650 = vmatpush1.xpose.msra.mxu0 0.0
    %651 = vmatprep.subr.mxu0 0.0
    %652 = vmatpush1.xpose.msra.mxu0 0.0
    %653 = vmatprep.subr.mxu0 0.0
    %654 = vmatpush1.xpose.msra.mxu0 0.0
    %655 = vmatprep.subr.mxu0 0.0
    %656 = vmatpush1.xpose.msra.mxu0 0.0
    %657 = vmatprep.subr.mxu0 0.0
    %658 = vmatpush1.xpose.msra.mxu0 0.0
    %659 = vmatprep.subr.mxu0 0.0
    %660 = vmatpush1.xpose.msra.mxu0 0.0
    %661 = vmatprep.subr.mxu0 0.0
    %662 = vmatpush1.xpose.msra.mxu0 0.0
    %663 = vmatprep.subr.mxu0 0.0
    %664 = vmatpush1.xpose.msra.mxu0 0.0
    %665 = vmatprep.subr.mxu0 0.0
    %666 = vmatpush1.xpose.msra.mxu0 %v633
    %667 = vmatprep.subr.mxu0 0.0
    %668 = vmatpush2.xpose.msra.mxu0 0.0
    %669 = vmatprep.subr.mxu0 0.0
    %670 = vmatpush2.xpose.msra.mxu0 0.0
    %671 = vmatprep.subr.mxu0 0.0
    %672 = vmatpush2.xpose.msra.mxu0 0.0
    %673 = vmatprep.subr.mxu0 0.0
    %674 = vmatpush2.xpose.msra.mxu0 0.0
    %675 = vmatprep.subr.mxu0 0.0
    %676 = vmatpush2.xpose.msra.mxu0 0.0
    %677 = vmatprep.subr.mxu0 0.0
    %678 = vmatpush2.xpose.msra.mxu0 0.0
    %679 = vmatprep.subr.mxu0 0.0
    %680 = vmatpush2.xpose.msra.mxu0 0.0
    %681 = vmatprep.subr.mxu0 0.0
    %682 = vmatpush2.xpose.msra.mxu0 0.0
    %683 = vmatprep.subr.mxu0 0.0
    %684 = vmatpush2.xpose.msra.mxu0 0.0
    %685 = vmatprep.subr.mxu0 0.0
    %686 = vmatpush2.xpose.msra.mxu0 0.0
    %687 = vmatprep.subr.mxu0 0.0
    %688 = vmatpush2.xpose.msra.mxu0 0.0
    %689 = vmatprep.subr.mxu0 0.0
    %690 = vmatpush2.xpose.msra.mxu0 0.0
    %691 = vmatprep.subr.mxu0 0.0
    %692 = vmatpush2.xpose.msra.mxu0 0.0
    %693 = vmatprep.subr.mxu0 0.0
    %694 = vmatpush2.xpose.msra.mxu0 0.0
    %695 = vmatprep.subr.mxu0 0.0
    %696 = vmatpush2.xpose.msra.mxu0 0.0
    %697 = vmatprep.subr.mxu0 0.0
    %698 = vmatpush2.xpose.msra.mxu0 0.0
    %699 = vmatprep.mubr.f32.mxu0 0.0
    %700 = vmatmul.mubr.f32.gmra.mxu0 %v631
    %v701 = vpop.f32.mrf.mxu0
    %v702 = vadd.f32 0.0, %v701
    %v703 = vpop.f32.mrf.mxu0
    %704 = vdwg.mxu0
    %705 = vrot.lane.b32.xlu0 %v212, 120
    %v706 = vpop.permute.xlu0 %705
    %v707 = vsel %vm301, %v706, 0
    %709 = vmatprep.subr.mxu0 0.0
    %710 = vmatpush1.xpose.msra.mxu0 0.0
    %711 = vmatprep.subr.mxu0 0.0
    %712 = vmatpush1.xpose.msra.mxu0 0.0
    %713 = vmatprep.subr.mxu0 0.0
    %714 = vmatpush1.xpose.msra.mxu0 0.0
    %715 = vmatprep.subr.mxu0 0.0
    %716 = vmatpush1.xpose.msra.mxu0 0.0
    %717 = vmatprep.subr.mxu0 0.0
    %718 = vmatpush1.xpose.msra.mxu0 0.0
    %719 = vmatprep.subr.mxu0 0.0
    %720 = vmatpush1.xpose.msra.mxu0 0.0
    %721 = vmatprep.subr.mxu0 0.0
    %722 = vmatpush1.xpose.msra.mxu0 0.0
    %723 = vmatprep.subr.mxu0 0.0
    %724 = vmatpush1.xpose.msra.mxu0 0.0
    %725 = vmatprep.subr.mxu0 0.0
    %726 = vmatpush1.xpose.msra.mxu0 0.0
    %727 = vmatprep.subr.mxu0 0.0
    %728 = vmatpush1.xpose.msra.mxu0 0.0
    %729 = vmatprep.subr.mxu0 0.0
    %730 = vmatpush1.xpose.msra.mxu0 0.0
    %731 = vmatprep.subr.mxu0 0.0
    %732 = vmatpush1.xpose.msra.mxu0 0.0
    %733 = vmatprep.subr.mxu0 0.0
    %734 = vmatpush1.xpose.msra.mxu0 0.0
    %735 = vmatprep.subr.mxu0 0.0
    %736 = vmatpush1.xpose.msra.mxu0 0.0
    %737 = vmatprep.subr.mxu0 0.0
    %738 = vmatpush1.xpose.msra.mxu0 0.0
    %739 = vmatprep.subr.mxu0 0.0
    %740 = vmatpush1.xpose.msra.mxu0 %v707
    %741 = vmatprep.subr.mxu0 0.0
    %742 = vmatpush2.xpose.msra.mxu0 0.0
    %743 = vmatprep.subr.mxu0 0.0
    %744 = vmatpush2.xpose.msra.mxu0 0.0
    %745 = vmatprep.subr.mxu0 0.0
    %746 = vmatpush2.xpose.msra.mxu0 0.0
    %747 = vmatprep.subr.mxu0 0.0
    %748 = vmatpush2.xpose.msra.mxu0 0.0
    %749 = vmatprep.subr.mxu0 0.0
    %750 = vmatpush2.xpose.msra.mxu0 0.0
    %751 = vmatprep.subr.mxu0 0.0
    %752 = vmatpush2.xpose.msra.mxu0 0.0
    %753 = vmatprep.subr.mxu0 0.0
    %754 = vmatpush2.xpose.msra.mxu0 0.0
    %755 = vmatprep.subr.mxu0 0.0
    %756 = vmatpush2.xpose.msra.mxu0 0.0
    %757 = vmatprep.subr.mxu0 0.0
    %758 = vmatpush2.xpose.msra.mxu0 0.0
    %759 = vmatprep.subr.mxu0 0.0
    %760 = vmatpush2.xpose.msra.mxu0 0.0
    %761 = vmatprep.subr.mxu0 0.0
    %762 = vmatpush2.xpose.msra.mxu0 0.0
    %763 = vmatprep.subr.mxu0 0.0
    %764 = vmatpush2.xpose.msra.mxu0 0.0
    %765 = vmatprep.subr.mxu0 0.0
    %766 = vmatpush2.xpose.msra.mxu0 0.0
    %767 = vmatprep.subr.mxu0 0.0
    %768 = vmatpush2.xpose.msra.mxu0 0.0
    %769 = vmatprep.subr.mxu0 0.0
    %770 = vmatpush2.xpose.msra.mxu0 0.0
    %771 = vmatprep.subr.mxu0 0.0
    %772 = vmatpush2.xpose.msra.mxu0 0.0
    %773 = vmatprep.mubr.f32.mxu0 0.0
    %774 = vmatmul.mubr.f32.gmra.mxu0 %v631
    %v775 = vpop.f32.mrf.mxu0
    %v776 = vadd.f32 0.0, %v775
    %v777 = vpop.f32.mrf.mxu0
    %778 = vdwg.mxu0
    %v779 = vsel %vm301, %v702, -inf
    %780 = vmax.xlane.f32.xlu0 %v779
    %v781 = vpop.xlane.xlu0 %780
    %v782 = vsel %vm301, %v776, -inf
    %783 = vmax.xlane.f32.xlu0 %v782
    %v784 = vpop.xlane.xlu0 %783
    %v785 = vsub.f32 %v702, %v781
    %v786 = vsub.f32 %v776, %v784
    %v787 = vmul.f32 %v785, 1.442695
    %v788 = vpow.pop %v787
    %v789 = vmul.f32 %v786, 1.442695
    %v790 = vpow.pop %v789
    %v791 = vsel %vm301, %v788, 0.0
    %792 = vadd.xlane.f32.xlu0 %v791
    %v793 = vpop.xlane.xlu0 %792
    %v794 = vsel %vm301, %v790, 0.0
    %795 = vadd.xlane.f32.xlu0 %v794
    %v796 = vpop.xlane.xlu0 %795
    %v797 = vrcp.pop %v793
    %v798 = vrcp.pop %v796
    %v799 = vmul.f32 %v788, %v797
    %v800 = vmul.f32 %v790, %v798
    %801 = vrot.lane.b32.xlu0 %v207, 88
    %v802 = vpop.permute.xlu0 %801
    %v805 = vsel %vm301, %v799, 0
    %807 = vmatprep.subr.mxu0 0.0
    %808 = vmatpush1.msra.mxu0 0.0
    %809 = vmatprep.subr.mxu0 0.0
    %810 = vmatpush1.msra.mxu0 0.0
    %811 = vmatprep.subr.mxu0 0.0
    %812 = vmatpush1.msra.mxu0 0.0
    %813 = vmatprep.subr.mxu0 0.0
    %814 = vmatpush1.msra.mxu0 0.0
    %815 = vmatprep.subr.mxu0 0.0
    %816 = vmatpush1.msra.mxu0 0.0
    %817 = vmatprep.subr.mxu0 0.0
    %818 = vmatpush1.msra.mxu0 0.0
    %819 = vmatprep.subr.mxu0 0.0
    %820 = vmatpush1.msra.mxu0 0.0
    %821 = vmatprep.subr.mxu0 0.0
    %822 = vmatpush1.msra.mxu0 0.0
    %823 = vmatprep.subr.mxu0 0.0
    %824 = vmatpush1.msra.mxu0 0.0
    %825 = vmatprep.subr.mxu0 0.0
    %826 = vmatpush1.msra.mxu0 0.0
    %827 = vmatprep.subr.mxu0 0.0
    %828 = vmatpush1.msra.mxu0 0.0
    %829 = vmatprep.subr.mxu0 0.0
    %830 = vmatpush1.msra.mxu0 0.0
    %831 = vmatprep.subr.mxu0 0.0
    %832 = vmatpush1.msra.mxu0 0.0
    %833 = vmatprep.subr.mxu0 0.0
    %834 = vmatpush1.msra.mxu0 0.0
    %835 = vmatprep.subr.mxu0 0.0
    %836 = vmatpush1.msra.mxu0 0.0
    %837 = vmatprep.subr.mxu0 0.0
    %838 = vmatpush1.msra.mxu0 %v802
    %839 = vmatprep.subr.mxu0 0.0
    %840 = vmatpush2.msra.mxu0 0.0
    %841 = vmatprep.subr.mxu0 0.0
    %842 = vmatpush2.msra.mxu0 0.0
    %843 = vmatprep.subr.mxu0 0.0
    %844 = vmatpush2.msra.mxu0 0.0
    %845 = vmatprep.subr.mxu0 0.0
    %846 = vmatpush2.msra.mxu0 0.0
    %847 = vmatprep.subr.mxu0 0.0
    %848 = vmatpush2.msra.mxu0 0.0
    %849 = vmatprep.subr.mxu0 0.0
    %850 = vmatpush2.msra.mxu0 0.0
    %851 = vmatprep.subr.mxu0 0.0
    %852 = vmatpush2.msra.mxu0 0.0
    %853 = vmatprep.subr.mxu0 0.0
    %854 = vmatpush2.msra.mxu0 0.0
    %855 = vmatprep.subr.mxu0 0.0
    %856 = vmatpush2.msra.mxu0 0.0
    %857 = vmatprep.subr.mxu0 0.0
    %858 = vmatpush2.msra.mxu0 0.0
    %859 = vmatprep.subr.mxu0 0.0
    %860 = vmatpush2.msra.mxu0 0.0
    %861 = vmatprep.subr.mxu0 0.0
    %862 = vmatpush2.msra.mxu0 0.0
    %863 = vmatprep.subr.mxu0 0.0
    %864 = vmatpush2.msra.mxu0 0.0
    %865 = vmatprep.subr.mxu0 0.0
    %866 = vmatpush2.msra.mxu0 0.0
    %867 = vmatprep.subr.mxu0 0.0
    %868 = vmatpush2.msra.mxu0 0.0
    %869 = vmatprep.subr.mxu0 0.0
    %870 = vmatpush2.msra.mxu0 0.0
    %871 = vmatprep.mubr.f32.mxu0 0.0
    %872 = vmatmul.mubr.f32.gmra.mxu0 %v805
    %v873 = vpop.f32.mrf.mxu0
    %v874 = vadd.f32 0.0, %v873
    %v875 = vpop.f32.mrf.mxu0
    %876 = vdwg.mxu0
    %877 = vrot.lane.b32.xlu0 %v212, 88
    %v878 = vpop.permute.xlu0 %877
    %v881 = vsel %vm301, %v800, 0
    %883 = vmatprep.subr.mxu0 0.0
    %884 = vmatpush1.msra.mxu0 0.0
    %885 = vmatprep.subr.mxu0 0.0
    %886 = vmatpush1.msra.mxu0 0.0
    %887 = vmatprep.subr.mxu0 0.0
    %888 = vmatpush1.msra.mxu0 0.0
    %889 = vmatprep.subr.mxu0 0.0
    %890 = vmatpush1.msra.mxu0 0.0
    %891 = vmatprep.subr.mxu0 0.0
    %892 = vmatpush1.msra.mxu0 0.0
    %893 = vmatprep.subr.mxu0 0.0
    %894 = vmatpush1.msra.mxu0 0.0
    %895 = vmatprep.subr.mxu0 0.0
    %896 = vmatpush1.msra.mxu0 0.0
    %897 = vmatprep.subr.mxu0 0.0
    %898 = vmatpush1.msra.mxu0 0.0
    %899 = vmatprep.subr.mxu0 0.0
    %900 = vmatpush1.msra.mxu0 0.0
    %901 = vmatprep.subr.mxu0 0.0
    %902 = vmatpush1.msra.mxu0 0.0
    %903 = vmatprep.subr.mxu0 0.0
    %904 = vmatpush1.msra.mxu0 0.0
    %905 = vmatprep.subr.mxu0 0.0
    %906 = vmatpush1.msra.mxu0 0.0
    %907 = vmatprep.subr.mxu0 0.0
    %908 = vmatpush1.msra.mxu0 0.0
    %909 = vmatprep.subr.mxu0 0.0
    %910 = vmatpush1.msra.mxu0 0.0
    %911 = vmatprep.subr.mxu0 0.0
    %912 = vmatpush1.msra.mxu0 0.0
    %913 = vmatprep.subr.mxu0 0.0
    %914 = vmatpush1.msra.mxu0 %v878
    %915 = vmatprep.subr.mxu0 0.0
    %916 = vmatpush2.msra.mxu0 0.0
    %917 = vmatprep.subr.mxu0 0.0
    %918 = vmatpush2.msra.mxu0 0.0
    %919 = vmatprep.subr.mxu0 0.0
    %920 = vmatpush2.msra.mxu0 0.0
    %921 = vmatprep.subr.mxu0 0.0
    %922 = vmatpush2.msra.mxu0 0.0
    %923 = vmatprep.subr.mxu0 0.0
    %924 = vmatpush2.msra.mxu0 0.0
    %925 = vmatprep.subr.mxu0 0.0
    %926 = vmatpush2.msra.mxu0 0.0
    %927 = vmatprep.subr.mxu0 0.0
    %928 = vmatpush2.msra.mxu0 0.0
    %929 = vmatprep.subr.mxu0 0.0
    %930 = vmatpush2.msra.mxu0 0.0
    %931 = vmatprep.subr.mxu0 0.0
    %932 = vmatpush2.msra.mxu0 0.0
    %933 = vmatprep.subr.mxu0 0.0
    %934 = vmatpush2.msra.mxu0 0.0
    %935 = vmatprep.subr.mxu0 0.0
    %936 = vmatpush2.msra.mxu0 0.0
    %937 = vmatprep.subr.mxu0 0.0
    %938 = vmatpush2.msra.mxu0 0.0
    %939 = vmatprep.subr.mxu0 0.0
    %940 = vmatpush2.msra.mxu0 0.0
    %941 = vmatprep.subr.mxu0 0.0
    %942 = vmatpush2.msra.mxu0 0.0
    %943 = vmatprep.subr.mxu0 0.0
    %944 = vmatpush2.msra.mxu0 0.0
    %945 = vmatprep.subr.mxu0 0.0
    %946 = vmatpush2.msra.mxu0 0.0
    %947 = vmatprep.mubr.f32.mxu0 0.0
    %948 = vmatmul.mubr.f32.gmra.mxu0 %v881
    %v949 = vpop.f32.mrf.mxu0
    %v950 = vadd.f32 0.0, %v949
    %v951 = vpop.f32.mrf.mxu0
    %952 = vdwg.mxu0
    %955 = vrot.lane.b32.xlu0 %v874, 8
    %v956 = vpop.permute.xlu0 %955
    %957 = vrot.lane.b32.xlu0 %v950, 8
    %v958 = vpop.permute.xlu0 %957
    %v961 = vadd.f32 %v297, %v956
    %v962 = vadd.f32 %v297, %v958
    %963 = vrot.lane.b32.xlu0 %v300, 112
    %v964 = vpop.permute.xlu0 %963
    %965 = vrot.lane.b32.xlu0 %v207, 112
    %v966 = vpop.permute.xlu0 %965
    %v967 = vsel %vm301, %v964, 0
    %v969 = vsel %vm301, %v966, 0
    %971 = vmatprep.subr.mxu0 0.0
    %972 = vmatpush1.xpose.msra.mxu0 0.0
    %973 = vmatprep.subr.mxu0 0.0
    %974 = vmatpush1.xpose.msra.mxu0 0.0
    %975 = vmatprep.subr.mxu0 0.0
    %976 = vmatpush1.xpose.msra.mxu0 0.0
    %977 = vmatprep.subr.mxu0 0.0
    %978 = vmatpush1.xpose.msra.mxu0 0.0
    %979 = vmatprep.subr.mxu0 0.0
    %980 = vmatpush1.xpose.msra.mxu0 0.0
    %981 = vmatprep.subr.mxu0 0.0
    %982 = vmatpush1.xpose.msra.mxu0 0.0
    %983 = vmatprep.subr.mxu0 0.0
    %984 = vmatpush1.xpose.msra.mxu0 0.0
    %985 = vmatprep.subr.mxu0 0.0
    %986 = vmatpush1.xpose.msra.mxu0 0.0
    %987 = vmatprep.subr.mxu0 0.0
    %988 = vmatpush1.xpose.msra.mxu0 0.0
    %989 = vmatprep.subr.mxu0 0.0
    %990 = vmatpush1.xpose.msra.mxu0 0.0
    %991 = vmatprep.subr.mxu0 0.0
    %992 = vmatpush1.xpose.msra.mxu0 0.0
    %993 = vmatprep.subr.mxu0 0.0
    %994 = vmatpush1.xpose.msra.mxu0 0.0
    %995 = vmatprep.subr.mxu0 0.0
    %996 = vmatpush1.xpose.msra.mxu0 0.0
    %997 = vmatprep.subr.mxu0 0.0
    %998 = vmatpush1.xpose.msra.mxu0 0.0
    %999 = vmatprep.subr.mxu0 0.0
    %1000 = vmatpush1.xpose.msra.mxu0 0.0
    %1001 = vmatprep.subr.mxu0 0.0
    %1002 = vmatpush1.xpose.msra.mxu0 %v969
    %1003 = vmatprep.subr.mxu0 0.0
    %1004 = vmatpush2.xpose.msra.mxu0 0.0
    %1005 = vmatprep.subr.mxu0 0.0
    %1006 = vmatpush2.xpose.msra.mxu0 0.0
    %1007 = vmatprep.subr.mxu0 0.0
    %1008 = vmatpush2.xpose.msra.mxu0 0.0
    %1009 = vmatprep.subr.mxu0 0.0
    %1010 = vmatpush2.xpose.msra.mxu0 0.0
    %1011 = vmatprep.subr.mxu0 0.0
    %1012 = vmatpush2.xpose.msra.mxu0 0.0
    %1013 = vmatprep.subr.mxu0 0.0
    %1014 = vmatpush2.xpose.msra.mxu0 0.0
    %1015 = vmatprep.subr.mxu0 0.0
    %1016 = vmatpush2.xpose.msra.mxu0 0.0
    %1017 = vmatprep.subr.mxu0 0.0
    %1018 = vmatpush2.xpose.msra.mxu0 0.0
    %1019 = vmatprep.subr.mxu0 0.0
    %1020 = vmatpush2.xpose.msra.mxu0 0.0
    %1021 = vmatprep.subr.mxu0 0.0
    %1022 = vmatpush2.xpose.msra.mxu0 0.0
    %1023 = vmatprep.subr.mxu0 0.0
    %1024 = vmatpush2.xpose.msra.mxu0 0.0
    %1025 = vmatprep.subr.mxu0 0.0
    %1026 = vmatpush2.xpose.msra.mxu0 0.0
    %1027 = vmatprep.subr.mxu0 0.0
    %1028 = vmatpush2.xpose.msra.mxu0 0.0
    %1029 = vmatprep.subr.mxu0 0.0
    %1030 = vmatpush2.xpose.msra.mxu0 0.0
    %1031 = vmatprep.subr.mxu0 0.0
    %1032 = vmatpush2.xpose.msra.mxu0 0.0
    %1033 = vmatprep.subr.mxu0 0.0
    %1034 = vmatpush2.xpose.msra.mxu0 0.0
    %1035 = vmatprep.mubr.f32.mxu0 0.0
    %1036 = vmatmul.mubr.f32.gmra.mxu0 %v967
    %v1037 = vpop.f32.mrf.mxu0
    %v1038 = vadd.f32 0.0, %v1037
    %v1039 = vpop.f32.mrf.mxu0
    %1040 = vdwg.mxu0
    %1041 = vrot.lane.b32.xlu0 %v212, 112
    %v1042 = vpop.permute.xlu0 %1041
    %v1043 = vsel %vm301, %v1042, 0
    %1045 = vmatprep.subr.mxu0 0.0
    %1046 = vmatpush1.xpose.msra.mxu0 0.0
    %1047 = vmatprep.subr.mxu0 0.0
    %1048 = vmatpush1.xpose.msra.mxu0 0.0
    %1049 = vmatprep.subr.mxu0 0.0
    %1050 = vmatpush1.xpose.msra.mxu0 0.0
    %1051 = vmatprep.subr.mxu0 0.0
    %1052 = vmatpush1.xpose.msra.mxu0 0.0
    %1053 = vmatprep.subr.mxu0 0.0
    %1054 = vmatpush1.xpose.msra.mxu0 0.0
    %1055 = vmatprep.subr.mxu0 0.0
    %1056 = vmatpush1.xpose.msra.mxu0 0.0
    %1057 = vmatprep.subr.mxu0 0.0
    %1058 = vmatpush1.xpose.msra.mxu0 0.0
    %1059 = vmatprep.subr.mxu0 0.0
    %1060 = vmatpush1.xpose.msra.mxu0 0.0
    %1061 = vmatprep.subr.mxu0 0.0
    %1062 = vmatpush1.xpose.msra.mxu0 0.0
    %1063 = vmatprep.subr.mxu0 0.0
    %1064 = vmatpush1.xpose.msra.mxu0 0.0
    %1065 = vmatprep.subr.mxu0 0.0
    %1066 = vmatpush1.xpose.msra.mxu0 0.0
    %1067 = vmatprep.subr.mxu0 0.0
    %1068 = vmatpush1.xpose.msra.mxu0 0.0
    %1069 = vmatprep.subr.mxu0 0.0
    %1070 = vmatpush1.xpose.msra.mxu0 0.0
    %1071 = vmatprep.subr.mxu0 0.0
    %1072 = vmatpush1.xpose.msra.mxu0 0.0
    %1073 = vmatprep.subr.mxu0 0.0
    %1074 = vmatpush1.xpose.msra.mxu0 0.0
    %1075 = vmatprep.subr.mxu0 0.0
    %1076 = vmatpush1.xpose.msra.mxu0 %v1043
    %1077 = vmatprep.subr.mxu0 0.0
    %1078 = vmatpush2.xpose.msra.mxu0 0.0
    %1079 = vmatprep.subr.mxu0 0.0
    %1080 = vmatpush2.xpose.msra.mxu0 0.0
    %1081 = vmatprep.subr.mxu0 0.0
    %1082 = vmatpush2.xpose.msra.mxu0 0.0
    %1083 = vmatprep.subr.mxu0 0.0
    %1084 = vmatpush2.xpose.msra.mxu0 0.0
    %1085 = vmatprep.subr.mxu0 0.0
    %1086 = vmatpush2.xpose.msra.mxu0 0.0
    %1087 = vmatprep.subr.mxu0 0.0
    %1088 = vmatpush2.xpose.msra.mxu0 0.0
    %1089 = vmatprep.subr.mxu0 0.0
    %1090 = vmatpush2.xpose.msra.mxu0 0.0
    %1091 = vmatprep.subr.mxu0 0.0
    %1092 = vmatpush2.xpose.msra.mxu0 0.0
    %1093 = vmatprep.subr.mxu0 0.0
    %1094 = vmatpush2.xpose.msra.mxu0 0.0
    %1095 = vmatprep.subr.mxu0 0.0
    %1096 = vmatpush2.xpose.msra.mxu0 0.0
    %1097 = vmatprep.subr.mxu0 0.0
    %1098 = vmatpush2.xpose.msra.mxu0 0.0
    %1099 = vmatprep.subr.mxu0 0.0
    %1100 = vmatpush2.xpose.msra.mxu0 0.0
    %1101 = vmatprep.subr.mxu0 0.0
    %1102 = vmatpush2.xpose.msra.mxu0 0.0
    %1103 = vmatprep.subr.mxu0 0.0
    %1104 = vmatpush2.xpose.msra.mxu0 0.0
    %1105 = vmatprep.subr.mxu0 0.0
    %1106 = vmatpush2.xpose.msra.mxu0 0.0
    %1107 = vmatprep.subr.mxu0 0.0
    %1108 = vmatpush2.xpose.msra.mxu0 0.0
    %1109 = vmatprep.mubr.f32.mxu0 0.0
    %1110 = vmatmul.mubr.f32.gmra.mxu0 %v967
    %v1111 = vpop.f32.mrf.mxu0
    %v1112 = vadd.f32 0.0, %v1111
    %v1113 = vpop.f32.mrf.mxu0
    %1114 = vdwg.mxu0
    %v1115 = vsel %vm301, %v1038, -inf
    %1116 = vmax.xlane.f32.xlu0 %v1115
    %v1117 = vpop.xlane.xlu0 %1116
    %v1118 = vsel %vm301, %v1112, -inf
    %1119 = vmax.xlane.f32.xlu0 %v1118
    %v1120 = vpop.xlane.xlu0 %1119
    %v1121 = vsub.f32 %v1038, %v1117
    %v1122 = vsub.f32 %v1112, %v1120
    %v1123 = vmul.f32 %v1121, 1.442695
    %v1124 = vpow.pop %v1123
    %v1125 = vmul.f32 %v1122, 1.442695
    %v1126 = vpow.pop %v1125
    %v1127 = vsel %vm301, %v1124, 0.0
    %1128 = vadd.xlane.f32.xlu0 %v1127
    %v1129 = vpop.xlane.xlu0 %1128
    %v1130 = vsel %vm301, %v1126, 0.0
    %1131 = vadd.xlane.f32.xlu0 %v1130
    %v1132 = vpop.xlane.xlu0 %1131
    %v1133 = vrcp.pop %v1129
    %v1134 = vrcp.pop %v1132
    %v1135 = vmul.f32 %v1124, %v1133
    %v1136 = vmul.f32 %v1126, %v1134
    %1137 = vrot.lane.b32.xlu0 %v207, 80
    %v1138 = vpop.permute.xlu0 %1137
    %v1141 = vsel %vm301, %v1135, 0
    %1143 = vmatprep.subr.mxu0 0.0
    %1144 = vmatpush1.msra.mxu0 0.0
    %1145 = vmatprep.subr.mxu0 0.0
    %1146 = vmatpush1.msra.mxu0 0.0
    %1147 = vmatprep.subr.mxu0 0.0
    %1148 = vmatpush1.msra.mxu0 0.0
    %1149 = vmatprep.subr.mxu0 0.0
    %1150 = vmatpush1.msra.mxu0 0.0
    %1151 = vmatprep.subr.mxu0 0.0
    %1152 = vmatpush1.msra.mxu0 0.0
    %1153 = vmatprep.subr.mxu0 0.0
    %1154 = vmatpush1.msra.mxu0 0.0
    %1155 = vmatprep.subr.mxu0 0.0
    %1156 = vmatpush1.msra.mxu0 0.0
    %1157 = vmatprep.subr.mxu0 0.0
    %1158 = vmatpush1.msra.mxu0 0.0
    %1159 = vmatprep.subr.mxu0 0.0
    %1160 = vmatpush1.msra.mxu0 0.0
    %1161 = vmatprep.subr.mxu0 0.0
    %1162 = vmatpush1.msra.mxu0 0.0
    %1163 = vmatprep.subr.mxu0 0.0
    %1164 = vmatpush1.msra.mxu0 0.0
    %1165 = vmatprep.subr.mxu0 0.0
    %1166 = vmatpush1.msra.mxu0 0.0
    %1167 = vmatprep.subr.mxu0 0.0
    %1168 = vmatpush1.msra.mxu0 0.0
    %1169 = vmatprep.subr.mxu0 0.0
    %1170 = vmatpush1.msra.mxu0 0.0
    %1171 = vmatprep.subr.mxu0 0.0
    %1172 = vmatpush1.msra.mxu0 0.0
    %1173 = vmatprep.subr.mxu0 0.0
    %1174 = vmatpush1.msra.mxu0 %v1138
    %1175 = vmatprep.subr.mxu0 0.0
    %1176 = vmatpush2.msra.mxu0 0.0
    %1177 = vmatprep.subr.mxu0 0.0
    %1178 = vmatpush2.msra.mxu0 0.0
    %1179 = vmatprep.subr.mxu0 0.0
    %1180 = vmatpush2.msra.mxu0 0.0
    %1181 = vmatprep.subr.mxu0 0.0
    %1182 = vmatpush2.msra.mxu0 0.0
    %1183 = vmatprep.subr.mxu0 0.0
    %1184 = vmatpush2.msra.mxu0 0.0
    %1185 = vmatprep.subr.mxu0 0.0
    %1186 = vmatpush2.msra.mxu0 0.0
    %1187 = vmatprep.subr.mxu0 0.0
    %1188 = vmatpush2.msra.mxu0 0.0
    %1189 = vmatprep.subr.mxu0 0.0
    %1190 = vmatpush2.msra.mxu0 0.0
    %1191 = vmatprep.subr.mxu0 0.0
    %1192 = vmatpush2.msra.mxu0 0.0
    %1193 = vmatprep.subr.mxu0 0.0
    %1194 = vmatpush2.msra.mxu0 0.0
    %1195 = vmatprep.subr.mxu0 0.0
    %1196 = vmatpush2.msra.mxu0 0.0
    %1197 = vmatprep.subr.mxu0 0.0
    %1198 = vmatpush2.msra.mxu0 0.0
    %1199 = vmatprep.subr.mxu0 0.0
    %1200 = vmatpush2.msra.mxu0 0.0
    %1201 = vmatprep.subr.mxu0 0.0
    %1202 = vmatpush2.msra.mxu0 0.0
    %1203 = vmatprep.subr.mxu0 0.0
    %1204 = vmatpush2.msra.mxu0 0.0
    %1205 = vmatprep.subr.mxu0 0.0
    %1206 = vmatpush2.msra.mxu0 0.0
    %1207 = vmatprep.mubr.f32.mxu0 0.0
    %1208 = vmatmul.mubr.f32.gmra.mxu0 %v1141
    %v1209 = vpop.f32.mrf.mxu0
    %v1210 = vadd.f32 0.0, %v1209
    %v1211 = vpop.f32.mrf.mxu0
    %1212 = vdwg.mxu0
    %1213 = vrot.lane.b32.xlu0 %v212, 80
    %v1214 = vpop.permute.xlu0 %1213
    %v1217 = vsel %vm301, %v1136, 0
    %1219 = vmatprep.subr.mxu0 0.0
    %1220 = vmatpush1.msra.mxu0 0.0
    %1221 = vmatprep.subr.mxu0 0.0
    %1222 = vmatpush1.msra.mxu0 0.0
    %1223 = vmatprep.subr.mxu0 0.0
    %1224 = vmatpush1.msra.mxu0 0.0
    %1225 = vmatprep.subr.mxu0 0.0
    %1226 = vmatpush1.msra.mxu0 0.0
    %1227 = vmatprep.subr.mxu0 0.0
    %1228 = vmatpush1.msra.mxu0 0.0
    %1229 = vmatprep.subr.mxu0 0.0
    %1230 = vmatpush1.msra.mxu0 0.0
    %1231 = vmatprep.subr.mxu0 0.0
    %1232 = vmatpush1.msra.mxu0 0.0
    %1233 = vmatprep.subr.mxu0 0.0
    %1234 = vmatpush1.msra.mxu0 0.0
    %1235 = vmatprep.subr.mxu0 0.0
    %1236 = vmatpush1.msra.mxu0 0.0
    %1237 = vmatprep.subr.mxu0 0.0
    %1238 = vmatpush1.msra.mxu0 0.0
    %1239 = vmatprep.subr.mxu0 0.0
    %1240 = vmatpush1.msra.mxu0 0.0
    %1241 = vmatprep.subr.mxu0 0.0
    %1242 = vmatpush1.msra.mxu0 0.0
    %1243 = vmatprep.subr.mxu0 0.0
    %1244 = vmatpush1.msra.mxu0 0.0
    %1245 = vmatprep.subr.mxu0 0.0
    %1246 = vmatpush1.msra.mxu0 0.0
    %1247 = vmatprep.subr.mxu0 0.0
    %1248 = vmatpush1.msra.mxu0 0.0
    %1249 = vmatprep.subr.mxu0 0.0
    %1250 = vmatpush1.msra.mxu0 %v1214
    %1251 = vmatprep.subr.mxu0 0.0
    %1252 = vmatpush2.msra.mxu0 0.0
    %1253 = vmatprep.subr.mxu0 0.0
    %1254 = vmatpush2.msra.mxu0 0.0
    %1255 = vmatprep.subr.mxu0 0.0
    %1256 = vmatpush2.msra.mxu0 0.0
    %1257 = vmatprep.subr.mxu0 0.0
    %1258 = vmatpush2.msra.mxu0 0.0
    %1259 = vmatprep.subr.mxu0 0.0
    %1260 = vmatpush2.msra.mxu0 0.0
    %1261 = vmatprep.subr.mxu0 0.0
    %1262 = vmatpush2.msra.mxu0 0.0
    %1263 = vmatprep.subr.mxu0 0.0
    %1264 = vmatpush2.msra.mxu0 0.0
    %1265 = vmatprep.subr.mxu0 0.0
    %1266 = vmatpush2.msra.mxu0 0.0
    %1267 = vmatprep.subr.mxu0 0.0
    %1268 = vmatpush2.msra.mxu0 0.0
    %1269 = vmatprep.subr.mxu0 0.0
    %1270 = vmatpush2.msra.mxu0 0.0
    %1271 = vmatprep.subr.mxu0 0.0
    %1272 = vmatpush2.msra.mxu0 0.0
    %1273 = vmatprep.subr.mxu0 0.0
    %1274 = vmatpush2.msra.mxu0 0.0
    %1275 = vmatprep.subr.mxu0 0.0
    %1276 = vmatpush2.msra.mxu0 0.0
    %1277 = vmatprep.subr.mxu0 0.0
    %1278 = vmatpush2.msra.mxu0 0.0
    %1279 = vmatprep.subr.mxu0 0.0
    %1280 = vmatpush2.msra.mxu0 0.0
    %1281 = vmatprep.subr.mxu0 0.0
    %1282 = vmatpush2.msra.mxu0 0.0
    %1283 = vmatprep.mubr.f32.mxu0 0.0
    %1284 = vmatmul.mubr.f32.gmra.mxu0 %v1217
    %v1285 = vpop.f32.mrf.mxu0
    %v1286 = vadd.f32 0.0, %v1285
    %v1287 = vpop.f32.mrf.mxu0
    %1288 = vdwg.mxu0
    %1291 = vrot.lane.b32.xlu0 %v1210, 16
    %v1292 = vpop.permute.xlu0 %1291
    %1293 = vrot.lane.b32.xlu0 %v1286, 16
    %v1294 = vpop.permute.xlu0 %1293
    %v1297 = vadd.f32 %v297, %v1292
    %v1298 = vadd.f32 %v297, %v1294
    %1299 = vrot.lane.b32.xlu0 %v300, 104
    %v1300 = vpop.permute.xlu0 %1299
    %1301 = vrot.lane.b32.xlu0 %v207, 104
    %v1302 = vpop.permute.xlu0 %1301
    %v1303 = vsel %vm301, %v1300, 0
    %v1305 = vsel %vm301, %v1302, 0
    %1307 = vmatprep.subr.mxu0 0.0
    %1308 = vmatpush1.xpose.msra.mxu0 0.0
    %1309 = vmatprep.subr.mxu0 0.0
    %1310 = vmatpush1.xpose.msra.mxu0 0.0
    %1311 = vmatprep.subr.mxu0 0.0
    %1312 = vmatpush1.xpose.msra.mxu0 0.0
    %1313 = vmatprep.subr.mxu0 0.0
    %1314 = vmatpush1.xpose.msra.mxu0 0.0
    %1315 = vmatprep.subr.mxu0 0.0
    %1316 = vmatpush1.xpose.msra.mxu0 0.0
    %1317 = vmatprep.subr.mxu0 0.0
    %1318 = vmatpush1.xpose.msra.mxu0 0.0
    %1319 = vmatprep.subr.mxu0 0.0
    %1320 = vmatpush1.xpose.msra.mxu0 0.0
    %1321 = vmatprep.subr.mxu0 0.0
    %1322 = vmatpush1.xpose.msra.mxu0 0.0
    %1323 = vmatprep.subr.mxu0 0.0
    %1324 = vmatpush1.xpose.msra.mxu0 0.0
    %1325 = vmatprep.subr.mxu0 0.0
    %1326 = vmatpush1.xpose.msra.mxu0 0.0
    %1327 = vmatprep.subr.mxu0 0.0
    %1328 = vmatpush1.xpose.msra.mxu0 0.0
    %1329 = vmatprep.subr.mxu0 0.0
    %1330 = vmatpush1.xpose.msra.mxu0 0.0
    %1331 = vmatprep.subr.mxu0 0.0
    %1332 = vmatpush1.xpose.msra.mxu0 0.0
    %1333 = vmatprep.subr.mxu0 0.0
    %1334 = vmatpush1.xpose.msra.mxu0 0.0
    %1335 = vmatprep.subr.mxu0 0.0
    %1336 = vmatpush1.xpose.msra.mxu0 0.0
    %1337 = vmatprep.subr.mxu0 0.0
    %1338 = vmatpush1.xpose.msra.mxu0 %v1305
    %1339 = vmatprep.subr.mxu0 0.0
    %1340 = vmatpush2.xpose.msra.mxu0 0.0
    %1341 = vmatprep.subr.mxu0 0.0
    %1342 = vmatpush2.xpose.msra.mxu0 0.0
    %1343 = vmatprep.subr.mxu0 0.0
    %1344 = vmatpush2.xpose.msra.mxu0 0.0
    %1345 = vmatprep.subr.mxu0 0.0
    %1346 = vmatpush2.xpose.msra.mxu0 0.0
    %1347 = vmatprep.subr.mxu0 0.0
    %1348 = vmatpush2.xpose.msra.mxu0 0.0
    %1349 = vmatprep.subr.mxu0 0.0
    %1350 = vmatpush2.xpose.msra.mxu0 0.0
    %1351 = vmatprep.subr.mxu0 0.0
    %1352 = vmatpush2.xpose.msra.mxu0 0.0
    %1353 = vmatprep.subr.mxu0 0.0
    %1354 = vmatpush2.xpose.msra.mxu0 0.0
    %1355 = vmatprep.subr.mxu0 0.0
    %1356 = vmatpush2.xpose.msra.mxu0 0.0
    %1357 = vmatprep.subr.mxu0 0.0
    %1358 = vmatpush2.xpose.msra.mxu0 0.0
    %1359 = vmatprep.subr.mxu0 0.0
    %1360 = vmatpush2.xpose.msra.mxu0 0.0
    %1361 = vmatprep.subr.mxu0 0.0
    %1362 = vmatpush2.xpose.msra.mxu0 0.0
    %1363 = vmatprep.subr.mxu0 0.0
    %1364 = vmatpush2.xpose.msra.mxu0 0.0
    %1365 = vmatprep.subr.mxu0 0.0
    %1366 = vmatpush2.xpose.msra.mxu0 0.0
    %1367 = vmatprep.subr.mxu0 0.0
    %1368 = vmatpush2.xpose.msra.mxu0 0.0
    %1369 = vmatprep.subr.mxu0 0.0
    %1370 = vmatpush2.xpose.msra.mxu0 0.0
    %1371 = vmatprep.mubr.f32.mxu0 0.0
    %1372 = vmatmul.mubr.f32.gmra.mxu0 %v1303
    %v1373 = vpop.f32.mrf.mxu0
    %v1374 = vadd.f32 0.0, %v1373
    %v1375 = vpop.f32.mrf.mxu0
    %1376 = vdwg.mxu0
    %1377 = vrot.lane.b32.xlu0 %v212, 104
    %v1378 = vpop.permute.xlu0 %1377
    %v1379 = vsel %vm301, %v1378, 0
    %1381 = vmatprep.subr.mxu0 0.0
    %1382 = vmatpush1.xpose.msra.mxu0 0.0
    %1383 = vmatprep.subr.mxu0 0.0
    %1384 = vmatpush1.xpose.msra.mxu0 0.0
    %1385 = vmatprep.subr.mxu0 0.0
    %1386 = vmatpush1.xpose.msra.mxu0 0.0
    %1387 = vmatprep.subr.mxu0 0.0
    %1388 = vmatpush1.xpose.msra.mxu0 0.0
    %1389 = vmatprep.subr.mxu0 0.0
    %1390 = vmatpush1.xpose.msra.mxu0 0.0
    %1391 = vmatprep.subr.mxu0 0.0
    %1392 = vmatpush1.xpose.msra.mxu0 0.0
    %1393 = vmatprep.subr.mxu0 0.0
    %1394 = vmatpush1.xpose.msra.mxu0 0.0
    %1395 = vmatprep.subr.mxu0 0.0
    %1396 = vmatpush1.xpose.msra.mxu0 0.0
    %1397 = vmatprep.subr.mxu0 0.0
    %1398 = vmatpush1.xpose.msra.mxu0 0.0
    %1399 = vmatprep.subr.mxu0 0.0
    %1400 = vmatpush1.xpose.msra.mxu0 0.0
    %1401 = vmatprep.subr.mxu0 0.0
    %1402 = vmatpush1.xpose.msra.mxu0 0.0
    %1403 = vmatprep.subr.mxu0 0.0
    %1404 = vmatpush1.xpose.msra.mxu0 0.0
    %1405 = vmatprep.subr.mxu0 0.0
    %1406 = vmatpush1.xpose.msra.mxu0 0.0
    %1407 = vmatprep.subr.mxu0 0.0
    %1408 = vmatpush1.xpose.msra.mxu0 0.0
    %1409 = vmatprep.subr.mxu0 0.0
    %1410 = vmatpush1.xpose.msra.mxu0 0.0
    %1411 = vmatprep.subr.mxu0 0.0
    %1412 = vmatpush1.xpose.msra.mxu0 %v1379
    %1413 = vmatprep.subr.mxu0 0.0
    %1414 = vmatpush2.xpose.msra.mxu0 0.0
    %1415 = vmatprep.subr.mxu0 0.0
    %1416 = vmatpush2.xpose.msra.mxu0 0.0
    %1417 = vmatprep.subr.mxu0 0.0
    %1418 = vmatpush2.xpose.msra.mxu0 0.0
    %1419 = vmatprep.subr.mxu0 0.0
    %1420 = vmatpush2.xpose.msra.mxu0 0.0
    %1421 = vmatprep.subr.mxu0 0.0
    %1422 = vmatpush2.xpose.msra.mxu0 0.0
    %1423 = vmatprep.subr.mxu0 0.0
    %1424 = vmatpush2.xpose.msra.mxu0 0.0
    %1425 = vmatprep.subr.mxu0 0.0
    %1426 = vmatpush2.xpose.msra.mxu0 0.0
    %1427 = vmatprep.subr.mxu0 0.0
    %1428 = vmatpush2.xpose.msra.mxu0 0.0
    %1429 = vmatprep.subr.mxu0 0.0
    %1430 = vmatpush2.xpose.msra.mxu0 0.0
    %1431 = vmatprep.subr.mxu0 0.0
    %1432 = vmatpush2.xpose.msra.mxu0 0.0
    %1433 = vmatprep.subr.mxu0 0.0
    %1434 = vmatpush2.xpose.msra.mxu0 0.0
    %1435 = vmatprep.subr.mxu0 0.0
    %1436 = vmatpush2.xpose.msra.mxu0 0.0
    %1437 = vmatprep.subr.mxu0 0.0
    %1438 = vmatpush2.xpose.msra.mxu0 0.0
    %1439 = vmatprep.subr.mxu0 0.0
    %1440 = vmatpush2.xpose.msra.mxu0 0.0
    %1441 = vmatprep.subr.mxu0 0.0
    %1442 = vmatpush2.xpose.msra.mxu0 0.0
    %1443 = vmatprep.subr.mxu0 0.0
    %1444 = vmatpush2.xpose.msra.mxu0 0.0
    %1445 = vmatprep.mubr.f32.mxu0 0.0
    %1446 = vmatmul.mubr.f32.gmra.mxu0 %v1303
    %v1447 = vpop.f32.mrf.mxu0
    %v1448 = vadd.f32 0.0, %v1447
    %v1449 = vpop.f32.mrf.mxu0
    %1450 = vdwg.mxu0
    %v1451 = vsel %vm301, %v1374, -inf
    %1452 = vmax.xlane.f32.xlu0 %v1451
    %v1453 = vpop.xlane.xlu0 %1452
    %v1454 = vsel %vm301, %v1448, -inf
    %1455 = vmax.xlane.f32.xlu0 %v1454
    %v1456 = vpop.xlane.xlu0 %1455
    %v1457 = vsub.f32 %v1374, %v1453
    %v1458 = vsub.f32 %v1448, %v1456
    %v1459 = vmul.f32 %v1457, 1.442695
    %v1460 = vpow.pop %v1459
    %v1461 = vmul.f32 %v1458, 1.442695
    %v1462 = vpow.pop %v1461
    %v1463 = vsel %vm301, %v1460, 0.0
    %1464 = vadd.xlane.f32.xlu0 %v1463
    %v1465 = vpop.xlane.xlu0 %1464
    %v1466 = vsel %vm301, %v1462, 0.0
    %1467 = vadd.xlane.f32.xlu0 %v1466
    %v1468 = vpop.xlane.xlu0 %1467
    %v1469 = vrcp.pop %v1465
    %v1470 = vrcp.pop %v1468
    %v1471 = vmul.f32 %v1460, %v1469
    %v1472 = vmul.f32 %v1462, %v1470
    %1473 = vrot.lane.b32.xlu0 %v207, 72
    %v1474 = vpop.permute.xlu0 %1473
    %v1477 = vsel %vm301, %v1471, 0
    %1479 = vmatprep.subr.mxu0 0.0
    %1480 = vmatpush1.msra.mxu0 0.0
    %1481 = vmatprep.subr.mxu0 0.0
    %1482 = vmatpush1.msra.mxu0 0.0
    %1483 = vmatprep.subr.mxu0 0.0
    %1484 = vmatpush1.msra.mxu0 0.0
    %1485 = vmatprep.subr.mxu0 0.0
    %1486 = vmatpush1.msra.mxu0 0.0
    %1487 = vmatprep.subr.mxu0 0.0
    %1488 = vmatpush1.msra.mxu0 0.0
    %1489 = vmatprep.subr.mxu0 0.0
    %1490 = vmatpush1.msra.mxu0 0.0
    %1491 = vmatprep.subr.mxu0 0.0
    %1492 = vmatpush1.msra.mxu0 0.0
    %1493 = vmatprep.subr.mxu0 0.0
    %1494 = vmatpush1.msra.mxu0 0.0
    %1495 = vmatprep.subr.mxu0 0.0
    %1496 = vmatpush1.msra.mxu0 0.0
    %1497 = vmatprep.subr.mxu0 0.0
    %1498 = vmatpush1.msra.mxu0 0.0
    %1499 = vmatprep.subr.mxu0 0.0
    %1500 = vmatpush1.msra.mxu0 0.0
    %1501 = vmatprep.subr.mxu0 0.0
    %1502 = vmatpush1.msra.mxu0 0.0
    %1503 = vmatprep.subr.mxu0 0.0
    %1504 = vmatpush1.msra.mxu0 0.0
    %1505 = vmatprep.subr.mxu0 0.0
    %1506 = vmatpush1.msra.mxu0 0.0
    %1507 = vmatprep.subr.mxu0 0.0
    %1508 = vmatpush1.msra.mxu0 0.0
    %1509 = vmatprep.subr.mxu0 0.0
    %1510 = vmatpush1.msra.mxu0 %v1474
    %1511 = vmatprep.subr.mxu0 0.0
    %1512 = vmatpush2.msra.mxu0 0.0
    %1513 = vmatprep.subr.mxu0 0.0
    %1514 = vmatpush2.msra.mxu0 0.0
    %1515 = vmatprep.subr.mxu0 0.0
    %1516 = vmatpush2.msra.mxu0 0.0
    %1517 = vmatprep.subr.mxu0 0.0
    %1518 = vmatpush2.msra.mxu0 0.0
    %1519 = vmatprep.subr.mxu0 0.0
    %1520 = vmatpush2.msra.mxu0 0.0
    %1521 = vmatprep.subr.mxu0 0.0
    %1522 = vmatpush2.msra.mxu0 0.0
    %1523 = vmatprep.subr.mxu0 0.0
    %1524 = vmatpush2.msra.mxu0 0.0
    %1525 = vmatprep.subr.mxu0 0.0
    %1526 = vmatpush2.msra.mxu0 0.0
    %1527 = vmatprep.subr.mxu0 0.0
    %1528 = vmatpush2.msra.mxu0 0.0
    %1529 = vmatprep.subr.mxu0 0.0
    %1530 = vmatpush2.msra.mxu0 0.0
    %1531 = vmatprep.subr.mxu0 0.0
    %1532 = vmatpush2.msra.mxu0 0.0
    %1533 = vmatprep.subr.mxu0 0.0
    %1534 = vmatpush2.msra.mxu0 0.0
    %1535 = vmatprep.subr.mxu0 0.0
    %1536 = vmatpush2.msra.mxu0 0.0
    %1537 = vmatprep.subr.mxu0 0.0
    %1538 = vmatpush2.msra.mxu0 0.0
    %1539 = vmatprep.subr.mxu0 0.0
    %1540 = vmatpush2.msra.mxu0 0.0
    %1541 = vmatprep.subr.mxu0 0.0
    %1542 = vmatpush2.msra.mxu0 0.0
    %1543 = vmatprep.mubr.f32.mxu0 0.0
    %1544 = vmatmul.mubr.f32.gmra.mxu0 %v1477
    %v1545 = vpop.f32.mrf.mxu0
    %v1546 = vadd.f32 0.0, %v1545
    %v1547 = vpop.f32.mrf.mxu0
    %1548 = vdwg.mxu0
    %1549 = vrot.lane.b32.xlu0 %v212, 72
    %v1550 = vpop.permute.xlu0 %1549
    %v1553 = vsel %vm301, %v1472, 0
    %1555 = vmatprep.subr.mxu0 0.0
    %1556 = vmatpush1.msra.mxu0 0.0
    %1557 = vmatprep.subr.mxu0 0.0
    %1558 = vmatpush1.msra.mxu0 0.0
    %1559 = vmatprep.subr.mxu0 0.0
    %1560 = vmatpush1.msra.mxu0 0.0
    %1561 = vmatprep.subr.mxu0 0.0
    %1562 = vmatpush1.msra.mxu0 0.0
    %1563 = vmatprep.subr.mxu0 0.0
    %1564 = vmatpush1.msra.mxu0 0.0
    %1565 = vmatprep.subr.mxu0 0.0
    %1566 = vmatpush1.msra.mxu0 0.0
    %1567 = vmatprep.subr.mxu0 0.0
    %1568 = vmatpush1.msra.mxu0 0.0
    %1569 = vmatprep.subr.mxu0 0.0
    %1570 = vmatpush1.msra.mxu0 0.0
    %1571 = vmatprep.subr.mxu0 0.0
    %1572 = vmatpush1.msra.mxu0 0.0
    %1573 = vmatprep.subr.mxu0 0.0
    %1574 = vmatpush1.msra.mxu0 0.0
    %1575 = vmatprep.subr.mxu0 0.0
    %1576 = vmatpush1.msra.mxu0 0.0
    %1577 = vmatprep.subr.mxu0 0.0
    %1578 = vmatpush1.msra.mxu0 0.0
    %1579 = vmatprep.subr.mxu0 0.0
    %1580 = vmatpush1.msra.mxu0 0.0
    %1581 = vmatprep.subr.mxu0 0.0
    %1582 = vmatpush1.msra.mxu0 0.0
    %1583 = vmatprep.subr.mxu0 0.0
    %1584 = vmatpush1.msra.mxu0 0.0
    %1585 = vmatprep.subr.mxu0 0.0
    %1586 = vmatpush1.msra.mxu0 %v1550
    %1587 = vmatprep.subr.mxu0 0.0
    %1588 = vmatpush2.msra.mxu0 0.0
    %1589 = vmatprep.subr.mxu0 0.0
    %1590 = vmatpush2.msra.mxu0 0.0
    %1591 = vmatprep.subr.mxu0 0.0
    %1592 = vmatpush2.msra.mxu0 0.0
    %1593 = vmatprep.subr.mxu0 0.0
    %1594 = vmatpush2.msra.mxu0 0.0
    %1595 = vmatprep.subr.mxu0 0.0
    %1596 = vmatpush2.msra.mxu0 0.0
    %1597 = vmatprep.subr.mxu0 0.0
    %1598 = vmatpush2.msra.mxu0 0.0
    %1599 = vmatprep.subr.mxu0 0.0
    %1600 = vmatpush2.msra.mxu0 0.0
    %1601 = vmatprep.subr.mxu0 0.0
    %1602 = vmatpush2.msra.mxu0 0.0
    %1603 = vmatprep.subr.mxu0 0.0
    %1604 = vmatpush2.msra.mxu0 0.0
    %1605 = vmatprep.subr.mxu0 0.0
    %1606 = vmatpush2.msra.mxu0 0.0
    %1607 = vmatprep.subr.mxu0 0.0
    %1608 = vmatpush2.msra.mxu0 0.0
    %1609 = vmatprep.subr.mxu0 0.0
    %1610 = vmatpush2.msra.mxu0 0.0
    %1611 = vmatprep.subr.mxu0 0.0
    %1612 = vmatpush2.msra.mxu0 0.0
    %1613 = vmatprep.subr.mxu0 0.0
    %1614 = vmatpush2.msra.mxu0 0.0
    %1615 = vmatprep.subr.mxu0 0.0
    %1616 = vmatpush2.msra.mxu0 0.0
    %1617 = vmatprep.subr.mxu0 0.0
    %1618 = vmatpush2.msra.mxu0 0.0
    %1619 = vmatprep.mubr.f32.mxu0 0.0
    %1620 = vmatmul.mubr.f32.gmra.mxu0 %v1553
    %v1621 = vpop.f32.mrf.mxu0
    %v1622 = vadd.f32 0.0, %v1621
    %v1623 = vpop.f32.mrf.mxu0
    %1624 = vdwg.mxu0
    %1627 = vrot.lane.b32.xlu0 %v1546, 24
    %v1628 = vpop.permute.xlu0 %1627
    %1629 = vrot.lane.b32.xlu0 %v1622, 24
    %v1630 = vpop.permute.xlu0 %1629
    %v1633 = vadd.f32 %v297, %v1628
    %v1634 = vadd.f32 %v297, %v1630
    %v1635 = vsel %vm301, %v625, %v961
    %v1636 = vsel %vm301, %v626, %v962
    %vm1637 = vcmask 130048
    %v1638 = vsel %vm1637, %v1635, %v1297
    %v1639 = vsel %vm1637, %v1636, %v1298
    %vm1640 = vcmask 195584
    %v1641 = vsel %vm1640, %v1638, %v1633
    %v1642 = vsel %vm1640, %v1639, %v1634
    %v1643 = vld [vmem:[#allocation8] sm:$0xff]
    %v1644 = vld [vmem:[#allocation8 + $0x8] sm:$0xff]
    %v1645 = vld [vmem:[#allocation8 + $0x10] sm:$0xff]
    %v1646 = vld [vmem:[#allocation8 + $0x18] sm:$0xff]
    %v1647 = vld [vmem:[#allocation10] sm:$0x1]
    %v1649 = vlaneseq
    %v1650 = vshrl.u32 %v1649, 7
    %v1651 = vsub.s32 0, %v1650
    %v1652 = vrot.slane %v1647, %v1651
    %v1655 = vsel %vm226, %v1641, 0
    %v1658 = vsel %vm226, %v1642, 0
    %1660 = vmatprep.subr.mxu0 0.0
    %1661 = vmatpush1.msra.mxu0 0.0
    %1662 = vmatprep.subr.mxu0 0.0
    %1663 = vmatpush1.msra.mxu0 0.0
    %1664 = vmatprep.subr.mxu0 0.0
    %1665 = vmatpush1.msra.mxu0 0.0
    %1666 = vmatprep.subr.mxu0 0.0
    %1667 = vmatpush1.msra.mxu0 0.0
    %1668 = vmatprep.subr.mxu0 0.0
    %1669 = vmatpush1.msra.mxu0 0.0
    %1670 = vmatprep.subr.mxu0 0.0
    %1671 = vmatpush1.msra.mxu0 0.0
    %1672 = vmatprep.subr.mxu0 0.0
    %1673 = vmatpush1.msra.mxu0 0.0
    %1674 = vmatprep.subr.mxu0 0.0
    %1675 = vmatpush1.msra.mxu0 0.0
    %1676 = vmatprep.subr.mxu0 0.0
    %1677 = vmatpush1.msra.mxu0 0.0
    %1678 = vmatprep.subr.mxu0 0.0
    %1679 = vmatpush1.msra.mxu0 0.0
    %1680 = vmatprep.subr.mxu0 0.0
    %1681 = vmatpush1.msra.mxu0 0.0
    %1682 = vmatprep.subr.mxu0 0.0
    %1683 = vmatpush1.msra.mxu0 0.0
    %1684 = vmatprep.subr.mxu0 0.0
    %1685 = vmatpush1.msra.mxu0 %v1646
    %1686 = vmatprep.subr.mxu0 0.0
    %1687 = vmatpush1.msra.mxu0 %v1645
    %1688 = vmatprep.subr.mxu0 0.0
    %1689 = vmatpush1.msra.mxu0 %v1644
    %1690 = vmatprep.subr.mxu0 0.0
    %1691 = vmatpush1.msra.mxu0 %v1643
    %1692 = vmatprep.subr.mxu0 0.0
    %1693 = vmatpush2.msra.mxu0 0.0
    %1694 = vmatprep.subr.mxu0 0.0
    %1695 = vmatpush2.msra.mxu0 0.0
    %1696 = vmatprep.subr.mxu0 0.0
    %1697 = vmatpush2.msra.mxu0 0.0
    %1698 = vmatprep.subr.mxu0 0.0
    %1699 = vmatpush2.msra.mxu0 0.0
    %1700 = vmatprep.subr.mxu0 0.0
    %1701 = vmatpush2.msra.mxu0 0.0
    %1702 = vmatprep.subr.mxu0 0.0
    %1703 = vmatpush2.msra.mxu0 0.0
    %1704 = vmatprep.subr.mxu0 0.0
    %1705 = vmatpush2.msra.mxu0 0.0
    %1706 = vmatprep.subr.mxu0 0.0
    %1707 = vmatpush2.msra.mxu0 0.0
    %1708 = vmatprep.subr.mxu0 0.0
    %1709 = vmatpush2.msra.mxu0 0.0
    %1710 = vmatprep.subr.mxu0 0.0
    %1711 = vmatpush2.msra.mxu0 0.0
    %1712 = vmatprep.subr.mxu0 0.0
    %1713 = vmatpush2.msra.mxu0 0.0
    %1714 = vmatprep.subr.mxu0 0.0
    %1715 = vmatpush2.msra.mxu0 0.0
    %1716 = vmatprep.subr.mxu0 0.0
    %1717 = vmatpush2.msra.mxu0 0.0
    %1718 = vmatprep.subr.mxu0 0.0
    %1719 = vmatpush2.msra.mxu0 0.0
    %1720 = vmatprep.subr.mxu0 0.0
    %1721 = vmatpush2.msra.mxu0 0.0
    %1722 = vmatprep.subr.mxu0 0.0
    %1723 = vmatpush2.msra.mxu0 0.0
    %1724 = vmatprep.mubr.f32.mxu0 0.0
    %1725 = vmatmul.mubr.f32.gmra.mxu0 %v1655
    %v1726 = vpop.f32.mrf.mxu0
    %v1727 = vadd.f32 %v1652, %v1726
    %v1728 = vpop.f32.mrf.mxu0
    %1729 = vmatprep.mubr.f32.mxu0 0.0
    %1730 = vmatmul.mubr.f32.gmra.mxu0 %v1658
    %v1731 = vpop.f32.mrf.mxu0
    %v1732 = vadd.f32 %v1652, %v1731
    %v1733 = vpop.f32.mrf.mxu0
    %1734 = vdwg.mxu0
    %v1735 = vmax.f32 %v1727, 0.0
    %v1736 = vmax.f32 %v1732, 0.0
    %v1737 = vadd.f32 %v1641, %v1735
    %v1738 = vadd.f32 %v1642, %v1736
    %v1739 = vld [vmem:[%s8] sm:$0xff]
    %v1740 = vld [vmem:[%s8 + $0x8] sm:$0xff]
    %v1741 = vld [vmem:[%s8 + $0x10] sm:$0xff]
    %v1742 = vld [vmem:[%s8 + $0x18] sm:$0xff]
    %v1743 = vld [vmem:[%s9] sm:$0x1]
    %v1745 = vlaneseq
    %v1746 = vshrl.u32 %v1745, 7
    %v1747 = vsub.s32 0, %v1746
    %v1748 = vrot.slane %v1743, %v1747
    %v1751 = vsel %vm226, %v1737, 0
    %v1754 = vsel %vm226, %v1738, 0
    %1756 = vmatprep.subr.mxu0 0.0
    %1757 = vmatpush1.msra.mxu0 0.0
    %1758 = vmatprep.subr.mxu0 0.0
    %1759 = vmatpush1.msra.mxu0 0.0
    %1760 = vmatprep.subr.mxu0 0.0
    %1761 = vmatpush1.msra.mxu0 0.0
    %1762 = vmatprep.subr.mxu0 0.0
    %1763 = vmatpush1.msra.mxu0 0.0
    %1764 = vmatprep.subr.mxu0 0.0
    %1765 = vmatpush1.msra.mxu0 0.0
    %1766 = vmatprep.subr.mxu0 0.0
    %1767 = vmatpush1.msra.mxu0 0.0
    %1768 = vmatprep.subr.mxu0 0.0
    %1769 = vmatpush1.msra.mxu0 0.0
    %1770 = vmatprep.subr.mxu0 0.0
    %1771 = vmatpush1.msra.mxu0 0.0
    %1772 = vmatprep.subr.mxu0 0.0
    %1773 = vmatpush1.msra.mxu0 0.0
    %1774 = vmatprep.subr.mxu0 0.0
    %1775 = vmatpush1.msra.mxu0 0.0
    %1776 = vmatprep.subr.mxu0 0.0
    %1777 = vmatpush1.msra.mxu0 0.0
    %1778 = vmatprep.subr.mxu0 0.0
    %1779 = vmatpush1.msra.mxu0 0.0
    %1780 = vmatprep.subr.mxu0 0.0
    %1781 = vmatpush1.msra.mxu0 %v1742
    %1782 = vmatprep.subr.mxu0 0.0
    %1783 = vmatpush1.msra.mxu0 %v1741
    %1784 = vmatprep.subr.mxu0 0.0
    %1785 = vmatpush1.msra.mxu0 %v1740
    %1786 = vmatprep.subr.mxu0 0.0
    %1787 = vmatpush1.msra.mxu0 %v1739
    %1788 = vmatprep.subr.mxu0 0.0
    %1789 = vmatpush2.msra.mxu0 0.0
    %1790 = vmatprep.subr.mxu0 0.0
    %1791 = vmatpush2.msra.mxu0 0.0
    %1792 = vmatprep.subr.mxu0 0.0
    %1793 = vmatpush2.msra.mxu0 0.0
    %1794 = vmatprep.subr.mxu0 0.0
    %1795 = vmatpush2.msra.mxu0 0.0
    %1796 = vmatprep.subr.mxu0 0.0
    %1797 = vmatpush2.msra.mxu0 0.0
    %1798 = vmatprep.subr.mxu0 0.0
    %1799 = vmatpush2.msra.mxu0 0.0
    %1800 = vmatprep.subr.mxu0 0.0
    %1801 = vmatpush2.msra.mxu0 0.0
    %1802 = vmatprep.subr.mxu0 0.0
    %1803 = vmatpush2.msra.mxu0 0.0
    %1804 = vmatprep.subr.mxu0 0.0
    %1805 = vmatpush2.msra.mxu0 0.0
    %1806 = vmatprep.subr.mxu0 0.0
    %1807 = vmatpush2.msra.mxu0 0.0
    %1808 = vmatprep.subr.mxu0 0.0
    %1809 = vmatpush2.msra.mxu0 0.0
    %1810 = vmatprep.subr.mxu0 0.0
    %1811 = vmatpush2.msra.mxu0 0.0
    %1812 = vmatprep.subr.mxu0 0.0
    %1813 = vmatpush2.msra.mxu0 0.0
    %1814 = vmatprep.subr.mxu0 0.0
    %1815 = vmatpush2.msra.mxu0 0.0
    %1816 = vmatprep.subr.mxu0 0.0
    %1817 = vmatpush2.msra.mxu0 0.0
    %1818 = vmatprep.subr.mxu0 0.0
    %1819 = vmatpush2.msra.mxu0 0.0
    %1820 = vmatprep.mubr.f32.mxu0 0.0
    %1821 = vmatmul.mubr.f32.gmra.mxu0 %v1751
    %v1822 = vpop.f32.mrf.mxu0
    %v1823 = vadd.f32 %v1748, %v1822
    %v1824 = vpop.f32.mrf.mxu0
    %1825 = vmatprep.mubr.f32.mxu0 0.0
    %1826 = vmatmul.mubr.f32.gmra.mxu0 %v1754
    %v1827 = vpop.f32.mrf.mxu0
    %v1828 = vadd.f32 %v1748, %v1827
    %v1829 = vpop.f32.mrf.mxu0
    %1830 = vdwg.mxu0
    %v1831 = vmul.f32 %v207, 0.17677669
    %v1832 = vmul.f32 %v212, 0.17677669
    %1834 = vrot.lane.b32.xlu0 %v1831, 64
    %v1835 = vpop.permute.xlu0 %1834
    %v1836 = vsel %vm301, %v1835, 0
    %v1839 = vsel %vm301, %v1823, 0
    %1841 = vmatprep.subr.mxu0 0.0
    %1842 = vmatpush1.xpose.msra.mxu0 0.0
    %1843 = vmatprep.subr.mxu0 0.0
    %1844 = vmatpush1.xpose.msra.mxu0 0.0
    %1845 = vmatprep.subr.mxu0 0.0
    %1846 = vmatpush1.xpose.msra.mxu0 0.0
    %1847 = vmatprep.subr.mxu0 0.0
    %1848 = vmatpush1.xpose.msra.mxu0 0.0
    %1849 = vmatprep.subr.mxu0 0.0
    %1850 = vmatpush1.xpose.msra.mxu0 0.0
    %1851 = vmatprep.subr.mxu0 0.0
    %1852 = vmatpush1.xpose.msra.mxu0 0.0
    %1853 = vmatprep.subr.mxu0 0.0
    %1854 = vmatpush1.xpose.msra.mxu0 0.0
    %1855 = vmatprep.subr.mxu0 0.0
    %1856 = vmatpush1.xpose.msra.mxu0 0.0
    %1857 = vmatprep.subr.mxu0 0.0
    %1858 = vmatpush1.xpose.msra.mxu0 0.0
    %1859 = vmatprep.subr.mxu0 0.0
    %1860 = vmatpush1.xpose.msra.mxu0 0.0
    %1861 = vmatprep.subr.mxu0 0.0
    %1862 = vmatpush1.xpose.msra.mxu0 0.0
    %1863 = vmatprep.subr.mxu0 0.0
    %1864 = vmatpush1.xpose.msra.mxu0 0.0
    %1865 = vmatprep.subr.mxu0 0.0
    %1866 = vmatpush1.xpose.msra.mxu0 0.0
    %1867 = vmatprep.subr.mxu0 0.0
    %1868 = vmatpush1.xpose.msra.mxu0 0.0
    %1869 = vmatprep.subr.mxu0 0.0
    %1870 = vmatpush1.xpose.msra.mxu0 0.0
    %1871 = vmatprep.subr.mxu0 0.0
    %1872 = vmatpush1.xpose.msra.mxu0 %v1839
    %1873 = vmatprep.subr.mxu0 0.0
    %1874 = vmatpush2.xpose.msra.mxu0 0.0
    %1875 = vmatprep.subr.mxu0 0.0
    %1876 = vmatpush2.xpose.msra.mxu0 0.0
    %1877 = vmatprep.subr.mxu0 0.0
    %1878 = vmatpush2.xpose.msra.mxu0 0.0
    %1879 = vmatprep.subr.mxu0 0.0
    %1880 = vmatpush2.xpose.msra.mxu0 0.0
    %1881 = vmatprep.subr.mxu0 0.0
    %1882 = vmatpush2.xpose.msra.mxu0 0.0
    %1883 = vmatprep.subr.mxu0 0.0
    %1884 = vmatpush2.xpose.msra.mxu0 0.0
    %1885 = vmatprep.subr.mxu0 0.0
    %1886 = vmatpush2.xpose.msra.mxu0 0.0
    %1887 = vmatprep.subr.mxu0 0.0
    %1888 = vmatpush2.xpose.msra.mxu0 0.0
    %1889 = vmatprep.subr.mxu0 0.0
    %1890 = vmatpush2.xpose.msra.mxu0 0.0
    %1891 = vmatprep.subr.mxu0 0.0
    %1892 = vmatpush2.xpose.msra.mxu0 0.0
    %1893 = vmatprep.subr.mxu0 0.0
    %1894 = vmatpush2.xpose.msra.mxu0 0.0
    %1895 = vmatprep.subr.mxu0 0.0
    %1896 = vmatpush2.xpose.msra.mxu0 0.0
    %1897 = vmatprep.subr.mxu0 0.0
    %1898 = vmatpush2.xpose.msra.mxu0 0.0
    %1899 = vmatprep.subr.mxu0 0.0
    %1900 = vmatpush2.xpose.msra.mxu0 0.0
    %1901 = vmatprep.subr.mxu0 0.0
    %1902 = vmatpush2.xpose.msra.mxu0 0.0
    %1903 = vmatprep.subr.mxu0 0.0
    %1904 = vmatpush2.xpose.msra.mxu0 0.0
    %1905 = vmatprep.mubr.f32.mxu0 0.0
    %1906 = vmatmul.mubr.f32.gmra.mxu0 %v1836
    %v1907 = vpop.f32.mrf.mxu0
    %v1908 = vadd.f32 0.0, %v1907
    %v1909 = vpop.f32.mrf.mxu0
    %1910 = vdwg.mxu0
    %1912 = vrot.lane.b32.xlu0 %v1832, 64
    %v1913 = vpop.permute.xlu0 %1912
    %v1914 = vsel %vm301, %v1913, 0
    %v1917 = vsel %vm301, %v1828, 0
    %1919 = vmatprep.subr.mxu0 0.0
    %1920 = vmatpush1.xpose.msra.mxu0 0.0
    %1921 = vmatprep.subr.mxu0 0.0
    %1922 = vmatpush1.xpose.msra.mxu0 0.0
    %1923 = vmatprep.subr.mxu0 0.0
    %1924 = vmatpush1.xpose.msra.mxu0 0.0
    %1925 = vmatprep.subr.mxu0 0.0
    %1926 = vmatpush1.xpose.msra.mxu0 0.0
    %1927 = vmatprep.subr.mxu0 0.0
    %1928 = vmatpush1.xpose.msra.mxu0 0.0
    %1929 = vmatprep.subr.mxu0 0.0
    %1930 = vmatpush1.xpose.msra.mxu0 0.0
    %1931 = vmatprep.subr.mxu0 0.0
    %1932 = vmatpush1.xpose.msra.mxu0 0.0
    %1933 = vmatprep.subr.mxu0 0.0
    %1934 = vmatpush1.xpose.msra.mxu0 0.0
    %1935 = vmatprep.subr.mxu0 0.0
    %1936 = vmatpush1.xpose.msra.mxu0 0.0
    %1937 = vmatprep.subr.mxu0 0.0
    %1938 = vmatpush1.xpose.msra.mxu0 0.0
    %1939 = vmatprep.subr.mxu0 0.0
    %1940 = vmatpush1.xpose.msra.mxu0 0.0
    %1941 = vmatprep.subr.mxu0 0.0
    %1942 = vmatpush1.xpose.msra.mxu0 0.0
    %1943 = vmatprep.subr.mxu0 0.0
    %1944 = vmatpush1.xpose.msra.mxu0 0.0
    %1945 = vmatprep.subr.mxu0 0.0
    %1946 = vmatpush1.xpose.msra.mxu0 0.0
    %1947 = vmatprep.subr.mxu0 0.0
    %1948 = vmatpush1.xpose.msra.mxu0 0.0
    %1949 = vmatprep.subr.mxu0 0.0
    %1950 = vmatpush1.xpose.msra.mxu0 %v1917
    %1951 = vmatprep.subr.mxu0 0.0
    %1952 = vmatpush2.xpose.msra.mxu0 0.0
    %1953 = vmatprep.subr.mxu0 0.0
    %1954 = vmatpush2.xpose.msra.mxu0 0.0
    %1955 = vmatprep.subr.mxu0 0.0
    %1956 = vmatpush2.xpose.msra.mxu0 0.0
    %1957 = vmatprep.subr.mxu0 0.0
    %1958 = vmatpush2.xpose.msra.mxu0 0.0
    %1959 = vmatprep.subr.mxu0 0.0
    %1960 = vmatpush2.xpose.msra.mxu0 0.0
    %1961 = vmatprep.subr.mxu0 0.0
    %1962 = vmatpush2.xpose.msra.mxu0 0.0
    %1963 = vmatprep.subr.mxu0 0.0
    %1964 = vmatpush2.xpose.msra.mxu0 0.0
    %1965 = vmatprep.subr.mxu0 0.0
    %1966 = vmatpush2.xpose.msra.mxu0 0.0
    %1967 = vmatprep.subr.mxu0 0.0
    %1968 = vmatpush2.xpose.msra.mxu0 0.0
    %1969 = vmatprep.subr.mxu0 0.0
    %1970 = vmatpush2.xpose.msra.mxu0 0.0
    %1971 = vmatprep.subr.mxu0 0.0
    %1972 = vmatpush2.xpose.msra.mxu0 0.0
    %1973 = vmatprep.subr.mxu0 0.0
    %1974 = vmatpush2.xpose.msra.mxu0 0.0
    %1975 = vmatprep.subr.mxu0 0.0
    %1976 = vmatpush2.xpose.msra.mxu0 0.0
    %1977 = vmatprep.subr.mxu0 0.0
    %1978 = vmatpush2.xpose.msra.mxu0 0.0
    %1979 = vmatprep.subr.mxu0 0.0
    %1980 = vmatpush2.xpose.msra.mxu0 0.0
    %1981 = vmatprep.subr.mxu0 0.0
    %1982 = vmatpush2.xpose.msra.mxu0 0.0
    %1983 = vmatprep.mubr.f32.mxu0 0.0
    %1984 = vmatmul.mubr.f32.gmra.mxu0 %v1914
    %v1985 = vpop.f32.mrf.mxu0
    %v1986 = vadd.f32 0.0, %v1985
    %v1987 = vpop.f32.mrf.mxu0
    %1988 = vdwg.mxu0
    %v1989 = vsel %vm301, %v1908, -inf
    %1990 = vmax.xlane.f32.xlu0 %v1989
    %v1991 = vpop.xlane.xlu0 %1990
    %v1992 = vsel %vm301, %v1986, -inf
    %1993 = vmax.xlane.f32.xlu0 %v1992
    %v1994 = vpop.xlane.xlu0 %1993
    %v1995 = vsub.f32 %v1908, %v1991
    %v1996 = vsub.f32 %v1986, %v1994
    %v1997 = vmul.f32 %v1995, 1.442695
    %v1998 = vpow.pop %v1997
    %v1999 = vmul.f32 %v1996, 1.442695
    %v2000 = vpow.pop %v1999
    %v2001 = vsel %vm301, %v1998, 0.0
    %2002 = vadd.xlane.f32.xlu0 %v2001
    %v2003 = vpop.xlane.xlu0 %2002
    %v2004 = vsel %vm301, %v2000, 0.0
    %2005 = vadd.xlane.f32.xlu0 %v2004
    %v2006 = vpop.xlane.xlu0 %2005
    %v2007 = vrcp.pop %v2003
    %v2008 = vrcp.pop %v2006
    %v2009 = vmul.f32 %v1998, %v2007
    %v2010 = vmul.f32 %v2000, %v2008
    %2011 = vrot.lane.b32.xlu0 %v1823, 96
    %v2012 = vpop.permute.xlu0 %2011
    %v2015 = vsel %vm301, %v2009, 0
    %2017 = vmatprep.subr.mxu0 0.0
    %2018 = vmatpush1.msra.mxu0 0.0
    %2019 = vmatprep.subr.mxu0 0.0
    %2020 = vmatpush1.msra.mxu0 0.0
    %2021 = vmatprep.subr.mxu0 0.0
    %2022 = vmatpush1.msra.mxu0 0.0
    %2023 = vmatprep.subr.mxu0 0.0
    %2024 = vmatpush1.msra.mxu0 0.0
    %2025 = vmatprep.subr.mxu0 0.0
    %2026 = vmatpush1.msra.mxu0 0.0
    %2027 = vmatprep.subr.mxu0 0.0
    %2028 = vmatpush1.msra.mxu0 0.0
    %2029 = vmatprep.subr.mxu0 0.0
    %2030 = vmatpush1.msra.mxu0 0.0
    %2031 = vmatprep.subr.mxu0 0.0
    %2032 = vmatpush1.msra.mxu0 0.0
    %2033 = vmatprep.subr.mxu0 0.0
    %2034 = vmatpush1.msra.mxu0 0.0
    %2035 = vmatprep.subr.mxu0 0.0
    %2036 = vmatpush1.msra.mxu0 0.0
    %2037 = vmatprep.subr.mxu0 0.0
    %2038 = vmatpush1.msra.mxu0 0.0
    %2039 = vmatprep.subr.mxu0 0.0
    %2040 = vmatpush1.msra.mxu0 0.0
    %2041 = vmatprep.subr.mxu0 0.0
    %2042 = vmatpush1.msra.mxu0 0.0
    %2043 = vmatprep.subr.mxu0 0.0
    %2044 = vmatpush1.msra.mxu0 0.0
    %2045 = vmatprep.subr.mxu0 0.0
    %2046 = vmatpush1.msra.mxu0 0.0
    %2047 = vmatprep.subr.mxu0 0.0
    %2048 = vmatpush1.msra.mxu0 %v2012
    %2049 = vmatprep.subr.mxu0 0.0
    %2050 = vmatpush2.msra.mxu0 0.0
    %2051 = vmatprep.subr.mxu0 0.0
    %2052 = vmatpush2.msra.mxu0 0.0
    %2053 = vmatprep.subr.mxu0 0.0
    %2054 = vmatpush2.msra.mxu0 0.0
    %2055 = vmatprep.subr.mxu0 0.0
    %2056 = vmatpush2.msra.mxu0 0.0
    %2057 = vmatprep.subr.mxu0 0.0
    %2058 = vmatpush2.msra.mxu0 0.0
    %2059 = vmatprep.subr.mxu0 0.0
    %2060 = vmatpush2.msra.mxu0 0.0
    %2061 = vmatprep.subr.mxu0 0.0
    %2062 = vmatpush2.msra.mxu0 0.0
    %2063 = vmatprep.subr.mxu0 0.0
    %2064 = vmatpush2.msra.mxu0 0.0
    %2065 = vmatprep.subr.mxu0 0.0
    %2066 = vmatpush2.msra.mxu0 0.0
    %2067 = vmatprep.subr.mxu0 0.0
    %2068 = vmatpush2.msra.mxu0 0.0
    %2069 = vmatprep.subr.mxu0 0.0
    %2070 = vmatpush2.msra.mxu0 0.0
    %2071 = vmatprep.subr.mxu0 0.0
    %2072 = vmatpush2.msra.mxu0 0.0
    %2073 = vmatprep.subr.mxu0 0.0
    %2074 = vmatpush2.msra.mxu0 0.0
    %2075 = vmatprep.subr.mxu0 0.0
    %2076 = vmatpush2.msra.mxu0 0.0
    %2077 = vmatprep.subr.mxu0 0.0
    %2078 = vmatpush2.msra.mxu0 0.0
    %2079 = vmatprep.subr.mxu0 0.0
    %2080 = vmatpush2.msra.mxu0 0.0
    %2081 = vmatprep.mubr.f32.mxu0 0.0
    %2082 = vmatmul.mubr.f32.gmra.mxu0 %v2015
    %v2083 = vpop.f32.mrf.mxu0
    %v2084 = vadd.f32 0.0, %v2083
    %v2085 = vpop.f32.mrf.mxu0
    %2086 = vdwg.mxu0
    %2087 = vrot.lane.b32.xlu0 %v1828, 96
    %v2088 = vpop.permute.xlu0 %2087
    %v2091 = vsel %vm301, %v2010, 0
    %2093 = vmatprep.subr.mxu0 0.0
    %2094 = vmatpush1.msra.mxu0 0.0
    %2095 = vmatprep.subr.mxu0 0.0
    %2096 = vmatpush1.msra.mxu0 0.0
    %2097 = vmatprep.subr.mxu0 0.0
    %2098 = vmatpush1.msra.mxu0 0.0
    %2099 = vmatprep.subr.mxu0 0.0
    %2100 = vmatpush1.msra.mxu0 0.0
    %2101 = vmatprep.subr.mxu0 0.0
    %2102 = vmatpush1.msra.mxu0 0.0
    %2103 = vmatprep.subr.mxu0 0.0
    %2104 = vmatpush1.msra.mxu0 0.0
    %2105 = vmatprep.subr.mxu0 0.0
    %2106 = vmatpush1.msra.mxu0 0.0
    %2107 = vmatprep.subr.mxu0 0.0
    %2108 = vmatpush1.msra.mxu0 0.0
    %2109 = vmatprep.subr.mxu0 0.0
    %2110 = vmatpush1.msra.mxu0 0.0
    %2111 = vmatprep.subr.mxu0 0.0
    %2112 = vmatpush1.msra.mxu0 0.0
    %2113 = vmatprep.subr.mxu0 0.0
    %2114 = vmatpush1.msra.mxu0 0.0
    %2115 = vmatprep.subr.mxu0 0.0
    %2116 = vmatpush1.msra.mxu0 0.0
    %2117 = vmatprep.subr.mxu0 0.0
    %2118 = vmatpush1.msra.mxu0 0.0
    %2119 = vmatprep.subr.mxu0 0.0
    %2120 = vmatpush1.msra.mxu0 0.0
    %2121 = vmatprep.subr.mxu0 0.0
    %2122 = vmatpush1.msra.mxu0 0.0
    %2123 = vmatprep.subr.mxu0 0.0
    %2124 = vmatpush1.msra.mxu0 %v2088
    %2125 = vmatprep.subr.mxu0 0.0
    %2126 = vmatpush2.msra.mxu0 0.0
    %2127 = vmatprep.subr.mxu0 0.0
    %2128 = vmatpush2.msra.mxu0 0.0
    %2129 = vmatprep.subr.mxu0 0.0
    %2130 = vmatpush2.msra.mxu0 0.0
    %2131 = vmatprep.subr.mxu0 0.0
    %2132 = vmatpush2.msra.mxu0 0.0
    %2133 = vmatprep.subr.mxu0 0.0
    %2134 = vmatpush2.msra.mxu0 0.0
    %2135 = vmatprep.subr.mxu0 0.0
    %2136 = vmatpush2.msra.mxu0 0.0
    %2137 = vmatprep.subr.mxu0 0.0
    %2138 = vmatpush2.msra.mxu0 0.0
    %2139 = vmatprep.subr.mxu0 0.0
    %2140 = vmatpush2.msra.mxu0 0.0
    %2141 = vmatprep.subr.mxu0 0.0
    %2142 = vmatpush2.msra.mxu0 0.0
    %2143 = vmatprep.subr.mxu0 0.0
    %2144 = vmatpush2.msra.mxu0 0.0
    %2145 = vmatprep.subr.mxu0 0.0
    %2146 = vmatpush2.msra.mxu0 0.0
    %2147 = vmatprep.subr.mxu0 0.0
    %2148 = vmatpush2.msra.mxu0 0.0
    %2149 = vmatprep.subr.mxu0 0.0
    %2150 = vmatpush2.msra.mxu0 0.0
    %2151 = vmatprep.subr.mxu0 0.0
    %2152 = vmatpush2.msra.mxu0 0.0
    %2153 = vmatprep.subr.mxu0 0.0
    %2154 = vmatpush2.msra.mxu0 0.0
    %2155 = vmatprep.subr.mxu0 0.0
    %2156 = vmatpush2.msra.mxu0 0.0
    %2157 = vmatprep.mubr.f32.mxu0 0.0
    %2158 = vmatmul.mubr.f32.gmra.mxu0 %v2091
    %v2159 = vpop.f32.mrf.mxu0
    %v2160 = vadd.f32 0.0, %v2159
    %v2161 = vpop.f32.mrf.mxu0
    %2162 = vdwg.mxu0
    %2165 = vrot.lane.b32.xlu0 %v2084, 64
    %v2166 = vpop.permute.xlu0 %2165
    %2167 = vrot.lane.b32.xlu0 %v2160, 64
    %v2168 = vpop.permute.xlu0 %2167
    %v2171 = vadd.f32 %v207, %v2166
    %v2172 = vadd.f32 %v212, %v2168
    %2173 = vrot.lane.b32.xlu0 %v1831, 56
    %v2174 = vpop.permute.xlu0 %2173
    %2175 = vrot.lane.b32.xlu0 %v1823, 120
    %v2176 = vpop.permute.xlu0 %2175
    %v2177 = vsel %vm301, %v2174, 0
    %v2179 = vsel %vm301, %v2176, 0
    %2181 = vmatprep.subr.mxu0 0.0
    %2182 = vmatpush1.xpose.msra.mxu0 0.0
    %2183 = vmatprep.subr.mxu0 0.0
    %2184 = vmatpush1.xpose.msra.mxu0 0.0
    %2185 = vmatprep.subr.mxu0 0.0
    %2186 = vmatpush1.xpose.msra.mxu0 0.0
    %2187 = vmatprep.subr.mxu0 0.0
    %2188 = vmatpush1.xpose.msra.mxu0 0.0
    %2189 = vmatprep.subr.mxu0 0.0
    %2190 = vmatpush1.xpose.msra.mxu0 0.0
    %2191 = vmatprep.subr.mxu0 0.0
    %2192 = vmatpush1.xpose.msra.mxu0 0.0
    %2193 = vmatprep.subr.mxu0 0.0
    %2194 = vmatpush1.xpose.msra.mxu0 0.0
    %2195 = vmatprep.subr.mxu0 0.0
    %2196 = vmatpush1.xpose.msra.mxu0 0.0
    %2197 = vmatprep.subr.mxu0 0.0
    %2198 = vmatpush1.xpose.msra.mxu0 0.0
    %2199 = vmatprep.subr.mxu0 0.0
    %2200 = vmatpush1.xpose.msra.mxu0 0.0
    %2201 = vmatprep.subr.mxu0 0.0
    %2202 = vmatpush1.xpose.msra.mxu0 0.0
    %2203 = vmatprep.subr.mxu0 0.0
    %2204 = vmatpush1.xpose.msra.mxu0 0.0
    %2205 = vmatprep.subr.mxu0 0.0
    %2206 = vmatpush1.xpose.msra.mxu0 0.0
    %2207 = vmatprep.subr.mxu0 0.0
    %2208 = vmatpush1.xpose.msra.mxu0 0.0
    %2209 = vmatprep.subr.mxu0 0.0
    %2210 = vmatpush1.xpose.msra.mxu0 0.0
    %2211 = vmatprep.subr.mxu0 0.0
    %2212 = vmatpush1.xpose.msra.mxu0 %v2179
    %2213 = vmatprep.subr.mxu0 0.0
    %2214 = vmatpush2.xpose.msra.mxu0 0.0
    %2215 = vmatprep.subr.mxu0 0.0
    %2216 = vmatpush2.xpose.msra.mxu0 0.0
    %2217 = vmatprep.subr.mxu0 0.0
    %2218 = vmatpush2.xpose.msra.mxu0 0.0
    %2219 = vmatprep.subr.mxu0 0.0
    %2220 = vmatpush2.xpose.msra.mxu0 0.0
    %2221 = vmatprep.subr.mxu0 0.0
    %2222 = vmatpush2.xpose.msra.mxu0 0.0
    %2223 = vmatprep.subr.mxu0 0.0
    %2224 = vmatpush2.xpose.msra.mxu0 0.0
    %2225 = vmatprep.subr.mxu0 0.0
    %2226 = vmatpush2.xpose.msra.mxu0 0.0
    %2227 = vmatprep.subr.mxu0 0.0
    %2228 = vmatpush2.xpose.msra.mxu0 0.0
    %2229 = vmatprep.subr.mxu0 0.0
    %2230 = vmatpush2.xpose.msra.mxu0 0.0
    %2231 = vmatprep.subr.mxu0 0.0
    %2232 = vmatpush2.xpose.msra.mxu0 0.0
    %2233 = vmatprep.subr.mxu0 0.0
    %2234 = vmatpush2.xpose.msra.mxu0 0.0
    %2235 = vmatprep.subr.mxu0 0.0
    %2236 = vmatpush2.xpose.msra.mxu0 0.0
    %2237 = vmatprep.subr.mxu0 0.0
    %2238 = vmatpush2.xpose.msra.mxu0 0.0
    %2239 = vmatprep.subr.mxu0 0.0
    %2240 = vmatpush2.xpose.msra.mxu0 0.0
    %2241 = vmatprep.subr.mxu0 0.0
    %2242 = vmatpush2.xpose.msra.mxu0 0.0
    %2243 = vmatprep.subr.mxu0 0.0
    %2244 = vmatpush2.xpose.msra.mxu0 0.0
    %2245 = vmatprep.mubr.f32.mxu0 0.0
    %2246 = vmatmul.mubr.f32.gmra.mxu0 %v2177
    %v2247 = vpop.f32.mrf.mxu0
    %v2248 = vadd.f32 0.0, %v2247
    %v2249 = vpop.f32.mrf.mxu0
    %2250 = vdwg.mxu0
    %2251 = vrot.lane.b32.xlu0 %v1832, 56
    %v2252 = vpop.permute.xlu0 %2251
    %2253 = vrot.lane.b32.xlu0 %v1828, 120
    %v2254 = vpop.permute.xlu0 %2253
    %v2255 = vsel %vm301, %v2252, 0
    %v2257 = vsel %vm301, %v2254, 0
    %2259 = vmatprep.subr.mxu0 0.0
    %2260 = vmatpush1.xpose.msra.mxu0 0.0
    %2261 = vmatprep.subr.mxu0 0.0
    %2262 = vmatpush1.xpose.msra.mxu0 0.0
    %2263 = vmatprep.subr.mxu0 0.0
    %2264 = vmatpush1.xpose.msra.mxu0 0.0
    %2265 = vmatprep.subr.mxu0 0.0
    %2266 = vmatpush1.xpose.msra.mxu0 0.0
    %2267 = vmatprep.subr.mxu0 0.0
    %2268 = vmatpush1.xpose.msra.mxu0 0.0
    %2269 = vmatprep.subr.mxu0 0.0
    %2270 = vmatpush1.xpose.msra.mxu0 0.0
    %2271 = vmatprep.subr.mxu0 0.0
    %2272 = vmatpush1.xpose.msra.mxu0 0.0
    %2273 = vmatprep.subr.mxu0 0.0
    %2274 = vmatpush1.xpose.msra.mxu0 0.0
    %2275 = vmatprep.subr.mxu0 0.0
    %2276 = vmatpush1.xpose.msra.mxu0 0.0
    %2277 = vmatprep.subr.mxu0 0.0
    %2278 = vmatpush1.xpose.msra.mxu0 0.0
    %2279 = vmatprep.subr.mxu0 0.0
    %2280 = vmatpush1.xpose.msra.mxu0 0.0
    %2281 = vmatprep.subr.mxu0 0.0
    %2282 = vmatpush1.xpose.msra.mxu0 0.0
    %2283 = vmatprep.subr.mxu0 0.0
    %2284 = vmatpush1.xpose.msra.mxu0 0.0
    %2285 = vmatprep.subr.mxu0 0.0
    %2286 = vmatpush1.xpose.msra.mxu0 0.0
    %2287 = vmatprep.subr.mxu0 0.0
    %2288 = vmatpush1.xpose.msra.mxu0 0.0
    %2289 = vmatprep.subr.mxu0 0.0
    %2290 = vmatpush1.xpose.msra.mxu0 %v2257
    %2291 = vmatprep.subr.mxu0 0.0
    %2292 = vmatpush2.xpose.msra.mxu0 0.0
    %2293 = vmatprep.subr.mxu0 0.0
    %2294 = vmatpush2.xpose.msra.mxu0 0.0
    %2295 = vmatprep.subr.mxu0 0.0
    %2296 = vmatpush2.xpose.msra.mxu0 0.0
    %2297 = vmatprep.subr.mxu0 0.0
    %2298 = vmatpush2.xpose.msra.mxu0 0.0
    %2299 = vmatprep.subr.mxu0 0.0
    %2300 = vmatpush2.xpose.msra.mxu0 0.0
    %2301 = vmatprep.subr.mxu0 0.0
    %2302 = vmatpush2.xpose.msra.mxu0 0.0
    %2303 = vmatprep.subr.mxu0 0.0
    %2304 = vmatpush2.xpose.msra.mxu0 0.0
    %2305 = vmatprep.subr.mxu0 0.0
    %2306 = vmatpush2.xpose.msra.mxu0 0.0
    %2307 = vmatprep.subr.mxu0 0.0
    %2308 = vmatpush2.xpose.msra.mxu0 0.0
    %2309 = vmatprep.subr.mxu0 0.0
    %2310 = vmatpush2.xpose.msra.mxu0 0.0
    %2311 = vmatprep.subr.mxu0 0.0
    %2312 = vmatpush2.xpose.msra.mxu0 0.0
    %2313 = vmatprep.subr.mxu0 0.0
    %2314 = vmatpush2.xpose.msra.mxu0 0.0
    %2315 = vmatprep.subr.mxu0 0.0
    %2316 = vmatpush2.xpose.msra.mxu0 0.0
    %2317 = vmatprep.subr.mxu0 0.0
    %2318 = vmatpush2.xpose.msra.mxu0 0.0
    %2319 = vmatprep.subr.mxu0 0.0
    %2320 = vmatpush2.xpose.msra.mxu0 0.0
    %2321 = vmatprep.subr.mxu0 0.0
    %2322 = vmatpush2.xpose.msra.mxu0 0.0
    %2323 = vmatprep.mubr.f32.mxu0 0.0
    %2324 = vmatmul.mubr.f32.gmra.mxu0 %v2255
    %v2325 = vpop.f32.mrf.mxu0
    %v2326 = vadd.f32 0.0, %v2325
    %v2327 = vpop.f32.mrf.mxu0
    %2328 = vdwg.mxu0
    %v2329 = vsel %vm301, %v2248, -inf
    %2330 = vmax.xlane.f32.xlu0 %v2329
    %v2331 = vpop.xlane.xlu0 %2330
    %v2332 = vsel %vm301, %v2326, -inf
    %2333 = vmax.xlane.f32.xlu0 %v2332
    %v2334 = vpop.xlane.xlu0 %2333
    %v2335 = vsub.f32 %v2248, %v2331
    %v2336 = vsub.f32 %v2326, %v2334
    %v2337 = vmul.f32 %v2335, 1.442695
    %v2338 = vpow.pop %v2337
    %v2339 = vmul.f32 %v2336, 1.442695
    %v2340 = vpow.pop %v2339
    %v2341 = vsel %vm301, %v2338, 0.0
    %2342 = vadd.xlane.f32.xlu0 %v2341
    %v2343 = vpop.xlane.xlu0 %2342
    %v2344 = vsel %vm301, %v2340, 0.0
    %2345 = vadd.xlane.f32.xlu0 %v2344
    %v2346 = vpop.xlane.xlu0 %2345
    %v2347 = vrcp.pop %v2343
    %v2348 = vrcp.pop %v2346
    %v2349 = vmul.f32 %v2338, %v2347
    %v2350 = vmul.f32 %v2340, %v2348
    %2351 = vrot.lane.b32.xlu0 %v1823, 88
    %v2352 = vpop.permute.xlu0 %2351
    %v2355 = vsel %vm301, %v2349, 0
    %2357 = vmatprep.subr.mxu0 0.0
    %2358 = vmatpush1.msra.mxu0 0.0
    %2359 = vmatprep.subr.mxu0 0.0
    %2360 = vmatpush1.msra.mxu0 0.0
    %2361 = vmatprep.subr.mxu0 0.0
    %2362 = vmatpush1.msra.mxu0 0.0
    %2363 = vmatprep.subr.mxu0 0.0
    %2364 = vmatpush1.msra.mxu0 0.0
    %2365 = vmatprep.subr.mxu0 0.0
    %2366 = vmatpush1.msra.mxu0 0.0
    %2367 = vmatprep.subr.mxu0 0.0
    %2368 = vmatpush1.msra.mxu0 0.0
    %2369 = vmatprep.subr.mxu0 0.0
    %2370 = vmatpush1.msra.mxu0 0.0
    %2371 = vmatprep.subr.mxu0 0.0
    %2372 = vmatpush1.msra.mxu0 0.0
    %2373 = vmatprep.subr.mxu0 0.0
    %2374 = vmatpush1.msra.mxu0 0.0
    %2375 = vmatprep.subr.mxu0 0.0
    %2376 = vmatpush1.msra.mxu0 0.0
    %2377 = vmatprep.subr.mxu0 0.0
    %2378 = vmatpush1.msra.mxu0 0.0
    %2379 = vmatprep.subr.mxu0 0.0
    %2380 = vmatpush1.msra.mxu0 0.0
    %2381 = vmatprep.subr.mxu0 0.0
    %2382 = vmatpush1.msra.mxu0 0.0
    %2383 = vmatprep.subr.mxu0 0.0
    %2384 = vmatpush1.msra.mxu0 0.0
    %2385 = vmatprep.subr.mxu0 0.0
    %2386 = vmatpush1.msra.mxu0 0.0
    %2387 = vmatprep.subr.mxu0 0.0
    %2388 = vmatpush1.msra.mxu0 %v2352
    %2389 = vmatprep.subr.mxu0 0.0
    %2390 = vmatpush2.msra.mxu0 0.0
    %2391 = vmatprep.subr.mxu0 0.0
    %2392 = vmatpush2.msra.mxu0 0.0
    %2393 = vmatprep.subr.mxu0 0.0
    %2394 = vmatpush2.msra.mxu0 0.0
    %2395 = vmatprep.subr.mxu0 0.0
    %2396 = vmatpush2.msra.mxu0 0.0
    %2397 = vmatprep.subr.mxu0 0.0
    %2398 = vmatpush2.msra.mxu0 0.0
    %2399 = vmatprep.subr.mxu0 0.0
    %2400 = vmatpush2.msra.mxu0 0.0
    %2401 = vmatprep.subr.mxu0 0.0
    %2402 = vmatpush2.msra.mxu0 0.0
    %2403 = vmatprep.subr.mxu0 0.0
    %2404 = vmatpush2.msra.mxu0 0.0
    %2405 = vmatprep.subr.mxu0 0.0
    %2406 = vmatpush2.msra.mxu0 0.0
    %2407 = vmatprep.subr.mxu0 0.0
    %2408 = vmatpush2.msra.mxu0 0.0
    %2409 = vmatprep.subr.mxu0 0.0
    %2410 = vmatpush2.msra.mxu0 0.0
    %2411 = vmatprep.subr.mxu0 0.0
    %2412 = vmatpush2.msra.mxu0 0.0
    %2413 = vmatprep.subr.mxu0 0.0
    %2414 = vmatpush2.msra.mxu0 0.0
    %2415 = vmatprep.subr.mxu0 0.0
    %2416 = vmatpush2.msra.mxu0 0.0
    %2417 = vmatprep.subr.mxu0 0.0
    %2418 = vmatpush2.msra.mxu0 0.0
    %2419 = vmatprep.subr.mxu0 0.0
    %2420 = vmatpush2.msra.mxu0 0.0
    %2421 = vmatprep.mubr.f32.mxu0 0.0
    %2422 = vmatmul.mubr.f32.gmra.mxu0 %v2355
    %v2423 = vpop.f32.mrf.mxu0
    %v2424 = vadd.f32 0.0, %v2423
    %v2425 = vpop.f32.mrf.mxu0
    %2426 = vdwg.mxu0
    %2427 = vrot.lane.b32.xlu0 %v1828, 88
    %v2428 = vpop.permute.xlu0 %2427
    %v2431 = vsel %vm301, %v2350, 0
    %2433 = vmatprep.subr.mxu0 0.0
    %2434 = vmatpush1.msra.mxu0 0.0
    %2435 = vmatprep.subr.mxu0 0.0
    %2436 = vmatpush1.msra.mxu0 0.0
    %2437 = vmatprep.subr.mxu0 0.0
    %2438 = vmatpush1.msra.mxu0 0.0
    %2439 = vmatprep.subr.mxu0 0.0
    %2440 = vmatpush1.msra.mxu0 0.0
    %2441 = vmatprep.subr.mxu0 0.0
    %2442 = vmatpush1.msra.mxu0 0.0
    %2443 = vmatprep.subr.mxu0 0.0
    %2444 = vmatpush1.msra.mxu0 0.0
    %2445 = vmatprep.subr.mxu0 0.0
    %2446 = vmatpush1.msra.mxu0 0.0
    %2447 = vmatprep.subr.mxu0 0.0
    %2448 = vmatpush1.msra.mxu0 0.0
    %2449 = vmatprep.subr.mxu0 0.0
    %2450 = vmatpush1.msra.mxu0 0.0
    %2451 = vmatprep.subr.mxu0 0.0
    %2452 = vmatpush1.msra.mxu0 0.0
    %2453 = vmatprep.subr.mxu0 0.0
    %2454 = vmatpush1.msra.mxu0 0.0
    %2455 = vmatprep.subr.mxu0 0.0
    %2456 = vmatpush1.msra.mxu0 0.0
    %2457 = vmatprep.subr.mxu0 0.0
    %2458 = vmatpush1.msra.mxu0 0.0
    %2459 = vmatprep.subr.mxu0 0.0
    %2460 = vmatpush1.msra.mxu0 0.0
    %2461 = vmatprep.subr.mxu0 0.0
    %2462 = vmatpush1.msra.mxu0 0.0
    %2463 = vmatprep.subr.mxu0 0.0
    %2464 = vmatpush1.msra.mxu0 %v2428
    %2465 = vmatprep.subr.mxu0 0.0
    %2466 = vmatpush2.msra.mxu0 0.0
    %2467 = vmatprep.subr.mxu0 0.0
    %2468 = vmatpush2.msra.mxu0 0.0
    %2469 = vmatprep.subr.mxu0 0.0
    %2470 = vmatpush2.msra.mxu0 0.0
    %2471 = vmatprep.subr.mxu0 0.0
    %2472 = vmatpush2.msra.mxu0 0.0
    %2473 = vmatprep.subr.mxu0 0.0
    %2474 = vmatpush2.msra.mxu0 0.0
    %2475 = vmatprep.subr.mxu0 0.0
    %2476 = vmatpush2.msra.mxu0 0.0
    %2477 = vmatprep.subr.mxu0 0.0
    %2478 = vmatpush2.msra.mxu0 0.0
    %2479 = vmatprep.subr.mxu0 0.0
    %2480 = vmatpush2.msra.mxu0 0.0
    %2481 = vmatprep.subr.mxu0 0.0
    %2482 = vmatpush2.msra.mxu0 0.0
    %2483 = vmatprep.subr.mxu0 0.0
    %2484 = vmatpush2.msra.mxu0 0.0
    %2485 = vmatprep.subr.mxu0 0.0
    %2486 = vmatpush2.msra.mxu0 0.0
    %2487 = vmatprep.subr.mxu0 0.0
    %2488 = vmatpush2.msra.mxu0 0.0
    %2489 = vmatprep.subr.mxu0 0.0
    %2490 = vmatpush2.msra.mxu0 0.0
    %2491 = vmatprep.subr.mxu0 0.0
    %2492 = vmatpush2.msra.mxu0 0.0
    %2493 = vmatprep.subr.mxu0 0.0
    %2494 = vmatpush2.msra.mxu0 0.0
    %2495 = vmatprep.subr.mxu0 0.0
    %2496 = vmatpush2.msra.mxu0 0.0
    %2497 = vmatprep.mubr.f32.mxu0 0.0
    %2498 = vmatmul.mubr.f32.gmra.mxu0 %v2431
    %v2499 = vpop.f32.mrf.mxu0
    %v2500 = vadd.f32 0.0, %v2499
    %v2501 = vpop.f32.mrf.mxu0
    %2502 = vdwg.mxu0
    %2505 = vrot.lane.b32.xlu0 %v2424, 72
    %v2506 = vpop.permute.xlu0 %2505
    %2507 = vrot.lane.b32.xlu0 %v2500, 72
    %v2508 = vpop.permute.xlu0 %2507
    %v2511 = vadd.f32 %v207, %v2506
    %v2512 = vadd.f32 %v212, %v2508
    %2513 = vrot.lane.b32.xlu0 %v1831, 48
    %v2514 = vpop.permute.xlu0 %2513
    %2515 = vrot.lane.b32.xlu0 %v1823, 112
    %v2516 = vpop.permute.xlu0 %2515
    %v2517 = vsel %vm301, %v2514, 0
    %v2519 = vsel %vm301, %v2516, 0
    %2521 = vmatprep.subr.mxu0 0.0
    %2522 = vmatpush1.xpose.msra.mxu0 0.0
    %2523 = vmatprep.subr.mxu0 0.0
    %2524 = vmatpush1.xpose.msra.mxu0 0.0
    %2525 = vmatprep.subr.mxu0 0.0
    %2526 = vmatpush1.xpose.msra.mxu0 0.0
    %2527 = vmatprep.subr.mxu0 0.0
    %2528 = vmatpush1.xpose.msra.mxu0 0.0
    %2529 = vmatprep.subr.mxu0 0.0
    %2530 = vmatpush1.xpose.msra.mxu0 0.0
    %2531 = vmatprep.subr.mxu0 0.0
    %2532 = vmatpush1.xpose.msra.mxu0 0.0
    %2533 = vmatprep.subr.mxu0 0.0
    %2534 = vmatpush1.xpose.msra.mxu0 0.0
    %2535 = vmatprep.subr.mxu0 0.0
    %2536 = vmatpush1.xpose.msra.mxu0 0.0
    %2537 = vmatprep.subr.mxu0 0.0
    %2538 = vmatpush1.xpose.msra.mxu0 0.0
    %2539 = vmatprep.subr.mxu0 0.0
    %2540 = vmatpush1.xpose.msra.mxu0 0.0
    %2541 = vmatprep.subr.mxu0 0.0
    %2542 = vmatpush1.xpose.msra.mxu0 0.0
    %2543 = vmatprep.subr.mxu0 0.0
    %2544 = vmatpush1.xpose.msra.mxu0 0.0
    %2545 = vmatprep.subr.mxu0 0.0
    %2546 = vmatpush1.xpose.msra.mxu0 0.0
    %2547 = vmatprep.subr.mxu0 0.0
    %2548 = vmatpush1.xpose.msra.mxu0 0.0
    %2549 = vmatprep.subr.mxu0 0.0
    %2550 = vmatpush1.xpose.msra.mxu0 0.0
    %2551 = vmatprep.subr.mxu0 0.0
    %2552 = vmatpush1.xpose.msra.mxu0 %v2519
    %2553 = vmatprep.subr.mxu0 0.0
    %2554 = vmatpush2.xpose.msra.mxu0 0.0
    %2555 = vmatprep.subr.mxu0 0.0
    %2556 = vmatpush2.xpose.msra.mxu0 0.0
    %2557 = vmatprep.subr.mxu0 0.0
    %2558 = vmatpush2.xpose.msra.mxu0 0.0
    %2559 = vmatprep.subr.mxu0 0.0
    %2560 = vmatpush2.xpose.msra.mxu0 0.0
    %2561 = vmatprep.subr.mxu0 0.0
    %2562 = vmatpush2.xpose.msra.mxu0 0.0
    %2563 = vmatprep.subr.mxu0 0.0
    %2564 = vmatpush2.xpose.msra.mxu0 0.0
    %2565 = vmatprep.subr.mxu0 0.0
    %2566 = vmatpush2.xpose.msra.mxu0 0.0
    %2567 = vmatprep.subr.mxu0 0.0
    %2568 = vmatpush2.xpose.msra.mxu0 0.0
    %2569 = vmatprep.subr.mxu0 0.0
    %2570 = vmatpush2.xpose.msra.mxu0 0.0
    %2571 = vmatprep.subr.mxu0 0.0
    %2572 = vmatpush2.xpose.msra.mxu0 0.0
    %2573 = vmatprep.subr.mxu0 0.0
    %2574 = vmatpush2.xpose.msra.mxu0 0.0
    %2575 = vmatprep.subr.mxu0 0.0
    %2576 = vmatpush2.xpose.msra.mxu0 0.0
    %2577 = vmatprep.subr.mxu0 0.0
    %2578 = vmatpush2.xpose.msra.mxu0 0.0
    %2579 = vmatprep.subr.mxu0 0.0
    %2580 = vmatpush2.xpose.msra.mxu0 0.0
    %2581 = vmatprep.subr.mxu0 0.0
    %2582 = vmatpush2.xpose.msra.mxu0 0.0
    %2583 = vmatprep.subr.mxu0 0.0
    %2584 = vmatpush2.xpose.msra.mxu0 0.0
    %2585 = vmatprep.mubr.f32.mxu0 0.0
    %2586 = vmatmul.mubr.f32.gmra.mxu0 %v2517
    %v2587 = vpop.f32.mrf.mxu0
    %v2588 = vadd.f32 0.0, %v2587
    %v2589 = vpop.f32.mrf.mxu0
    %2590 = vdwg.mxu0
    %2591 = vrot.lane.b32.xlu0 %v1832, 48
    %v2592 = vpop.permute.xlu0 %2591
    %2593 = vrot.lane.b32.xlu0 %v1828, 112
    %v2594 = vpop.permute.xlu0 %2593
    %v2595 = vsel %vm301, %v2592, 0
    %v2597 = vsel %vm301, %v2594, 0
    %2599 = vmatprep.subr.mxu0 0.0
    %2600 = vmatpush1.xpose.msra.mxu0 0.0
    %2601 = vmatprep.subr.mxu0 0.0
    %2602 = vmatpush1.xpose.msra.mxu0 0.0
    %2603 = vmatprep.subr.mxu0 0.0
    %2604 = vmatpush1.xpose.msra.mxu0 0.0
    %2605 = vmatprep.subr.mxu0 0.0
    %2606 = vmatpush1.xpose.msra.mxu0 0.0
    %2607 = vmatprep.subr.mxu0 0.0
    %2608 = vmatpush1.xpose.msra.mxu0 0.0
    %2609 = vmatprep.subr.mxu0 0.0
    %2610 = vmatpush1.xpose.msra.mxu0 0.0
    %2611 = vmatprep.subr.mxu0 0.0
    %2612 = vmatpush1.xpose.msra.mxu0 0.0
    %2613 = vmatprep.subr.mxu0 0.0
    %2614 = vmatpush1.xpose.msra.mxu0 0.0
    %2615 = vmatprep.subr.mxu0 0.0
    %2616 = vmatpush1.xpose.msra.mxu0 0.0
    %2617 = vmatprep.subr.mxu0 0.0
    %2618 = vmatpush1.xpose.msra.mxu0 0.0
    %2619 = vmatprep.subr.mxu0 0.0
    %2620 = vmatpush1.xpose.msra.mxu0 0.0
    %2621 = vmatprep.subr.mxu0 0.0
    %2622 = vmatpush1.xpose.msra.mxu0 0.0
    %2623 = vmatprep.subr.mxu0 0.0
    %2624 = vmatpush1.xpose.msra.mxu0 0.0
    %2625 = vmatprep.subr.mxu0 0.0
    %2626 = vmatpush1.xpose.msra.mxu0 0.0
    %2627 = vmatprep.subr.mxu0 0.0
    %2628 = vmatpush1.xpose.msra.mxu0 0.0
    %2629 = vmatprep.subr.mxu0 0.0
    %2630 = vmatpush1.xpose.msra.mxu0 %v2597
    %2631 = vmatprep.subr.mxu0 0.0
    %2632 = vmatpush2.xpose.msra.mxu0 0.0
    %2633 = vmatprep.subr.mxu0 0.0
    %2634 = vmatpush2.xpose.msra.mxu0 0.0
    %2635 = vmatprep.subr.mxu0 0.0
    %2636 = vmatpush2.xpose.msra.mxu0 0.0
    %2637 = vmatprep.subr.mxu0 0.0
    %2638 = vmatpush2.xpose.msra.mxu0 0.0
    %2639 = vmatprep.subr.mxu0 0.0
    %2640 = vmatpush2.xpose.msra.mxu0 0.0
    %2641 = vmatprep.subr.mxu0 0.0
    %2642 = vmatpush2.xpose.msra.mxu0 0.0
    %2643 = vmatprep.subr.mxu0 0.0
    %2644 = vmatpush2.xpose.msra.mxu0 0.0
    %2645 = vmatprep.subr.mxu0 0.0
    %2646 = vmatpush2.xpose.msra.mxu0 0.0
    %2647 = vmatprep.subr.mxu0 0.0
    %2648 = vmatpush2.xpose.msra.mxu0 0.0
    %2649 = vmatprep.subr.mxu0 0.0
    %2650 = vmatpush2.xpose.msra.mxu0 0.0
    %2651 = vmatprep.subr.mxu0 0.0
    %2652 = vmatpush2.xpose.msra.mxu0 0.0
    %2653 = vmatprep.subr.mxu0 0.0
    %2654 = vmatpush2.xpose.msra.mxu0 0.0
    %2655 = vmatprep.subr.mxu0 0.0
    %2656 = vmatpush2.xpose.msra.mxu0 0.0
    %2657 = vmatprep.subr.mxu0 0.0
    %2658 = vmatpush2.xpose.msra.mxu0 0.0
    %2659 = vmatprep.subr.mxu0 0.0
    %2660 = vmatpush2.xpose.msra.mxu0 0.0
    %2661 = vmatprep.subr.mxu0 0.0
    %2662 = vmatpush2.xpose.msra.mxu0 0.0
    %2663 = vmatprep.mubr.f32.mxu0 0.0
    %2664 = vmatmul.mubr.f32.gmra.mxu0 %v2595
    %v2665 = vpop.f32.mrf.mxu0
    %v2666 = vadd.f32 0.0, %v2665
    %v2667 = vpop.f32.mrf.mxu0
    %2668 = vdwg.mxu0
    %v2669 = vsel %vm301, %v2588, -inf
    %2670 = vmax.xlane.f32.xlu0 %v2669
    %v2671 = vpop.xlane.xlu0 %2670
    %v2672 = vsel %vm301, %v2666, -inf
    %2673 = vmax.xlane.f32.xlu0 %v2672
    %v2674 = vpop.xlane.xlu0 %2673
    %v2675 = vsub.f32 %v2588, %v2671
    %v2676 = vsub.f32 %v2666, %v2674
    %v2677 = vmul.f32 %v2675, 1.442695
    %v2678 = vpow.pop %v2677
    %v2679 = vmul.f32 %v2676, 1.442695
    %v2680 = vpow.pop %v2679
    %v2681 = vsel %vm301, %v2678, 0.0
    %2682 = vadd.xlane.f32.xlu0 %v2681
    %v2683 = vpop.xlane.xlu0 %2682
    %v2684 = vsel %vm301, %v2680, 0.0
    %2685 = vadd.xlane.f32.xlu0 %v2684
    %v2686 = vpop.xlane.xlu0 %2685
    %v2687 = vrcp.pop %v2683
    %v2688 = vrcp.pop %v2686
    %v2689 = vmul.f32 %v2678, %v2687
    %v2690 = vmul.f32 %v2680, %v2688
    %2691 = vrot.lane.b32.xlu0 %v1823, 80
    %v2692 = vpop.permute.xlu0 %2691
    %v2695 = vsel %vm301, %v2689, 0
    %2697 = vmatprep.subr.mxu0 0.0
    %2698 = vmatpush1.msra.mxu0 0.0
    %2699 = vmatprep.subr.mxu0 0.0
    %2700 = vmatpush1.msra.mxu0 0.0
    %2701 = vmatprep.subr.mxu0 0.0
    %2702 = vmatpush1.msra.mxu0 0.0
    %2703 = vmatprep.subr.mxu0 0.0
    %2704 = vmatpush1.msra.mxu0 0.0
    %2705 = vmatprep.subr.mxu0 0.0
    %2706 = vmatpush1.msra.mxu0 0.0
    %2707 = vmatprep.subr.mxu0 0.0
    %2708 = vmatpush1.msra.mxu0 0.0
    %2709 = vmatprep.subr.mxu0 0.0
    %2710 = vmatpush1.msra.mxu0 0.0
    %2711 = vmatprep.subr.mxu0 0.0
    %2712 = vmatpush1.msra.mxu0 0.0
    %2713 = vmatprep.subr.mxu0 0.0
    %2714 = vmatpush1.msra.mxu0 0.0
    %2715 = vmatprep.subr.mxu0 0.0
    %2716 = vmatpush1.msra.mxu0 0.0
    %2717 = vmatprep.subr.mxu0 0.0
    %2718 = vmatpush1.msra.mxu0 0.0
    %2719 = vmatprep.subr.mxu0 0.0
    %2720 = vmatpush1.msra.mxu0 0.0
    %2721 = vmatprep.subr.mxu0 0.0
    %2722 = vmatpush1.msra.mxu0 0.0
    %2723 = vmatprep.subr.mxu0 0.0
    %2724 = vmatpush1.msra.mxu0 0.0
    %2725 = vmatprep.subr.mxu0 0.0
    %2726 = vmatpush1.msra.mxu0 0.0
    %2727 = vmatprep.subr.mxu0 0.0
    %2728 = vmatpush1.msra.mxu0 %v2692
    %2729 = vmatprep.subr.mxu0 0.0
    %2730 = vmatpush2.msra.mxu0 0.0
    %2731 = vmatprep.subr.mxu0 0.0
    %2732 = vmatpush2.msra.mxu0 0.0
    %2733 = vmatprep.subr.mxu0 0.0
    %2734 = vmatpush2.msra.mxu0 0.0
    %2735 = vmatprep.subr.mxu0 0.0
    %2736 = vmatpush2.msra.mxu0 0.0
    %2737 = vmatprep.subr.mxu0 0.0
    %2738 = vmatpush2.msra.mxu0 0.0
    %2739 = vmatprep.subr.mxu0 0.0
    %2740 = vmatpush2.msra.mxu0 0.0
    %2741 = vmatprep.subr.mxu0 0.0
    %2742 = vmatpush2.msra.mxu0 0.0
    %2743 = vmatprep.subr.mxu0 0.0
    %2744 = vmatpush2.msra.mxu0 0.0
    %2745 = vmatprep.subr.mxu0 0.0
    %2746 = vmatpush2.msra.mxu0 0.0
    %2747 = vmatprep.subr.mxu0 0.0
    %2748 = vmatpush2.msra.mxu0 0.0
    %2749 = vmatprep.subr.mxu0 0.0
    %2750 = vmatpush2.msra.mxu0 0.0
    %2751 = vmatprep.subr.mxu0 0.0
    %2752 = vmatpush2.msra.mxu0 0.0
    %2753 = vmatprep.subr.mxu0 0.0
    %2754 = vmatpush2.msra.mxu0 0.0
    %2755 = vmatprep.subr.mxu0 0.0
    %2756 = vmatpush2.msra.mxu0 0.0
    %2757 = vmatprep.subr.mxu0 0.0
    %2758 = vmatpush2.msra.mxu0 0.0
    %2759 = vmatprep.subr.mxu0 0.0
    %2760 = vmatpush2.msra.mxu0 0.0
    %2761 = vmatprep.mubr.f32.mxu0 0.0
    %2762 = vmatmul.mubr.f32.gmra.mxu0 %v2695
    %v2763 = vpop.f32.mrf.mxu0
    %v2764 = vadd.f32 0.0, %v2763
    %v2765 = vpop.f32.mrf.mxu0
    %2766 = vdwg.mxu0
    %2767 = vrot.lane.b32.xlu0 %v1828, 80
    %v2768 = vpop.permute.xlu0 %2767
    %v2771 = vsel %vm301, %v2690, 0
    %2773 = vmatprep.subr.mxu0 0.0
    %2774 = vmatpush1.msra.mxu0 0.0
    %2775 = vmatprep.subr.mxu0 0.0
    %2776 = vmatpush1.msra.mxu0 0.0
    %2777 = vmatprep.subr.mxu0 0.0
    %2778 = vmatpush1.msra.mxu0 0.0
    %2779 = vmatprep.subr.mxu0 0.0
    %2780 = vmatpush1.msra.mxu0 0.0
    %2781 = vmatprep.subr.mxu0 0.0
    %2782 = vmatpush1.msra.mxu0 0.0
    %2783 = vmatprep.subr.mxu0 0.0
    %2784 = vmatpush1.msra.mxu0 0.0
    %2785 = vmatprep.subr.mxu0 0.0
    %2786 = vmatpush1.msra.mxu0 0.0
    %2787 = vmatprep.subr.mxu0 0.0
    %2788 = vmatpush1.msra.mxu0 0.0
    %2789 = vmatprep.subr.mxu0 0.0
    %2790 = vmatpush1.msra.mxu0 0.0
    %2791 = vmatprep.subr.mxu0 0.0
    %2792 = vmatpush1.msra.mxu0 0.0
    %2793 = vmatprep.subr.mxu0 0.0
    %2794 = vmatpush1.msra.mxu0 0.0
    %2795 = vmatprep.subr.mxu0 0.0
    %2796 = vmatpush1.msra.mxu0 0.0
    %2797 = vmatprep.subr.mxu0 0.0
    %2798 = vmatpush1.msra.mxu0 0.0
    %2799 = vmatprep.subr.mxu0 0.0
    %2800 = vmatpush1.msra.mxu0 0.0
    %2801 = vmatprep.subr.mxu0 0.0
    %2802 = vmatpush1.msra.mxu0 0.0
    %2803 = vmatprep.subr.mxu0 0.0
    %2804 = vmatpush1.msra.mxu0 %v2768
    %2805 = vmatprep.subr.mxu0 0.0
    %2806 = vmatpush2.msra.mxu0 0.0
    %2807 = vmatprep.subr.mxu0 0.0
    %2808 = vmatpush2.msra.mxu0 0.0
    %2809 = vmatprep.subr.mxu0 0.0
    %2810 = vmatpush2.msra.mxu0 0.0
    %2811 = vmatprep.subr.mxu0 0.0
    %2812 = vmatpush2.msra.mxu0 0.0
    %2813 = vmatprep.subr.mxu0 0.0
    %2814 = vmatpush2.msra.mxu0 0.0
    %2815 = vmatprep.subr.mxu0 0.0
    %2816 = vmatpush2.msra.mxu0 0.0
    %2817 = vmatprep.subr.mxu0 0.0
    %2818 = vmatpush2.msra.mxu0 0.0
    %2819 = vmatprep.subr.mxu0 0.0
    %2820 = vmatpush2.msra.mxu0 0.0
    %2821 = vmatprep.subr.mxu0 0.0
    %2822 = vmatpush2.msra.mxu0 0.0
    %2823 = vmatprep.subr.mxu0 0.0
    %2824 = vmatpush2.msra.mxu0 0.0
    %2825 = vmatprep.subr.mxu0 0.0
    %2826 = vmatpush2.msra.mxu0 0.0
    %2827 = vmatprep.subr.mxu0 0.0
    %2828 = vmatpush2.msra.mxu0 0.0
    %2829 = vmatprep.subr.mxu0 0.0
    %2830 = vmatpush2.msra.mxu0 0.0
    %2831 = vmatprep.subr.mxu0 0.0
    %2832 = vmatpush2.msra.mxu0 0.0
    %2833 = vmatprep.subr.mxu0 0.0
    %2834 = vmatpush2.msra.mxu0 0.0
    %2835 = vmatprep.subr.mxu0 0.0
    %2836 = vmatpush2.msra.mxu0 0.0
    %2837 = vmatprep.mubr.f32.mxu0 0.0
    %2838 = vmatmul.mubr.f32.gmra.mxu0 %v2771
    %v2839 = vpop.f32.mrf.mxu0
    %v2840 = vadd.f32 0.0, %v2839
    %v2841 = vpop.f32.mrf.mxu0
    %2842 = vdwg.mxu0
    %2845 = vrot.lane.b32.xlu0 %v2764, 80
    %v2846 = vpop.permute.xlu0 %2845
    %2847 = vrot.lane.b32.xlu0 %v2840, 80
    %v2848 = vpop.permute.xlu0 %2847
    %v2851 = vadd.f32 %v207, %v2846
    %v2852 = vadd.f32 %v212, %v2848
    %2853 = vrot.lane.b32.xlu0 %v1831, 40
    %v2854 = vpop.permute.xlu0 %2853
    %2855 = vrot.lane.b32.xlu0 %v1823, 104
    %v2856 = vpop.permute.xlu0 %2855
    %v2857 = vsel %vm301, %v2854, 0
    %v2859 = vsel %vm301, %v2856, 0
    %2861 = vmatprep.subr.mxu0 0.0
    %2862 = vmatpush1.xpose.msra.mxu0 0.0
    %2863 = vmatprep.subr.mxu0 0.0
    %2864 = vmatpush1.xpose.msra.mxu0 0.0
    %2865 = vmatprep.subr.mxu0 0.0
    %2866 = vmatpush1.xpose.msra.mxu0 0.0
    %2867 = vmatprep.subr.mxu0 0.0
    %2868 = vmatpush1.xpose.msra.mxu0 0.0
    %2869 = vmatprep.subr.mxu0 0.0
    %2870 = vmatpush1.xpose.msra.mxu0 0.0
    %2871 = vmatprep.subr.mxu0 0.0
    %2872 = vmatpush1.xpose.msra.mxu0 0.0
    %2873 = vmatprep.subr.mxu0 0.0
    %2874 = vmatpush1.xpose.msra.mxu0 0.0
    %2875 = vmatprep.subr.mxu0 0.0
    %2876 = vmatpush1.xpose.msra.mxu0 0.0
    %2877 = vmatprep.subr.mxu0 0.0
    %2878 = vmatpush1.xpose.msra.mxu0 0.0
    %2879 = vmatprep.subr.mxu0 0.0
    %2880 = vmatpush1.xpose.msra.mxu0 0.0
    %2881 = vmatprep.subr.mxu0 0.0
    %2882 = vmatpush1.xpose.msra.mxu0 0.0
    %2883 = vmatprep.subr.mxu0 0.0
    %2884 = vmatpush1.xpose.msra.mxu0 0.0
    %2885 = vmatprep.subr.mxu0 0.0
    %2886 = vmatpush1.xpose.msra.mxu0 0.0
    %2887 = vmatprep.subr.mxu0 0.0
    %2888 = vmatpush1.xpose.msra.mxu0 0.0
    %2889 = vmatprep.subr.mxu0 0.0
    %2890 = vmatpush1.xpose.msra.mxu0 0.0
    %2891 = vmatprep.subr.mxu0 0.0
    %2892 = vmatpush1.xpose.msra.mxu0 %v2859
    %2893 = vmatprep.subr.mxu0 0.0
    %2894 = vmatpush2.xpose.msra.mxu0 0.0
    %2895 = vmatprep.subr.mxu0 0.0
    %2896 = vmatpush2.xpose.msra.mxu0 0.0
    %2897 = vmatprep.subr.mxu0 0.0
    %2898 = vmatpush2.xpose.msra.mxu0 0.0
    %2899 = vmatprep.subr.mxu0 0.0
    %2900 = vmatpush2.xpose.msra.mxu0 0.0
    %2901 = vmatprep.subr.mxu0 0.0
    %2902 = vmatpush2.xpose.msra.mxu0 0.0
    %2903 = vmatprep.subr.mxu0 0.0
    %2904 = vmatpush2.xpose.msra.mxu0 0.0
    %2905 = vmatprep.subr.mxu0 0.0
    %2906 = vmatpush2.xpose.msra.mxu0 0.0
    %2907 = vmatprep.subr.mxu0 0.0
    %2908 = vmatpush2.xpose.msra.mxu0 0.0
    %2909 = vmatprep.subr.mxu0 0.0
    %2910 = vmatpush2.xpose.msra.mxu0 0.0
    %2911 = vmatprep.subr.mxu0 0.0
    %2912 = vmatpush2.xpose.msra.mxu0 0.0
    %2913 = vmatprep.subr.mxu0 0.0
    %2914 = vmatpush2.xpose.msra.mxu0 0.0
    %2915 = vmatprep.subr.mxu0 0.0
    %2916 = vmatpush2.xpose.msra.mxu0 0.0
    %2917 = vmatprep.subr.mxu0 0.0
    %2918 = vmatpush2.xpose.msra.mxu0 0.0
    %2919 = vmatprep.subr.mxu0 0.0
    %2920 = vmatpush2.xpose.msra.mxu0 0.0
    %2921 = vmatprep.subr.mxu0 0.0
    %2922 = vmatpush2.xpose.msra.mxu0 0.0
    %2923 = vmatprep.subr.mxu0 0.0
    %2924 = vmatpush2.xpose.msra.mxu0 0.0
    %2925 = vmatprep.mubr.f32.mxu0 0.0
    %2926 = vmatmul.mubr.f32.gmra.mxu0 %v2857
    %v2927 = vpop.f32.mrf.mxu0
    %v2928 = vadd.f32 0.0, %v2927
    %v2929 = vpop.f32.mrf.mxu0
    %2930 = vdwg.mxu0
    %2931 = vrot.lane.b32.xlu0 %v1832, 40
    %v2932 = vpop.permute.xlu0 %2931
    %2933 = vrot.lane.b32.xlu0 %v1828, 104
    %v2934 = vpop.permute.xlu0 %2933
    %v2935 = vsel %vm301, %v2932, 0
    %v2937 = vsel %vm301, %v2934, 0
    %2939 = vmatprep.subr.mxu0 0.0
    %2940 = vmatpush1.xpose.msra.mxu0 0.0
    %2941 = vmatprep.subr.mxu0 0.0
    %2942 = vmatpush1.xpose.msra.mxu0 0.0
    %2943 = vmatprep.subr.mxu0 0.0
    %2944 = vmatpush1.xpose.msra.mxu0 0.0
    %2945 = vmatprep.subr.mxu0 0.0
    %2946 = vmatpush1.xpose.msra.mxu0 0.0
    %2947 = vmatprep.subr.mxu0 0.0
    %2948 = vmatpush1.xpose.msra.mxu0 0.0
    %2949 = vmatprep.subr.mxu0 0.0
    %2950 = vmatpush1.xpose.msra.mxu0 0.0
    %2951 = vmatprep.subr.mxu0 0.0
    %2952 = vmatpush1.xpose.msra.mxu0 0.0
    %2953 = vmatprep.subr.mxu0 0.0
    %2954 = vmatpush1.xpose.msra.mxu0 0.0
    %2955 = vmatprep.subr.mxu0 0.0
    %2956 = vmatpush1.xpose.msra.mxu0 0.0
    %2957 = vmatprep.subr.mxu0 0.0
    %2958 = vmatpush1.xpose.msra.mxu0 0.0
    %2959 = vmatprep.subr.mxu0 0.0
    %2960 = vmatpush1.xpose.msra.mxu0 0.0
    %2961 = vmatprep.subr.mxu0 0.0
    %2962 = vmatpush1.xpose.msra.mxu0 0.0
    %2963 = vmatprep.subr.mxu0 0.0
    %2964 = vmatpush1.xpose.msra.mxu0 0.0
    %2965 = vmatprep.subr.mxu0 0.0
    %2966 = vmatpush1.xpose.msra.mxu0 0.0
    %2967 = vmatprep.subr.mxu0 0.0
    %2968 = vmatpush1.xpose.msra.mxu0 0.0
    %2969 = vmatprep.subr.mxu0 0.0
    %2970 = vmatpush1.xpose.msra.mxu0 %v2937
    %2971 = vmatprep.subr.mxu0 0.0
    %2972 = vmatpush2.xpose.msra.mxu0 0.0
    %2973 = vmatprep.subr.mxu0 0.0
    %2974 = vmatpush2.xpose.msra.mxu0 0.0
    %2975 = vmatprep.subr.mxu0 0.0
    %2976 = vmatpush2.xpose.msra.mxu0 0.0
    %2977 = vmatprep.subr.mxu0 0.0
    %2978 = vmatpush2.xpose.msra.mxu0 0.0
    %2979 = vmatprep.subr.mxu0 0.0
    %2980 = vmatpush2.xpose.msra.mxu0 0.0
    %2981 = vmatprep.subr.mxu0 0.0
    %2982 = vmatpush2.xpose.msra.mxu0 0.0
    %2983 = vmatprep.subr.mxu0 0.0
    %2984 = vmatpush2.xpose.msra.mxu0 0.0
    %2985 = vmatprep.subr.mxu0 0.0
    %2986 = vmatpush2.xpose.msra.mxu0 0.0
    %2987 = vmatprep.subr.mxu0 0.0
    %2988 = vmatpush2.xpose.msra.mxu0 0.0
    %2989 = vmatprep.subr.mxu0 0.0
    %2990 = vmatpush2.xpose.msra.mxu0 0.0
    %2991 = vmatprep.subr.mxu0 0.0
    %2992 = vmatpush2.xpose.msra.mxu0 0.0
    %2993 = vmatprep.subr.mxu0 0.0
    %2994 = vmatpush2.xpose.msra.mxu0 0.0
    %2995 = vmatprep.subr.mxu0 0.0
    %2996 = vmatpush2.xpose.msra.mxu0 0.0
    %2997 = vmatprep.subr.mxu0 0.0
    %2998 = vmatpush2.xpose.msra.mxu0 0.0
    %2999 = vmatprep.subr.mxu0 0.0
    %3000 = vmatpush2.xpose.msra.mxu0 0.0
    %3001 = vmatprep.subr.mxu0 0.0
    %3002 = vmatpush2.xpose.msra.mxu0 0.0
    %3003 = vmatprep.mubr.f32.mxu0 0.0
    %3004 = vmatmul.mubr.f32.gmra.mxu0 %v2935
    %v3005 = vpop.f32.mrf.mxu0
    %v3006 = vadd.f32 0.0, %v3005
    %v3007 = vpop.f32.mrf.mxu0
    %3008 = vdwg.mxu0
    %v3009 = vsel %vm301, %v2928, -inf
    %3010 = vmax.xlane.f32.xlu0 %v3009
    %v3011 = vpop.xlane.xlu0 %3010
    %v3012 = vsel %vm301, %v3006, -inf
    %3013 = vmax.xlane.f32.xlu0 %v3012
    %v3014 = vpop.xlane.xlu0 %3013
    %v3015 = vsub.f32 %v2928, %v3011
    %v3016 = vsub.f32 %v3006, %v3014
    %v3017 = vmul.f32 %v3015, 1.442695
    %v3018 = vpow.pop %v3017
    %v3019 = vmul.f32 %v3016, 1.442695
    %v3020 = vpow.pop %v3019
    %v3021 = vsel %vm301, %v3018, 0.0
    %3022 = vadd.xlane.f32.xlu0 %v3021
    %v3023 = vpop.xlane.xlu0 %3022
    %v3024 = vsel %vm301, %v3020, 0.0
    %3025 = vadd.xlane.f32.xlu0 %v3024
    %v3026 = vpop.xlane.xlu0 %3025
    %v3027 = vrcp.pop %v3023
    %v3028 = vrcp.pop %v3026
    %v3029 = vmul.f32 %v3018, %v3027
    %v3030 = vmul.f32 %v3020, %v3028
    %3031 = vrot.lane.b32.xlu0 %v1823, 72
    %v3032 = vpop.permute.xlu0 %3031
    %v3035 = vsel %vm301, %v3029, 0
    %3037 = vmatprep.subr.mxu0 0.0
    %3038 = vmatpush1.msra.mxu0 0.0
    %3039 = vmatprep.subr.mxu0 0.0
    %3040 = vmatpush1.msra.mxu0 0.0
    %3041 = vmatprep.subr.mxu0 0.0
    %3042 = vmatpush1.msra.mxu0 0.0
    %3043 = vmatprep.subr.mxu0 0.0
    %3044 = vmatpush1.msra.mxu0 0.0
    %3045 = vmatprep.subr.mxu0 0.0
    %3046 = vmatpush1.msra.mxu0 0.0
    %3047 = vmatprep.subr.mxu0 0.0
    %3048 = vmatpush1.msra.mxu0 0.0
    %3049 = vmatprep.subr.mxu0 0.0
    %3050 = vmatpush1.msra.mxu0 0.0
    %3051 = vmatprep.subr.mxu0 0.0
    %3052 = vmatpush1.msra.mxu0 0.0
    %3053 = vmatprep.subr.mxu0 0.0
    %3054 = vmatpush1.msra.mxu0 0.0
    %3055 = vmatprep.subr.mxu0 0.0
    %3056 = vmatpush1.msra.mxu0 0.0
    %3057 = vmatprep.subr.mxu0 0.0
    %3058 = vmatpush1.msra.mxu0 0.0
    %3059 = vmatprep.subr.mxu0 0.0
    %3060 = vmatpush1.msra.mxu0 0.0
    %3061 = vmatprep.subr.mxu0 0.0
    %3062 = vmatpush1.msra.mxu0 0.0
    %3063 = vmatprep.subr.mxu0 0.0
    %3064 = vmatpush1.msra.mxu0 0.0
    %3065 = vmatprep.subr.mxu0 0.0
    %3066 = vmatpush1.msra.mxu0 0.0
    %3067 = vmatprep.subr.mxu0 0.0
    %3068 = vmatpush1.msra.mxu0 %v3032
    %3069 = vmatprep.subr.mxu0 0.0
    %3070 = vmatpush2.msra.mxu0 0.0
    %3071 = vmatprep.subr.mxu0 0.0
    %3072 = vmatpush2.msra.mxu0 0.0
    %3073 = vmatprep.subr.mxu0 0.0
    %3074 = vmatpush2.msra.mxu0 0.0
    %3075 = vmatprep.subr.mxu0 0.0
    %3076 = vmatpush2.msra.mxu0 0.0
    %3077 = vmatprep.subr.mxu0 0.0
    %3078 = vmatpush2.msra.mxu0 0.0
    %3079 = vmatprep.subr.mxu0 0.0
    %3080 = vmatpush2.msra.mxu0 0.0
    %3081 = vmatprep.subr.mxu0 0.0
    %3082 = vmatpush2.msra.mxu0 0.0
    %3083 = vmatprep.subr.mxu0 0.0
    %3084 = vmatpush2.msra.mxu0 0.0
    %3085 = vmatprep.subr.mxu0 0.0
    %3086 = vmatpush2.msra.mxu0 0.0
    %3087 = vmatprep.subr.mxu0 0.0
    %3088 = vmatpush2.msra.mxu0 0.0
    %3089 = vmatprep.subr.mxu0 0.0
    %3090 = vmatpush2.msra.mxu0 0.0
    %3091 = vmatprep.subr.mxu0 0.0
    %3092 = vmatpush2.msra.mxu0 0.0
    %3093 = vmatprep.subr.mxu0 0.0
    %3094 = vmatpush2.msra.mxu0 0.0
    %3095 = vmatprep.subr.mxu0 0.0
    %3096 = vmatpush2.msra.mxu0 0.0
    %3097 = vmatprep.subr.mxu0 0.0
    %3098 = vmatpush2.msra.mxu0 0.0
    %3099 = vmatprep.subr.mxu0 0.0
    %3100 = vmatpush2.msra.mxu0 0.0
    %3101 = vmatprep.mubr.f32.mxu0 0.0
    %3102 = vmatmul.mubr.f32.gmra.mxu0 %v3035
    %v3103 = vpop.f32.mrf.mxu0
    %v3104 = vadd.f32 0.0, %v3103
    %v3105 = vpop.f32.mrf.mxu0
    %3106 = vdwg.mxu0
    %3107 = vrot.lane.b32.xlu0 %v1828, 72
    %v3108 = vpop.permute.xlu0 %3107
    %v3111 = vsel %vm301, %v3030, 0
    %3113 = vmatprep.subr.mxu0 0.0
    %3114 = vmatpush1.msra.mxu0 0.0
    %3115 = vmatprep.subr.mxu0 0.0
    %3116 = vmatpush1.msra.mxu0 0.0
    %3117 = vmatprep.subr.mxu0 0.0
    %3118 = vmatpush1.msra.mxu0 0.0
    %3119 = vmatprep.subr.mxu0 0.0
    %3120 = vmatpush1.msra.mxu0 0.0
    %3121 = vmatprep.subr.mxu0 0.0
    %3122 = vmatpush1.msra.mxu0 0.0
    %3123 = vmatprep.subr.mxu0 0.0
    %3124 = vmatpush1.msra.mxu0 0.0
    %3125 = vmatprep.subr.mxu0 0.0
    %3126 = vmatpush1.msra.mxu0 0.0
    %3127 = vmatprep.subr.mxu0 0.0
    %3128 = vmatpush1.msra.mxu0 0.0
    %3129 = vmatprep.subr.mxu0 0.0
    %3130 = vmatpush1.msra.mxu0 0.0
    %3131 = vmatprep.subr.mxu0 0.0
    %3132 = vmatpush1.msra.mxu0 0.0
    %3133 = vmatprep.subr.mxu0 0.0
    %3134 = vmatpush1.msra.mxu0 0.0
    %3135 = vmatprep.subr.mxu0 0.0
    %3136 = vmatpush1.msra.mxu0 0.0
    %3137 = vmatprep.subr.mxu0 0.0
    %3138 = vmatpush1.msra.mxu0 0.0
    %3139 = vmatprep.subr.mxu0 0.0
    %3140 = vmatpush1.msra.mxu0 0.0
    %3141 = vmatprep.subr.mxu0 0.0
    %3142 = vmatpush1.msra.mxu0 0.0
    %3143 = vmatprep.subr.mxu0 0.0
    %3144 = vmatpush1.msra.mxu0 %v3108
    %3145 = vmatprep.subr.mxu0 0.0
    %3146 = vmatpush2.msra.mxu0 0.0
    %3147 = vmatprep.subr.mxu0 0.0
    %3148 = vmatpush2.msra.mxu0 0.0
    %3149 = vmatprep.subr.mxu0 0.0
    %3150 = vmatpush2.msra.mxu0 0.0
    %3151 = vmatprep.subr.mxu0 0.0
    %3152 = vmatpush2.msra.mxu0 0.0
    %3153 = vmatprep.subr.mxu0 0.0
    %3154 = vmatpush2.msra.mxu0 0.0
    %3155 = vmatprep.subr.mxu0 0.0
    %3156 = vmatpush2.msra.mxu0 0.0
    %3157 = vmatprep.subr.mxu0 0.0
    %3158 = vmatpush2.msra.mxu0 0.0
    %3159 = vmatprep.subr.mxu0 0.0
    %3160 = vmatpush2.msra.mxu0 0.0
    %3161 = vmatprep.subr.mxu0 0.0
    %3162 = vmatpush2.msra.mxu0 0.0
    %3163 = vmatprep.subr.mxu0 0.0
    %3164 = vmatpush2.msra.mxu0 0.0
    %3165 = vmatprep.subr.mxu0 0.0
    %3166 = vmatpush2.msra.mxu0 0.0
    %3167 = vmatprep.subr.mxu0 0.0
    %3168 = vmatpush2.msra.mxu0 0.0
    %3169 = vmatprep.subr.mxu0 0.0
    %3170 = vmatpush2.msra.mxu0 0.0
    %3171 = vmatprep.subr.mxu0 0.0
    %3172 = vmatpush2.msra.mxu0 0.0
    %3173 = vmatprep.subr.mxu0 0.0
    %3174 = vmatpush2.msra.mxu0 0.0
    %3175 = vmatprep.subr.mxu0 0.0
    %3176 = vmatpush2.msra.mxu0 0.0
    %3177 = vmatprep.mubr.f32.mxu0 0.0
    %3178 = vmatmul.mubr.f32.gmra.mxu0 %v3111
    %v3179 = vpop.f32.mrf.mxu0
    %v3180 = vadd.f32 0.0, %v3179
    %v3181 = vpop.f32.mrf.mxu0
    %3182 = vdwg.mxu0
    %3185 = vrot.lane.b32.xlu0 %v3104, 88
    %v3186 = vpop.permute.xlu0 %3185
    %3187 = vrot.lane.b32.xlu0 %v3180, 88
    %v3188 = vpop.permute.xlu0 %3187
    %v3191 = vadd.f32 %v207, %v3186
    %v3192 = vadd.f32 %v212, %v3188
    %3195 = vrot.lane.b32.xlu0 %v2171, 64
    %v3196 = vpop.permute.xlu0 %3195
    %3197 = vrot.lane.b32.xlu0 %v2172, 64
    %v3198 = vpop.permute.xlu0 %3197
    %3203 = vrot.lane.b32.xlu0 %v2511, 64
    %v3204 = vpop.permute.xlu0 %3203
    %3205 = vrot.lane.b32.xlu0 %v2512, 64
    %v3206 = vpop.permute.xlu0 %3205
    %3211 = vrot.lane.b32.xlu0 %v2851, 64
    %v3212 = vpop.permute.xlu0 %3211
    %3213 = vrot.lane.b32.xlu0 %v2852, 64
    %v3214 = vpop.permute.xlu0 %3213
    %3219 = vrot.lane.b32.xlu0 %v3191, 64
    %v3220 = vpop.permute.xlu0 %3219
    %3221 = vrot.lane.b32.xlu0 %v3192, 64
    %v3222 = vpop.permute.xlu0 %3221
    %v3225 = vsel %vm301, %v3196, %v3204
    %v3226 = vsel %vm301, %v3198, %v3206
    %v3227 = vsel %vm1637, %v3225, %v3212
    %v3228 = vsel %vm1637, %v3226, %v3214
    %v3229 = vsel %vm1640, %v3227, %v3220
    %v3230 = vsel %vm1640, %v3228, %v3222
    %v3231 = vld [vmem:[#allocation11] sm:$0xff]
    %v3232 = vld [vmem:[#allocation11 + $0x8] sm:$0xff]
    %v3233 = vld [vmem:[#allocation11 + $0x10] sm:$0xff]
    %v3234 = vld [vmem:[#allocation11 + $0x18] sm:$0xff]
    %v3235 = vld [vmem:[%s11] sm:$0x1]
    %v3237 = vlaneseq
    %v3238 = vshrl.u32 %v3237, 7
    %v3239 = vsub.s32 0, %v3238
    %v3240 = vrot.slane %v3235, %v3239
    %v3243 = vsel %vm226, %v3229, 0
    %v3246 = vsel %vm226, %v3230, 0
    %3248 = vmatprep.subr.mxu0 0.0
    %3249 = vmatpush1.msra.mxu0 0.0
    %3250 = vmatprep.subr.mxu0 0.0
    %3251 = vmatpush1.msra.mxu0 0.0
    %3252 = vmatprep.subr.mxu0 0.0
    %3253 = vmatpush1.msra.mxu0 0.0
    %3254 = vmatprep.subr.mxu0 0.0
    %3255 = vmatpush1.msra.mxu0 0.0
    %3256 = vmatprep.subr.mxu0 0.0
    %3257 = vmatpush1.msra.mxu0 0.0
    %3258 = vmatprep.subr.mxu0 0.0
    %3259 = vmatpush1.msra.mxu0 0.0
    %3260 = vmatprep.subr.mxu0 0.0
    %3261 = vmatpush1.msra.mxu0 0.0
    %3262 = vmatprep.subr.mxu0 0.0
    %3263 = vmatpush1.msra.mxu0 0.0
    %3264 = vmatprep.subr.mxu0 0.0
    %3265 = vmatpush1.msra.mxu0 0.0
    %3266 = vmatprep.subr.mxu0 0.0
    %3267 = vmatpush1.msra.mxu0 0.0
    %3268 = vmatprep.subr.mxu0 0.0
    %3269 = vmatpush1.msra.mxu0 0.0
    %3270 = vmatprep.subr.mxu0 0.0
    %3271 = vmatpush1.msra.mxu0 0.0
    %3272 = vmatprep.subr.mxu0 0.0
    %3273 = vmatpush1.msra.mxu0 %v3234
    %3274 = vmatprep.subr.mxu0 0.0
    %3275 = vmatpush1.msra.mxu0 %v3233
    %3276 = vmatprep.subr.mxu0 0.0
    %3277 = vmatpush1.msra.mxu0 %v3232
    %3278 = vmatprep.subr.mxu0 0.0
    %3279 = vmatpush1.msra.mxu0 %v3231
    %3280 = vmatprep.subr.mxu0 0.0
    %3281 = vmatpush2.msra.mxu0 0.0
    %3282 = vmatprep.subr.mxu0 0.0
    %3283 = vmatpush2.msra.mxu0 0.0
    %3284 = vmatprep.subr.mxu0 0.0
    %3285 = vmatpush2.msra.mxu0 0.0
    %3286 = vmatprep.subr.mxu0 0.0
    %3287 = vmatpush2.msra.mxu0 0.0
    %3288 = vmatprep.subr.mxu0 0.0
    %3289 = vmatpush2.msra.mxu0 0.0
    %3290 = vmatprep.subr.mxu0 0.0
    %3291 = vmatpush2.msra.mxu0 0.0
    %3292 = vmatprep.subr.mxu0 0.0
    %3293 = vmatpush2.msra.mxu0 0.0
    %3294 = vmatprep.subr.mxu0 0.0
    %3295 = vmatpush2.msra.mxu0 0.0
    %3296 = vmatprep.subr.mxu0 0.0
    %3297 = vmatpush2.msra.mxu0 0.0
    %3298 = vmatprep.subr.mxu0 0.0
    %3299 = vmatpush2.msra.mxu0 0.0
    %3300 = vmatprep.subr.mxu0 0.0
    %3301 = vmatpush2.msra.mxu0 0.0
    %3302 = vmatprep.subr.mxu0 0.0
    %3303 = vmatpush2.msra.mxu0 0.0
    %3304 = vmatprep.subr.mxu0 0.0
    %3305 = vmatpush2.msra.mxu0 0.0
    %3306 = vmatprep.subr.mxu0 0.0
    %3307 = vmatpush2.msra.mxu0 0.0
    %3308 = vmatprep.subr.mxu0 0.0
    %3309 = vmatpush2.msra.mxu0 0.0
    %3310 = vmatprep.subr.mxu0 0.0
    %3311 = vmatpush2.msra.mxu0 0.0
    %3312 = vmatprep.mubr.f32.mxu0 0.0
    %3313 = vmatmul.mubr.f32.gmra.mxu0 %v3243
    %v3314 = vpop.f32.mrf.mxu0
    %v3315 = vadd.f32 %v3240, %v3314
    %v3316 = vpop.f32.mrf.mxu0
    %3317 = vmatprep.mubr.f32.mxu0 0.0
    %3318 = vmatmul.mubr.f32.gmra.mxu0 %v3246
    %v3319 = vpop.f32.mrf.mxu0
    %v3320 = vadd.f32 %v3240, %v3319
    %v3321 = vpop.f32.mrf.mxu0
    %3322 = vdwg.mxu0
    %v3323 = vmax.f32 %v3315, 0.0
    %v3324 = vmax.f32 %v3320, 0.0
    %v3325 = vadd.f32 %v3229, %v3323
    %v3326 = vadd.f32 %v3230, %v3324
    %3327 = vst.msk [vmem:[#allocation13] sm:$0xff] %vm226, %v3325
    %3328 = vst.msk [vmem:[#allocation13 + $0x8] sm:$0xff] %vm226, %v3326
    // Predicated region
    $region74: #{tpu_custom_call.1} parent=1 // pred_check
      _
    $region75: #{tpu_custom_call.1} parent=1 // pred_check_branch
      %3330 = sbr.rel (0) target = $region77
    $region76: #{tpu_custom_call.1} parent=1 // pred_region
      %s3332 = ssub.s32 256, 256
      %3333 = vsyncadd [#allocation4], %s3332
      %s3334 = sshll.u32 [#allocation13], 4
      %s3335 = int_to_ptr.vmem [resolvable:$true] %s3334
      %3340 = dma.vmem_to_hbm [thread:$0]  %s3335, 256, %s12, [#allocation4], 128, 128, 8
    $region77: #{tpu_custom_call.1} parent=1 // pred_fallthru
      _
    // Predicated region
    $region78: #{tpu_custom_call.1} parent=1 // pred_check
      _
    $region79: #{tpu_custom_call.1} parent=1 // pred_check_branch
      %3342 = sbr.rel (0) target = $region81
    $region80: #{tpu_custom_call.1} parent=1 // pred_region
      %3343 = dma.done [#allocation4], 256
    $region81: #{tpu_custom_call.1} parent=1 // pred_fallthru
      _
    %3344 = vsyncpa [#allocation3], 1
    %3345 = vsyncpa [#allocation6], 1
    %3346 = vsyncpa [#allocation9], 1
    %3347 = vsyncpa [#allocation12], 1
    %3348 = vsyncpa [#allocation4], 1

</llo_original>
